<compile_context>
chip_gen: v7x
topology: tpu7x:2x2x1
jax: 0.10.0
libtpu: 0.0.40
codegen_flags: <defaults>
</compile_context>

<pallas_src>
import jax
import jax.numpy as jnp
from jax.experimental import pallas as pl
from jax.experimental.pallas import tpu as pltpu

LEAKY_SLOPE = 0.2
BN_EPS = 0.8  # nn.BatchNorm1d(out_feat, 0.8): positional arg is eps (matches reference)

# ----- small problem sizes (consistent with the module's forward) -----
BATCH = 8
LATENT_DIM = 32
CHANNELS = 1
IMG_SIZE = 8
IMG_FLAT = CHANNELS * IMG_SIZE * IMG_SIZE        # 64
HIDDEN = (128, 256, 512, 1024)

# Packed small-parameter layout: [b0, g1, be1, g2, be2, g3, be3, b4]
_PACK_NAMES = ("b0", "g1", "be1", "g2", "be2", "g3", "be3", "b4")
_PACK_SIZES = (HIDDEN[0],
               HIDDEN[1], HIDDEN[1],
               HIDDEN[2], HIDDEN[2],
               HIDDEN[3], HIDDEN[3],
               IMG_FLAT)
_PACK_OFF = {}
_off = 0
for _n, _s in zip(_PACK_NAMES, _PACK_SIZES):
    _PACK_OFF[_n] = (_off, _s)
    _off += _s
PACK_TOTAL = _off  # 3776 (all offsets are multiples of 128 -> lane-aligned slices)


def _leaky_relu(x):
    # max(x, 0.2*x) == LeakyReLU(0.2) for slope in (0, 1); 2 VALU ops/elem.
    return jnp.maximum(x, LEAKY_SLOPE * x)


# ---------------- fused Pallas kernel ----------------
def generator_fused_kernel(z_ref, w0_ref, w1_ref, w2_ref, w3_ref, w4_ref,
                           p_ref, o_ref):
    def pp(name):
        off, size = _PACK_OFF[name]
        return p_ref[:, off:off + size]          # (1, size) f32, static lane slice

    def matmul(x_f32, w_ref):
        # bf16 operands on the MXU, f32 accumulation.
        return jnp.dot(x_f32.astype(jnp.bfloat16), w_ref[...],
                       preferred_element_type=jnp.float32)

    def bn_lrelu(y, gamma, beta):
        # Training-mode batch stats (biased variance), one pass, eps = 0.8.
        inv_b = 1.0 / y.shape[0]
        mean = jnp.sum(y, axis=0, keepdims=True) * inv_b
        mean_sq = jnp.sum(y * y, axis=0, keepdims=True) * inv_b
        var = jnp.maximum(mean_sq - mean * mean, 0.0)
        # Fused affine: per-feature scale/shift on tiny (1, dout) rows,
        # then a single mul+add on the (B, dout) tensor.
        scale = gamma * jax.lax.rsqrt(var + BN_EPS)
        shift = beta - mean * scale
        return _leaky_relu(y * scale + shift)

    # block(latent_dim, 128, normalize=False): Linear(+bias) -> LeakyReLU
    h = _leaky_relu(matmul(z_ref[...], w0_ref) + pp("b0"))
    # block(128,256), block(256,512), block(512,1024): Linear(no bias needed:
    # it is cancelled by BN mean subtraction) -> BN -> LeakyReLU
    h = bn_lrelu(matmul(h, w1_ref), pp("g1"), pp("be1"))
    h = bn_lrelu(matmul(h, w2_ref), pp("g2"), pp("be2"))
    h = bn_lrelu(matmul(h, w3_ref), pp("g3"), pp("be3"))
    # Linear(1024, IMG_FLAT) + Tanh; (B, 64) masked store is negligible here.
    o_ref[...] = jnp.tanh(matmul(h, w4_ref) + pp("b4")).astype(o_ref.dtype)


# ---------------- pallas_call wrapper ----------------
def _vmem_spec():
    return pl.BlockSpec(memory_space=pltpu.MemorySpace.VMEM)


def generator_forward(z, params):
    batch = z.shape[0]
    flat_inputs = [z, *params["weights"], params["packed"]]

    img_flat = pl.pallas_call(
        generator_fused_kernel,
        out_shape=jax.ShapeDtypeStruct((batch, IMG_FLAT), jnp.float32),
        in_specs=[_vmem_spec()] * len(flat_inputs),
        out_specs=_vmem_spec(),
    )(*flat_inputs)

    # img.view(B, *img_shape)
    return img_flat.reshape(batch, CHANNELS, IMG_SIZE, IMG_SIZE)


# ---------------- parameter setup (deterministic, in-script) ----------------
def init_linear(key, in_f, out_f):
    """PyTorch nn.Linear default init: U(-1/sqrt(in), 1/sqrt(in)); weight is (out, in)."""
    k_w, k_b = jax.random.split(key)
    bound = 1.0 / jnp.sqrt(jnp.float32(in_f))
    w = jax.random.uniform(k_w, (out_f, in_f), jnp.float32, -bound, bound)
    b = jax.random.uniform(k_b, (out_f,), jnp.float32, -bound, bound)
    return w, b


def init_generator_params(key):
    dims = [LATENT_DIM, *HIDDEN, IMG_FLAT]
    keys = jax.random.split(key, len(dims) - 1)
    weights = []
    pack = {}
    for i, (din, dout) in enumerate(zip(dims[:-1], dims[1:])):
        w, b = init_linear(keys[i], din, dout)
        # (in, out) for x @ W; bf16 weights -> half the HBM->VMEM bytes (f32 accum on MXU).
        weights.append(w.T.astype(jnp.bfloat16))
        if i == 0:
            pack["b0"] = b
        elif i == len(dims) - 2:
            pack["b4"] = b
        else:
            # Biases of BN-followed layers are mathematically inert under training-mode
            # BN (cancelled by mean subtraction) -> never materialized.
            pack[f"g{i}"] = jnp.ones((dout,), jnp.float32)    # BatchNorm1d default weight
            pack[f"be{i}"] = jnp.zeros((dout,), jnp.float32)  # BatchNorm1d default bias
    packed = jnp.concatenate([pack[n] for n in _PACK_NAMES]).reshape(1, PACK_TOTAL)
    # TODO(synk): only training-mode BN forward is reproduced; running_mean/var updates
    # (used in eval mode) are not modeled.
    return {"weights": weights, "packed": packed.astype(jnp.float32)}


if __name__ == "__main__":
    key = jax.random.PRNGKey(0)
    k_params, k_z = jax.random.split(key)
    params = init_generator_params(k_params)
    z = jax.random.normal(k_z, (BATCH, LATENT_DIM), jnp.float32)

    img = generator_forward(z, params)
    img = jax.block_until_ready(img)

    assert img.shape == (BATCH, CHANNELS, IMG_SIZE, IMG_SIZE), img.shape
    assert img.dtype == jnp.float32
    assert bool(jnp.all(jnp.isfinite(img)))
    assert bool(jnp.all(jnp.abs(img) <= 1.0 + 1e-6))  # tanh output range
    print("KERNEL_OK")
</pallas_src>

<mosaic_0001>
module attributes {stable_mosaic.version = 11 : i64} {
  func.func @generator_fused_kernel(%arg0: memref<8x32xf32, #tpu.memory_space<vmem>>, %arg1: memref<32x128xbf16, #tpu.memory_space<vmem>>, %arg2: memref<128x256xbf16, #tpu.memory_space<vmem>>, %arg3: memref<256x512xbf16, #tpu.memory_space<vmem>>, %arg4: memref<512x1024xbf16, #tpu.memory_space<vmem>>, %arg5: memref<1024x64xbf16, #tpu.memory_space<vmem>>, %arg6: memref<1x3776xf32, #tpu.memory_space<vmem>>, %arg7: memref<8x64xf32, #tpu.memory_space<vmem>>) attributes {dimension_semantics = [], scalar_prefetch = 0 : i64, scratch_operands = 0 : i64, tpu.core_type = #tpu.core_type<tc>} {
    %c0 = arith.constant 0 : index
    %c0_0 = arith.constant 0 : index
    %0 = vector.load %arg0[%c0, %c0_0] : memref<8x32xf32, #tpu.memory_space<vmem>>, vector<8x32xf32>
    %1 = arith.truncf %0 : vector<8x32xf32> to vector<8x32xbf16>
    %c0_1 = arith.constant 0 : index
    %c0_2 = arith.constant 0 : index
    %2 = vector.load %arg1[%c0_1, %c0_2] : memref<32x128xbf16, #tpu.memory_space<vmem>>, vector<32x128xbf16>
    %cst = arith.constant dense<0.000000e+00> : vector<8x128xf32>
    %3 = tpu.matmul %1, %2, %cst {dimension_numbers = #tpu.dot_dimension_numbers<[1], [0], [0], [1], [0, 0, 1, 1], [], []>} : vector<8x32xbf16>, vector<32x128xbf16>, vector<8x128xf32> -> vector<8x128xf32>
    %c0_3 = arith.constant 0 : index
    %c0_4 = arith.constant 0 : index
    %4 = vector.load %arg6[%c0_3, %c0_4] : memref<1x3776xf32, #tpu.memory_space<vmem>>, vector<1x128xf32>
    %5 = vector.broadcast %4 : vector<1x128xf32> to vector<8x128xf32>
    %6 = arith.addf %3, %5 : vector<8x128xf32>
    %cst_5 = arith.constant 2.000000e-01 : f32
    %7 = vector.broadcast %cst_5 : f32 to vector<8x128xf32>
    %8 = arith.mulf %7, %6 : vector<8x128xf32>
    %9 = arith.maximumf %6, %8 : vector<8x128xf32>
    %10 = arith.truncf %9 : vector<8x128xf32> to vector<8x128xbf16>
    %c0_6 = arith.constant 0 : index
    %c0_7 = arith.constant 0 : index
    %11 = vector.load %arg2[%c0_6, %c0_7] : memref<128x256xbf16, #tpu.memory_space<vmem>>, vector<128x256xbf16>
    %cst_8 = arith.constant dense<0.000000e+00> : vector<8x256xf32>
    %12 = tpu.matmul %10, %11, %cst_8 {dimension_numbers = #tpu.dot_dimension_numbers<[1], [0], [0], [1], [0, 0, 1, 1], [], []>} : vector<8x128xbf16>, vector<128x256xbf16>, vector<8x256xf32> -> vector<8x256xf32>
    %c0_9 = arith.constant 0 : index
    %c128 = arith.constant 128 : index
    %13 = vector.load %arg6[%c0_9, %c128] : memref<1x3776xf32, #tpu.memory_space<vmem>>, vector<1x256xf32>
    %c0_10 = arith.constant 0 : index
    %c384 = arith.constant 384 : index
    %14 = vector.load %arg6[%c0_10, %c384] : memref<1x3776xf32, #tpu.memory_space<vmem>>, vector<1x256xf32>
    %cst_11 = arith.constant dense<0.000000e+00> : vector<256xf32>
    %15 = vector.multi_reduction <add>, %12, %cst_11 [0] : vector<8x256xf32> to vector<256xf32>
    %16 = vector.shape_cast %15 : vector<256xf32> to vector<1x256xf32>
    %cst_12 = arith.constant 1.250000e-01 : f32
    %17 = vector.broadcast %cst_12 : f32 to vector<1x256xf32>
    %18 = arith.mulf %16, %17 : vector<1x256xf32>
    %19 = arith.mulf %12, %12 : vector<8x256xf32>
    %cst_13 = arith.constant dense<0.000000e+00> : vector<256xf32>
    %20 = vector.multi_reduction <add>, %19, %cst_13 [0] : vector<8x256xf32> to vector<256xf32>
    %21 = vector.shape_cast %20 : vector<256xf32> to vector<1x256xf32>
    %cst_14 = arith.constant 1.250000e-01 : f32
    %22 = vector.broadcast %cst_14 : f32 to vector<1x256xf32>
    %23 = arith.mulf %21, %22 : vector<1x256xf32>
    %24 = arith.mulf %18, %18 : vector<1x256xf32>
    %25 = arith.subf %23, %24 : vector<1x256xf32>
    %cst_15 = arith.constant 0.000000e+00 : f32
    %26 = vector.broadcast %cst_15 : f32 to vector<1x256xf32>
    %27 = arith.maximumf %25, %26 : vector<1x256xf32>
    %cst_16 = arith.constant 8.000000e-01 : f32
    %28 = vector.broadcast %cst_16 : f32 to vector<1x256xf32>
    %29 = arith.addf %27, %28 : vector<1x256xf32>
    %30 = math.rsqrt %29 : vector<1x256xf32>
    %31 = arith.mulf %13, %30 : vector<1x256xf32>
    %32 = arith.mulf %18, %31 : vector<1x256xf32>
    %33 = arith.subf %14, %32 : vector<1x256xf32>
    %34 = vector.broadcast %31 : vector<1x256xf32> to vector<8x256xf32>
    %35 = arith.mulf %12, %34 : vector<8x256xf32>
    %36 = vector.broadcast %33 : vector<1x256xf32> to vector<8x256xf32>
    %37 = arith.addf %35, %36 : vector<8x256xf32>
    %cst_17 = arith.constant 2.000000e-01 : f32
    %38 = vector.broadcast %cst_17 : f32 to vector<8x256xf32>
    %39 = arith.mulf %38, %37 : vector<8x256xf32>
    %40 = arith.maximumf %37, %39 : vector<8x256xf32>
    %41 = arith.truncf %40 : vector<8x256xf32> to vector<8x256xbf16>
    %c0_18 = arith.constant 0 : index
    %c0_19 = arith.constant 0 : index
    %42 = vector.load %arg3[%c0_18, %c0_19] : memref<256x512xbf16, #tpu.memory_space<vmem>>, vector<256x512xbf16>
    %cst_20 = arith.constant dense<0.000000e+00> : vector<8x512xf32>
    %43 = tpu.matmul %41, %42, %cst_20 {dimension_numbers = #tpu.dot_dimension_numbers<[1], [0], [0], [1], [0, 0, 1, 1], [], []>} : vector<8x256xbf16>, vector<256x512xbf16>, vector<8x512xf32> -> vector<8x512xf32>
    %c0_21 = arith.constant 0 : index
    %c640 = arith.constant 640 : index
    %44 = vector.load %arg6[%c0_21, %c640] : memref<1x3776xf32, #tpu.memory_space<vmem>>, vector<1x512xf32>
    %c0_22 = arith.constant 0 : index
    %c1152 = arith.constant 1152 : index
    %45 = vector.load %arg6[%c0_22, %c1152] : memref<1x3776xf32, #tpu.memory_space<vmem>>, vector<1x512xf32>
    %cst_23 = arith.constant dense<0.000000e+00> : vector<512xf32>
    %46 = vector.multi_reduction <add>, %43, %cst_23 [0] : vector<8x512xf32> to vector<512xf32>
    %47 = vector.shape_cast %46 : vector<512xf32> to vector<1x512xf32>
    %cst_24 = arith.constant 1.250000e-01 : f32
    %48 = vector.broadcast %cst_24 : f32 to vector<1x512xf32>
    %49 = arith.mulf %47, %48 : vector<1x512xf32>
    %50 = arith.mulf %43, %43 : vector<8x512xf32>
    %cst_25 = arith.constant dense<0.000000e+00> : vector<512xf32>
    %51 = vector.multi_reduction <add>, %50, %cst_25 [0] : vector<8x512xf32> to vector<512xf32>
    %52 = vector.shape_cast %51 : vector<512xf32> to vector<1x512xf32>
    %cst_26 = arith.constant 1.250000e-01 : f32
    %53 = vector.broadcast %cst_26 : f32 to vector<1x512xf32>
    %54 = arith.mulf %52, %53 : vector<1x512xf32>
    %55 = arith.mulf %49, %49 : vector<1x512xf32>
    %56 = arith.subf %54, %55 : vector<1x512xf32>
    %cst_27 = arith.constant 0.000000e+00 : f32
    %57 = vector.broadcast %cst_27 : f32 to vector<1x512xf32>
    %58 = arith.maximumf %56, %57 : vector<1x512xf32>
    %cst_28 = arith.constant 8.000000e-01 : f32
    %59 = vector.broadcast %cst_28 : f32 to vector<1x512xf32>
    %60 = arith.addf %58, %59 : vector<1x512xf32>
    %61 = math.rsqrt %60 : vector<1x512xf32>
    %62 = arith.mulf %44, %61 : vector<1x512xf32>
    %63 = arith.mulf %49, %62 : vector<1x512xf32>
    %64 = arith.subf %45, %63 : vector<1x512xf32>
    %65 = vector.broadcast %62 : vector<1x512xf32> to vector<8x512xf32>
    %66 = arith.mulf %43, %65 : vector<8x512xf32>
    %67 = vector.broadcast %64 : vector<1x512xf32> to vector<8x512xf32>
    %68 = arith.addf %66, %67 : vector<8x512xf32>
    %cst_29 = arith.constant 2.000000e-01 : f32
    %69 = vector.broadcast %cst_29 : f32 to vector<8x512xf32>
    %70 = arith.mulf %69, %68 : vector<8x512xf32>
    %71 = arith.maximumf %68, %70 : vector<8x512xf32>
    %72 = arith.truncf %71 : vector<8x512xf32> to vector<8x512xbf16>
    %c0_30 = arith.constant 0 : index
    %c0_31 = arith.constant 0 : index
    %73 = vector.load %arg4[%c0_30, %c0_31] : memref<512x1024xbf16, #tpu.memory_space<vmem>>, vector<512x1024xbf16>
    %cst_32 = arith.constant dense<0.000000e+00> : vector<8x1024xf32>
    %74 = tpu.matmul %72, %73, %cst_32 {dimension_numbers = #tpu.dot_dimension_numbers<[1], [0], [0], [1], [0, 0, 1, 1], [], []>} : vector<8x512xbf16>, vector<512x1024xbf16>, vector<8x1024xf32> -> vector<8x1024xf32>
    %c0_33 = arith.constant 0 : index
    %c1664 = arith.constant 1664 : index
    %75 = vector.load %arg6[%c0_33, %c1664] : memref<1x3776xf32, #tpu.memory_space<vmem>>, vector<1x1024xf32>
    %c0_34 = arith.constant 0 : index
    %c2688 = arith.constant 2688 : index
    %76 = vector.load %arg6[%c0_34, %c2688] : memref<1x3776xf32, #tpu.memory_space<vmem>>, vector<1x1024xf32>
    %cst_35 = arith.constant dense<0.000000e+00> : vector<1024xf32>
    %77 = vector.multi_reduction <add>, %74, %cst_35 [0] : vector<8x1024xf32> to vector<1024xf32>
    %78 = vector.shape_cast %77 : vector<1024xf32> to vector<1x1024xf32>
    %cst_36 = arith.constant 1.250000e-01 : f32
    %79 = vector.broadcast %cst_36 : f32 to vector<1x1024xf32>
    %80 = arith.mulf %78, %79 : vector<1x1024xf32>
    %81 = arith.mulf %74, %74 : vector<8x1024xf32>
    %cst_37 = arith.constant dense<0.000000e+00> : vector<1024xf32>
    %82 = vector.multi_reduction <add>, %81, %cst_37 [0] : vector<8x1024xf32> to vector<1024xf32>
    %83 = vector.shape_cast %82 : vector<1024xf32> to vector<1x1024xf32>
    %cst_38 = arith.constant 1.250000e-01 : f32
    %84 = vector.broadcast %cst_38 : f32 to vector<1x1024xf32>
    %85 = arith.mulf %83, %84 : vector<1x1024xf32>
    %86 = arith.mulf %80, %80 : vector<1x1024xf32>
    %87 = arith.subf %85, %86 : vector<1x1024xf32>
    %cst_39 = arith.constant 0.000000e+00 : f32
    %88 = vector.broadcast %cst_39 : f32 to vector<1x1024xf32>
    %89 = arith.maximumf %87, %88 : vector<1x1024xf32>
    %cst_40 = arith.constant 8.000000e-01 : f32
    %90 = vector.broadcast %cst_40 : f32 to vector<1x1024xf32>
    %91 = arith.addf %89, %90 : vector<1x1024xf32>
    %92 = math.rsqrt %91 : vector<1x1024xf32>
    %93 = arith.mulf %75, %92 : vector<1x1024xf32>
    %94 = arith.mulf %80, %93 : vector<1x1024xf32>
    %95 = arith.subf %76, %94 : vector<1x1024xf32>
    %96 = vector.broadcast %93 : vector<1x1024xf32> to vector<8x1024xf32>
    %97 = arith.mulf %74, %96 : vector<8x1024xf32>
    %98 = vector.broadcast %95 : vector<1x1024xf32> to vector<8x1024xf32>
    %99 = arith.addf %97, %98 : vector<8x1024xf32>
    %cst_41 = arith.constant 2.000000e-01 : f32
    %100 = vector.broadcast %cst_41 : f32 to vector<8x1024xf32>
    %101 = arith.mulf %100, %99 : vector<8x1024xf32>
    %102 = arith.maximumf %99, %101 : vector<8x1024xf32>
    %103 = arith.truncf %102 : vector<8x1024xf32> to vector<8x1024xbf16>
    %c0_42 = arith.constant 0 : index
    %c0_43 = arith.constant 0 : index
    %104 = vector.load %arg5[%c0_42, %c0_43] : memref<1024x64xbf16, #tpu.memory_space<vmem>>, vector<1024x64xbf16>
    %cst_44 = arith.constant dense<0.000000e+00> : vector<8x64xf32>
    %105 = tpu.matmul %103, %104, %cst_44 {dimension_numbers = #tpu.dot_dimension_numbers<[1], [0], [0], [1], [0, 0, 1, 1], [], []>} : vector<8x1024xbf16>, vector<1024x64xbf16>, vector<8x64xf32> -> vector<8x64xf32>
    %c0_45 = arith.constant 0 : index
    %c3712 = arith.constant 3712 : index
    %106 = vector.load %arg6[%c0_45, %c3712] : memref<1x3776xf32, #tpu.memory_space<vmem>>, vector<1x64xf32>
    %107 = vector.broadcast %106 : vector<1x64xf32> to vector<8x64xf32>
    %108 = arith.addf %105, %107 : vector<8x64xf32>
    %109 = math.tanh %108 : vector<8x64xf32>
    %c0_46 = arith.constant 0 : index
    %c0_47 = arith.constant 0 : index
    %110 = vector.load %arg7[%c0_46, %c0_47] : memref<8x64xf32, #tpu.memory_space<vmem>>, vector<8x64xf32>
    tpu.vector_store %arg7[%c0_46, %c0_47], %109 {strides = array<i32>} : memref<8x64xf32, #tpu.memory_space<vmem>>, vector<8x64xf32>,
    return
  }
}

</mosaic_0001>

<llo_original>
// kernel: tpu_custom_call.1
$region0: #{tpu_custom_call.1}
  #allocation0 [shape = 'u32[]', space=smem, size = 0x4, offset = 0x4, fixed_abs, tag = 'smem constant byte address 0x4 - core index']
  #allocation1 [shape = 'u32[144,128]{1,0:T(1,128)}', space=vmem, size = 0x12000, scoped, tag = 'internal scratch']
  %s0 = inlined_call_operand.vmem [shape: f32[8,32], index: 0, kind: input, shape index: {}]
  %s1 = inlined_call_operand.vmem [shape: bf16[32,128], index: 1, kind: input, shape index: {}]
  %s2 = inlined_call_operand.vmem [shape: bf16[128,256], index: 2, kind: input, shape index: {}]
  %s3 = inlined_call_operand.vmem [shape: bf16[256,512], index: 3, kind: input, shape index: {}]
  %s4 = inlined_call_operand.hbm [shape: bf16[512,1024], index: 4, kind: input, shape index: {}]
  %s5 = inlined_call_operand.vmem [shape: bf16[1024,64], index: 5, kind: input, shape index: {}]
  %s6 = inlined_call_operand.vmem [shape: f32[1,3776], index: 6, kind: input, shape index: {}]
  %s7 = inlined_call_operand.hbm [shape: f32[8,64], index: 7, kind: output, shape index: {}]
  %s8 = sld [smem:[#allocation0]]
  $region42: #{tpu_custom_call.1} parent=0
    _
  %s10 = ssub.s32 1, %s8
  %s11 = scalar_select 0, %s10, %s8
  $region1: #{tpu_custom_call.1} parent=0
    #allocation2 [shape = 'u8[1048576]{0}', space=vmem, size = 0x100000, scoped, tag = 'input window, operand 4, single buffered']
    #allocation3 [shape = 's32[1]{0}', space=sflag, size = 0x4, scoped, tag = 'scoped memory for tpu_custom_call.1']
    #allocation4 [shape = 's32[1]{0}', space=sflag, size = 0x4, scoped, tag = 'scoped memory for tpu_custom_call.1']
    #allocation5 [shape = 'u8[4096]{0}', space=vmem, size = 0x1000, scoped, tag = 'output window, operand 0, single buffered']
    %12 = vsyncpa [#allocation3], 0
    %13 = vsyncpa [#allocation4], 0
    // Predicated region
    $region2: #{tpu_custom_call.1} parent=1 // pred_check
      _
    $region3: #{tpu_custom_call.1} parent=1 // pred_check_branch
      %15 = sbr.rel (0) target = $region5
    $region4: #{tpu_custom_call.1} parent=1 // pred_region
      _
    $region5: #{tpu_custom_call.1} parent=1 // pred_fallthru
      _
    // Predicated region
    $region6: #{tpu_custom_call.1} parent=1 // pred_check
      _
    $region7: #{tpu_custom_call.1} parent=1 // pred_check_branch
      %17 = sbr.rel (0) target = $region9
    $region8: #{tpu_custom_call.1} parent=1 // pred_region
      _
    $region9: #{tpu_custom_call.1} parent=1 // pred_fallthru
      _
    // Predicated region
    $region10: #{tpu_custom_call.1} parent=1 // pred_check
      _
    $region11: #{tpu_custom_call.1} parent=1 // pred_check_branch
      %19 = sbr.rel (0) target = $region13
    $region12: #{tpu_custom_call.1} parent=1 // pred_region
      _
    $region13: #{tpu_custom_call.1} parent=1 // pred_fallthru
      _
    // Predicated region
    $region14: #{tpu_custom_call.1} parent=1 // pred_check
      _
    $region15: #{tpu_custom_call.1} parent=1 // pred_check_branch
      %21 = sbr.rel (0) target = $region17
    $region16: #{tpu_custom_call.1} parent=1 // pred_region
      _
    $region17: #{tpu_custom_call.1} parent=1 // pred_fallthru
      _
    // Predicated region
    $region18: #{tpu_custom_call.1} parent=1 // pred_check
      _
    $region19: #{tpu_custom_call.1} parent=1 // pred_check_branch
      %23 = sbr.rel (0) target = $region21
    $region20: #{tpu_custom_call.1} parent=1 // pred_region
      %s25 = ssub.s32 32768, 32768
      %26 = vsyncadd [#allocation3], %s25
      %s27 = sshll.u32 [#allocation2], 4
      %s28 = int_to_ptr.vmem [resolvable:$true] %s27
      %33 = dma.hbm_to_vmem [thread:$0]  %s4, 32768, %s28, [#allocation3], 512, 512, 32
    $region21: #{tpu_custom_call.1} parent=1 // pred_fallthru
      _
    // Predicated region
    $region22: #{tpu_custom_call.1} parent=1 // pred_check
      _
    $region23: #{tpu_custom_call.1} parent=1 // pred_check_branch
      %35 = sbr.rel (0) target = $region25
    $region24: #{tpu_custom_call.1} parent=1 // pred_region
      _
    $region25: #{tpu_custom_call.1} parent=1 // pred_fallthru
      _
    // Predicated region
    $region26: #{tpu_custom_call.1} parent=1 // pred_check
      _
    $region27: #{tpu_custom_call.1} parent=1 // pred_check_branch
      %37 = sbr.rel (0) target = $region29
    $region28: #{tpu_custom_call.1} parent=1 // pred_region
      _
    $region29: #{tpu_custom_call.1} parent=1 // pred_fallthru
      _
    // Predicated region
    $region30: #{tpu_custom_call.1} parent=1 // pred_check
      _
    $region31: #{tpu_custom_call.1} parent=1 // pred_check_branch
      %39 = sbr.rel (0) target = $region33
    $region32: #{tpu_custom_call.1} parent=1 // pred_region
      %40 = dma.done [#allocation3], 32768
    $region33: #{tpu_custom_call.1} parent=1 // pred_fallthru
      _
    %v42 = vld [vmem:[%s0] sm:$0xff]
    %v43 = vpack.c.bf16 %v42, %v42
    %v44 = vld [vmem:[%s1] sm:$0xf]
    %v45 = vld [vmem:[%s1 + $0x4] sm:$0xf]
    %v46 = vld [vmem:[%s1 + $0x8] sm:$0xf]
    %v47 = vld [vmem:[%s1 + $0xc] sm:$0xf]
    %v48 = vld [vmem:[%s6] sm:$0x1]
    %v50 = vlaneseq
    %v51 = vshrl.u32 %v50, 7
    %v52 = vsub.s32 0, %v51
    %v53 = vrot.slane %v48, %v52
    %v59 = vunpack.c.l.b16 %v44
    %v60 = vunpack.c.l.b16 %v45
    %v61 = vunpack.c.l.b16 %v46
    %v62 = vunpack.c.l.b16 %v47
    %v63 = vpack.c.b16 %v60, %v59
    %v64 = vpack.c.b16 %v62, %v61
    %vm67 = vcmask 261120
    %v69 = vsel %vm67, %v43, 0
    %71 = vmatprep.subr.bf16.mxu0 0
    %72 = vmatpush1.bf16.msra.mxu0 %v63
    %73 = vmatprep.subr.bf16.mxu0 0
    %74 = vmatpush1.bf16.msra.mxu0 %v64
    %75 = vmatprep.subr.bf16.mxu0 0
    %76 = vmatpush1.bf16.msra.mxu0 0
    %77 = vmatprep.subr.bf16.mxu0 0
    %78 = vmatpush1.bf16.msra.mxu0 0
    %79 = vmatprep.subr.bf16.mxu0 0
    %80 = vmatpush1.bf16.msra.mxu0 0
    %81 = vmatprep.subr.bf16.mxu0 0
    %82 = vmatpush1.bf16.msra.mxu0 0
    %83 = vmatprep.subr.bf16.mxu0 0
    %84 = vmatpush1.bf16.msra.mxu0 0
    %85 = vmatprep.subr.bf16.mxu0 0
    %86 = vmatpush1.bf16.msra.mxu0 0
    %87 = vmatprep.subr.bf16.mxu0 0
    %88 = vmatpush1.bf16.msra.mxu0 0
    %89 = vmatprep.subr.bf16.mxu0 0
    %90 = vmatpush1.bf16.msra.mxu0 0
    %91 = vmatprep.subr.bf16.mxu0 0
    %92 = vmatpush1.bf16.msra.mxu0 0
    %93 = vmatprep.subr.bf16.mxu0 0
    %94 = vmatpush1.bf16.msra.mxu0 0
    %95 = vmatprep.subr.bf16.mxu0 0
    %96 = vmatpush1.bf16.msra.mxu0 0
    %97 = vmatprep.subr.bf16.mxu0 0
    %98 = vmatpush1.bf16.msra.mxu0 0
    %99 = vmatprep.subr.bf16.mxu0 0
    %100 = vmatpush1.bf16.msra.mxu0 0
    %101 = vmatprep.subr.bf16.mxu0 0
    %102 = vmatpush1.bf16.msra.mxu0 0
    %103 = vmatprep.mubr.bf16.mxu0 0
    %104 = vmatmul.mubr.bf16.gmra.mrb[0].mxu0 %v69
    %v105 = vpop.f32.mrb[0].mxu0
    %v106 = vadd.f32 %v53, %v105
    %v107 = vpop.f32.mrb[0].mxu0
    %v108 = vpop.f32.mrb[0].mxu0
    %v109 = vpop.f32.mrb[0].mxu0
    %110 = vdwg.mxu0
    %v111 = vmul.f32 %v106, 0.2
    %v112 = vmax.f32 %v106, %v111
    %v113 = vpack.c.bf16 %v112, %v112
    %v114 = vld [vmem:[%s2] sm:$0xff]
    %v115 = vld [vmem:[%s2 + $0x8] sm:$0xff]
    %v116 = vld [vmem:[%s2 + $0x10] sm:$0xff]
    %v117 = vld [vmem:[%s2 + $0x18] sm:$0xff]
    %v118 = vld [vmem:[%s2 + $0x20] sm:$0xff]
    %v119 = vld [vmem:[%s2 + $0x28] sm:$0xff]
    %v120 = vld [vmem:[%s2 + $0x30] sm:$0xff]
    %v121 = vld [vmem:[%s2 + $0x38] sm:$0xff]
    %v122 = vld [vmem:[%s2 + $0x40] sm:$0xff]
    %v123 = vld [vmem:[%s2 + $0x48] sm:$0xff]
    %v124 = vld [vmem:[%s2 + $0x50] sm:$0xff]
    %v125 = vld [vmem:[%s2 + $0x58] sm:$0xff]
    %v126 = vld [vmem:[%s2 + $0x60] sm:$0xff]
    %v127 = vld [vmem:[%s2 + $0x68] sm:$0xff]
    %v128 = vld [vmem:[%s2 + $0x70] sm:$0xff]
    %v129 = vld [vmem:[%s2 + $0x78] sm:$0xff]
    %v146 = vunpack.c.l.b16 %v114
    %v147 = vunpack.c.h.b16 %v114
    %v148 = vunpack.c.l.b16 %v115
    %v149 = vunpack.c.h.b16 %v115
    %v150 = vunpack.c.l.b16 %v116
    %v151 = vunpack.c.h.b16 %v116
    %v152 = vunpack.c.l.b16 %v117
    %v153 = vunpack.c.h.b16 %v117
    %v154 = vunpack.c.l.b16 %v118
    %v155 = vunpack.c.h.b16 %v118
    %v156 = vunpack.c.l.b16 %v119
    %v157 = vunpack.c.h.b16 %v119
    %v158 = vunpack.c.l.b16 %v120
    %v159 = vunpack.c.h.b16 %v120
    %v160 = vunpack.c.l.b16 %v121
    %v161 = vunpack.c.h.b16 %v121
    %v162 = vunpack.c.l.b16 %v122
    %v163 = vunpack.c.h.b16 %v122
    %v164 = vunpack.c.l.b16 %v123
    %v165 = vunpack.c.h.b16 %v123
    %v166 = vunpack.c.l.b16 %v124
    %v167 = vunpack.c.h.b16 %v124
    %v168 = vunpack.c.l.b16 %v125
    %v169 = vunpack.c.h.b16 %v125
    %v170 = vunpack.c.l.b16 %v126
    %v171 = vunpack.c.h.b16 %v126
    %v172 = vunpack.c.l.b16 %v127
    %v173 = vunpack.c.h.b16 %v127
    %v174 = vunpack.c.l.b16 %v128
    %v175 = vunpack.c.h.b16 %v128
    %v176 = vunpack.c.l.b16 %v129
    %v177 = vunpack.c.h.b16 %v129
    %v178 = vpack.c.b16 %v148, %v146
    %v179 = vpack.c.b16 %v149, %v147
    %v180 = vpack.c.b16 %v152, %v150
    %v181 = vpack.c.b16 %v153, %v151
    %v182 = vpack.c.b16 %v156, %v154
    %v183 = vpack.c.b16 %v157, %v155
    %v184 = vpack.c.b16 %v160, %v158
    %v185 = vpack.c.b16 %v161, %v159
    %v186 = vpack.c.b16 %v164, %v162
    %v187 = vpack.c.b16 %v165, %v163
    %v188 = vpack.c.b16 %v168, %v166
    %v189 = vpack.c.b16 %v169, %v167
    %v190 = vpack.c.b16 %v172, %v170
    %v191 = vpack.c.b16 %v173, %v171
    %v192 = vpack.c.b16 %v176, %v174
    %v193 = vpack.c.b16 %v177, %v175
    %210 = vmatprep.subr.bf16.mxu0 %v179
    %211 = vmatpush1.bf16.msra.mxu0 %v178
    %212 = vmatprep.subr.bf16.mxu0 %v181
    %213 = vmatpush1.bf16.msra.mxu0 %v180
    %214 = vmatprep.subr.bf16.mxu0 %v183
    %215 = vmatpush1.bf16.msra.mxu0 %v182
    %216 = vmatprep.subr.bf16.mxu0 %v185
    %217 = vmatpush1.bf16.msra.mxu0 %v184
    %218 = vmatprep.subr.bf16.mxu0 %v187
    %219 = vmatpush1.bf16.msra.mxu0 %v186
    %220 = vmatprep.subr.bf16.mxu0 %v189
    %221 = vmatpush1.bf16.msra.mxu0 %v188
    %222 = vmatprep.subr.bf16.mxu0 %v191
    %223 = vmatpush1.bf16.msra.mxu0 %v190
    %224 = vmatprep.subr.bf16.mxu0 %v193
    %225 = vmatpush1.bf16.msra.mxu0 %v192
    %226 = vmatprep.subr.bf16.mxu0 0
    %227 = vmatpush1.bf16.msra.mxu0 0
    %228 = vmatprep.subr.bf16.mxu0 0
    %229 = vmatpush1.bf16.msra.mxu0 0
    %230 = vmatprep.subr.bf16.mxu0 0
    %231 = vmatpush1.bf16.msra.mxu0 0
    %232 = vmatprep.subr.bf16.mxu0 0
    %233 = vmatpush1.bf16.msra.mxu0 0
    %234 = vmatprep.subr.bf16.mxu0 0
    %235 = vmatpush1.bf16.msra.mxu0 0
    %236 = vmatprep.subr.bf16.mxu0 0
    %237 = vmatpush1.bf16.msra.mxu0 0
    %238 = vmatprep.subr.bf16.mxu0 0
    %239 = vmatpush1.bf16.msra.mxu0 0
    %240 = vmatprep.subr.bf16.mxu0 0
    %241 = vmatpush1.bf16.msra.mxu0 0
    %242 = vmatprep.mubr.bf16.mxu0 0
    %243 = vmatmul.mubr.bf16.gmra.mrb[0].mxu0 %v113
    %v244 = vpop.f32.mrb[0].mxu0
    %v245 = vadd.f32 0.0, %v244
    %v246 = vpop.f32.mrb[0].mxu0
    %v247 = vadd.f32 0.0, %v246
    %v248 = vpop.f32.mrb[0].mxu0
    %v249 = vpop.f32.mrb[0].mxu0
    %250 = vdwg.mxu0
    %v251 = vld [vmem:[%s6 + $0x1] sm:$0x3]
    %v252 = vld [vmem:[%s6 + $0x3] sm:$0x3]
    %v253 = vrot.slane %v245, 4
    %v254 = vadd.f32 %v245, %v253
    %v255 = vrot.slane %v254, 2
    %v256 = vadd.f32 %v254, %v255
    %v257 = vrot.slane %v256, 1
    %v258 = vadd.f32 %v256, %v257
    %v259 = vrot.slane %v247, 4
    %v260 = vadd.f32 %v247, %v259
    %v261 = vrot.slane %v260, 2
    %v262 = vadd.f32 %v260, %v261
    %v263 = vrot.slane %v262, 1
    %v264 = vadd.f32 %v262, %v263
    %v265 = vmul.f32 %v258, 0.125
    %v266 = vmul.f32 %v264, 0.125
    %v267 = vmul.f32 %v245, %v245
    %v268 = vmul.f32 %v247, %v247
    %v269 = vrot.slane %v267, 4
    %v270 = vadd.f32 %v267, %v269
    %v271 = vrot.slane %v270, 2
    %v272 = vadd.f32 %v270, %v271
    %v273 = vrot.slane %v272, 1
    %v274 = vadd.f32 %v272, %v273
    %v275 = vrot.slane %v268, 4
    %v276 = vadd.f32 %v268, %v275
    %v277 = vrot.slane %v276, 2
    %v278 = vadd.f32 %v276, %v277
    %v279 = vrot.slane %v278, 1
    %v280 = vadd.f32 %v278, %v279
    %v281 = vmul.f32 %v274, 0.125
    %v282 = vmul.f32 %v280, 0.125
    %v283 = vmul.f32 %v265, %v265
    %v284 = vmul.f32 %v266, %v266
    %v285 = vsub.f32 %v281, %v283
    %v286 = vsub.f32 %v282, %v284
    %v287 = vmax.f32 %v285, 0.0
    %v288 = vmax.f32 %v286, 0.0
    %v289 = vadd.f32 %v287, 0.8
    %v290 = vadd.f32 %v288, 0.8
    %v291 = vrsqrt.pop %v289
    %v292 = vrsqrt.pop %v290
    %v295 = vcombine.low %v291, %v292
    %v297 = vunpack.c.l.s4 1966171168
    %v298 = vunpack.c.0.s8 %v297
    %v299 = vlaneseq
    %v300 = vshrl.u32 %v299, 7
    %v301 = vsub.s32 %v298, %v300
    %v302 = vrot.slane %v295, %v301
    %v304 = vunpack.c.l.s4 1966171168
    %v305 = vunpack.c.0.s8 %v304
    %v306 = vlaneseq
    %v307 = vshrl.u32 %v306, 7
    %v308 = vsub.s32 %v305, %v307
    %v309 = vrot.slane %v302, %v308
    %v311 = vmul.f32 %v251, %v309
    %v313 = vlaneseq
    %v314 = vshrl.u32 %v313, 7
    %v315 = vsub.s32 0, %v314
    %v316 = vrot.slane %v311, %v315
    %v317 = vlaneseq
    %v318 = vshrl.u32 %v317, 7
    %v319 = vsub.s32 1, %v318
    %v320 = vrot.slane %v311, %v319
    %v323 = vmul.f32 %v265, %v316
    %v324 = vmul.f32 %v266, %v320
    %v327 = vcombine.low %v323, %v324
    %v329 = vunpack.c.l.s4 1966171168
    %v330 = vunpack.c.0.s8 %v329
    %v331 = vlaneseq
    %v332 = vshrl.u32 %v331, 7
    %v333 = vsub.s32 %v330, %v332
    %v334 = vrot.slane %v327, %v333
    %v336 = vunpack.c.l.s4 1966171168
    %v337 = vunpack.c.0.s8 %v336
    %v338 = vlaneseq
    %v339 = vshrl.u32 %v338, 7
    %v340 = vsub.s32 %v337, %v339
    %v341 = vrot.slane %v334, %v340
    %v343 = vsub.f32 %v252, %v341
    %v344 = vmul.f32 %v245, %v316
    %v345 = vmul.f32 %v247, %v320
    %v347 = vlaneseq
    %v348 = vshrl.u32 %v347, 7
    %v349 = vsub.s32 0, %v348
    %v350 = vrot.slane %v343, %v349
    %v351 = vlaneseq
    %v352 = vshrl.u32 %v351, 7
    %v353 = vsub.s32 1, %v352
    %v354 = vrot.slane %v343, %v353
    %v357 = vadd.f32 %v344, %v350
    %v358 = vadd.f32 %v345, %v354
    %v359 = vmul.f32 %v357, 0.2
    %v360 = vmul.f32 %v358, 0.2
    %v361 = vmax.f32 %v357, %v359
    %v362 = vmax.f32 %v358, %v360
    %v363 = vpack.c.bf16 %v361, %v361
    %v364 = vpack.c.bf16 %v362, %v362
    %v365 = vld [vmem:[%s3] sm:$0xff]
    %v366 = vld [vmem:[%s3 + $0x8] sm:$0xff]
    %v367 = vld [vmem:[%s3 + $0x10] sm:$0xff]
    %v368 = vld [vmem:[%s3 + $0x18] sm:$0xff]
    %v369 = vld [vmem:[%s3 + $0x20] sm:$0xff]
    %v370 = vld [vmem:[%s3 + $0x28] sm:$0xff]
    %v371 = vld [vmem:[%s3 + $0x30] sm:$0xff]
    %v372 = vld [vmem:[%s3 + $0x38] sm:$0xff]
    %v373 = vld [vmem:[%s3 + $0x40] sm:$0xff]
    %v374 = vld [vmem:[%s3 + $0x48] sm:$0xff]
    %v375 = vld [vmem:[%s3 + $0x50] sm:$0xff]
    %v376 = vld [vmem:[%s3 + $0x58] sm:$0xff]
    %v377 = vld [vmem:[%s3 + $0x60] sm:$0xff]
    %v378 = vld [vmem:[%s3 + $0x68] sm:$0xff]
    %v379 = vld [vmem:[%s3 + $0x70] sm:$0xff]
    %v380 = vld [vmem:[%s3 + $0x78] sm:$0xff]
    %v381 = vld [vmem:[%s3 + $0x80] sm:$0xff]
    %v382 = vld [vmem:[%s3 + $0x88] sm:$0xff]
    %v383 = vld [vmem:[%s3 + $0x90] sm:$0xff]
    %v384 = vld [vmem:[%s3 + $0x98] sm:$0xff]
    %v385 = vld [vmem:[%s3 + $0xa0] sm:$0xff]
    %v386 = vld [vmem:[%s3 + $0xa8] sm:$0xff]
    %v387 = vld [vmem:[%s3 + $0xb0] sm:$0xff]
    %v388 = vld [vmem:[%s3 + $0xb8] sm:$0xff]
    %v389 = vld [vmem:[%s3 + $0xc0] sm:$0xff]
    %v390 = vld [vmem:[%s3 + $0xc8] sm:$0xff]
    %v391 = vld [vmem:[%s3 + $0xd0] sm:$0xff]
    %v392 = vld [vmem:[%s3 + $0xd8] sm:$0xff]
    %v393 = vld [vmem:[%s3 + $0xe0] sm:$0xff]
    %v394 = vld [vmem:[%s3 + $0xe8] sm:$0xff]
    %v395 = vld [vmem:[%s3 + $0xf0] sm:$0xff]
    %v396 = vld [vmem:[%s3 + $0xf8] sm:$0xff]
    %v397 = vld [vmem:[%s3 + $0x100] sm:$0xff]
    %v398 = vld [vmem:[%s3 + $0x108] sm:$0xff]
    %v399 = vld [vmem:[%s3 + $0x110] sm:$0xff]
    %v400 = vld [vmem:[%s3 + $0x118] sm:$0xff]
    %v401 = vld [vmem:[%s3 + $0x120] sm:$0xff]
    %v402 = vld [vmem:[%s3 + $0x128] sm:$0xff]
    %v403 = vld [vmem:[%s3 + $0x130] sm:$0xff]
    %v404 = vld [vmem:[%s3 + $0x138] sm:$0xff]
    %v405 = vld [vmem:[%s3 + $0x140] sm:$0xff]
    %v406 = vld [vmem:[%s3 + $0x148] sm:$0xff]
    %v407 = vld [vmem:[%s3 + $0x150] sm:$0xff]
    %v408 = vld [vmem:[%s3 + $0x158] sm:$0xff]
    %v409 = vld [vmem:[%s3 + $0x160] sm:$0xff]
    %v410 = vld [vmem:[%s3 + $0x168] sm:$0xff]
    %v411 = vld [vmem:[%s3 + $0x170] sm:$0xff]
    %v412 = vld [vmem:[%s3 + $0x178] sm:$0xff]
    %v413 = vld [vmem:[%s3 + $0x180] sm:$0xff]
    %v414 = vld [vmem:[%s3 + $0x188] sm:$0xff]
    %v415 = vld [vmem:[%s3 + $0x190] sm:$0xff]
    %v416 = vld [vmem:[%s3 + $0x198] sm:$0xff]
    %v417 = vld [vmem:[%s3 + $0x1a0] sm:$0xff]
    %v418 = vld [vmem:[%s3 + $0x1a8] sm:$0xff]
    %v419 = vld [vmem:[%s3 + $0x1b0] sm:$0xff]
    %v420 = vld [vmem:[%s3 + $0x1b8] sm:$0xff]
    %v421 = vld [vmem:[%s3 + $0x1c0] sm:$0xff]
    %v422 = vld [vmem:[%s3 + $0x1c8] sm:$0xff]
    %v423 = vld [vmem:[%s3 + $0x1d0] sm:$0xff]
    %v424 = vld [vmem:[%s3 + $0x1d8] sm:$0xff]
    %v425 = vld [vmem:[%s3 + $0x1e0] sm:$0xff]
    %v426 = vld [vmem:[%s3 + $0x1e8] sm:$0xff]
    %v427 = vld [vmem:[%s3 + $0x1f0] sm:$0xff]
    %v428 = vld [vmem:[%s3 + $0x1f8] sm:$0xff]
    %v493 = vunpack.c.l.b16 %v365
    %v494 = vunpack.c.h.b16 %v365
    %v495 = vunpack.c.l.b16 %v366
    %v496 = vunpack.c.h.b16 %v366
    %v497 = vunpack.c.l.b16 %v367
    %v498 = vunpack.c.h.b16 %v367
    %v499 = vunpack.c.l.b16 %v368
    %v500 = vunpack.c.h.b16 %v368
    %v501 = vunpack.c.l.b16 %v369
    %v502 = vunpack.c.h.b16 %v369
    %v503 = vunpack.c.l.b16 %v370
    %v504 = vunpack.c.h.b16 %v370
    %v505 = vunpack.c.l.b16 %v371
    %v506 = vunpack.c.h.b16 %v371
    %v507 = vunpack.c.l.b16 %v372
    %v508 = vunpack.c.h.b16 %v372
    %v509 = vunpack.c.l.b16 %v373
    %v510 = vunpack.c.h.b16 %v373
    %v511 = vunpack.c.l.b16 %v374
    %v512 = vunpack.c.h.b16 %v374
    %v513 = vunpack.c.l.b16 %v375
    %v514 = vunpack.c.h.b16 %v375
    %v515 = vunpack.c.l.b16 %v376
    %v516 = vunpack.c.h.b16 %v376
    %v517 = vunpack.c.l.b16 %v377
    %v518 = vunpack.c.h.b16 %v377
    %v519 = vunpack.c.l.b16 %v378
    %v520 = vunpack.c.h.b16 %v378
    %v521 = vunpack.c.l.b16 %v379
    %v522 = vunpack.c.h.b16 %v379
    %v523 = vunpack.c.l.b16 %v380
    %v524 = vunpack.c.h.b16 %v380
    %v525 = vunpack.c.l.b16 %v381
    %v526 = vunpack.c.h.b16 %v381
    %v527 = vunpack.c.l.b16 %v382
    %v528 = vunpack.c.h.b16 %v382
    %v529 = vunpack.c.l.b16 %v383
    %v530 = vunpack.c.h.b16 %v383
    %v531 = vunpack.c.l.b16 %v384
    %v532 = vunpack.c.h.b16 %v384
    %v533 = vunpack.c.l.b16 %v385
    %v534 = vunpack.c.h.b16 %v385
    %v535 = vunpack.c.l.b16 %v386
    %v536 = vunpack.c.h.b16 %v386
    %v537 = vunpack.c.l.b16 %v387
    %v538 = vunpack.c.h.b16 %v387
    %v539 = vunpack.c.l.b16 %v388
    %v540 = vunpack.c.h.b16 %v388
    %v541 = vunpack.c.l.b16 %v389
    %v542 = vunpack.c.h.b16 %v389
    %v543 = vunpack.c.l.b16 %v390
    %v544 = vunpack.c.h.b16 %v390
    %v545 = vunpack.c.l.b16 %v391
    %v546 = vunpack.c.h.b16 %v391
    %v547 = vunpack.c.l.b16 %v392
    %v548 = vunpack.c.h.b16 %v392
    %v549 = vunpack.c.l.b16 %v393
    %v550 = vunpack.c.h.b16 %v393
    %v551 = vunpack.c.l.b16 %v394
    %v552 = vunpack.c.h.b16 %v394
    %v553 = vunpack.c.l.b16 %v395
    %v554 = vunpack.c.h.b16 %v395
    %v555 = vunpack.c.l.b16 %v396
    %v556 = vunpack.c.h.b16 %v396
    %v557 = vunpack.c.l.b16 %v397
    %v558 = vunpack.c.h.b16 %v397
    %v559 = vunpack.c.l.b16 %v398
    %v560 = vunpack.c.h.b16 %v398
    %v561 = vunpack.c.l.b16 %v399
    %v562 = vunpack.c.h.b16 %v399
    %v563 = vunpack.c.l.b16 %v400
    %v564 = vunpack.c.h.b16 %v400
    %v565 = vunpack.c.l.b16 %v401
    %v566 = vunpack.c.h.b16 %v401
    %v567 = vunpack.c.l.b16 %v402
    %v568 = vunpack.c.h.b16 %v402
    %v569 = vunpack.c.l.b16 %v403
    %v570 = vunpack.c.h.b16 %v403
    %v571 = vunpack.c.l.b16 %v404
    %v572 = vunpack.c.h.b16 %v404
    %v573 = vunpack.c.l.b16 %v405
    %v574 = vunpack.c.h.b16 %v405
    %v575 = vunpack.c.l.b16 %v406
    %v576 = vunpack.c.h.b16 %v406
    %v577 = vunpack.c.l.b16 %v407
    %v578 = vunpack.c.h.b16 %v407
    %v579 = vunpack.c.l.b16 %v408
    %v580 = vunpack.c.h.b16 %v408
    %v581 = vunpack.c.l.b16 %v409
    %v582 = vunpack.c.h.b16 %v409
    %v583 = vunpack.c.l.b16 %v410
    %v584 = vunpack.c.h.b16 %v410
    %v585 = vunpack.c.l.b16 %v411
    %v586 = vunpack.c.h.b16 %v411
    %v587 = vunpack.c.l.b16 %v412
    %v588 = vunpack.c.h.b16 %v412
    %v589 = vunpack.c.l.b16 %v413
    %v590 = vunpack.c.h.b16 %v413
    %v591 = vunpack.c.l.b16 %v414
    %v592 = vunpack.c.h.b16 %v414
    %v593 = vunpack.c.l.b16 %v415
    %v594 = vunpack.c.h.b16 %v415
    %v595 = vunpack.c.l.b16 %v416
    %v596 = vunpack.c.h.b16 %v416
    %v597 = vunpack.c.l.b16 %v417
    %v598 = vunpack.c.h.b16 %v417
    %v599 = vunpack.c.l.b16 %v418
    %v600 = vunpack.c.h.b16 %v418
    %v601 = vunpack.c.l.b16 %v419
    %v602 = vunpack.c.h.b16 %v419
    %v603 = vunpack.c.l.b16 %v420
    %v604 = vunpack.c.h.b16 %v420
    %v605 = vunpack.c.l.b16 %v421
    %v606 = vunpack.c.h.b16 %v421
    %v607 = vunpack.c.l.b16 %v422
    %v608 = vunpack.c.h.b16 %v422
    %v609 = vunpack.c.l.b16 %v423
    %v610 = vunpack.c.h.b16 %v423
    %v611 = vunpack.c.l.b16 %v424
    %v612 = vunpack.c.h.b16 %v424
    %v613 = vunpack.c.l.b16 %v425
    %v614 = vunpack.c.h.b16 %v425
    %v615 = vunpack.c.l.b16 %v426
    %v616 = vunpack.c.h.b16 %v426
    %v617 = vunpack.c.l.b16 %v427
    %v618 = vunpack.c.h.b16 %v427
    %v619 = vunpack.c.l.b16 %v428
    %v620 = vunpack.c.h.b16 %v428
    %v621 = vpack.c.b16 %v497, %v493
    %v622 = vpack.c.b16 %v498, %v494
    %v623 = vpack.c.b16 %v499, %v495
    %v624 = vpack.c.b16 %v500, %v496
    %v625 = vpack.c.b16 %v505, %v501
    %v626 = vpack.c.b16 %v506, %v502
    %v627 = vpack.c.b16 %v507, %v503
    %v628 = vpack.c.b16 %v508, %v504
    %v629 = vpack.c.b16 %v513, %v509
    %v630 = vpack.c.b16 %v514, %v510
    %v631 = vpack.c.b16 %v515, %v511
    %v632 = vpack.c.b16 %v516, %v512
    %v633 = vpack.c.b16 %v521, %v517
    %v634 = vpack.c.b16 %v522, %v518
    %v635 = vpack.c.b16 %v523, %v519
    %v636 = vpack.c.b16 %v524, %v520
    %v637 = vpack.c.b16 %v529, %v525
    %v638 = vpack.c.b16 %v530, %v526
    %v639 = vpack.c.b16 %v531, %v527
    %v640 = vpack.c.b16 %v532, %v528
    %v641 = vpack.c.b16 %v537, %v533
    %v642 = vpack.c.b16 %v538, %v534
    %v643 = vpack.c.b16 %v539, %v535
    %v644 = vpack.c.b16 %v540, %v536
    %v645 = vpack.c.b16 %v545, %v541
    %v646 = vpack.c.b16 %v546, %v542
    %v647 = vpack.c.b16 %v547, %v543
    %v648 = vpack.c.b16 %v548, %v544
    %v649 = vpack.c.b16 %v553, %v549
    %v650 = vpack.c.b16 %v554, %v550
    %v651 = vpack.c.b16 %v555, %v551
    %v652 = vpack.c.b16 %v556, %v552
    %v653 = vpack.c.b16 %v561, %v557
    %v654 = vpack.c.b16 %v562, %v558
    %v655 = vpack.c.b16 %v563, %v559
    %v656 = vpack.c.b16 %v564, %v560
    %v657 = vpack.c.b16 %v569, %v565
    %v658 = vpack.c.b16 %v570, %v566
    %v659 = vpack.c.b16 %v571, %v567
    %v660 = vpack.c.b16 %v572, %v568
    %v661 = vpack.c.b16 %v577, %v573
    %v662 = vpack.c.b16 %v578, %v574
    %v663 = vpack.c.b16 %v579, %v575
    %v664 = vpack.c.b16 %v580, %v576
    %v665 = vpack.c.b16 %v585, %v581
    %v666 = vpack.c.b16 %v586, %v582
    %v667 = vpack.c.b16 %v587, %v583
    %v668 = vpack.c.b16 %v588, %v584
    %v669 = vpack.c.b16 %v593, %v589
    %v670 = vpack.c.b16 %v594, %v590
    %v671 = vpack.c.b16 %v595, %v591
    %v672 = vpack.c.b16 %v596, %v592
    %v673 = vpack.c.b16 %v601, %v597
    %v674 = vpack.c.b16 %v602, %v598
    %v675 = vpack.c.b16 %v603, %v599
    %v676 = vpack.c.b16 %v604, %v600
    %v677 = vpack.c.b16 %v609, %v605
    %v678 = vpack.c.b16 %v610, %v606
    %v679 = vpack.c.b16 %v611, %v607
    %v680 = vpack.c.b16 %v612, %v608
    %v681 = vpack.c.b16 %v617, %v613
    %v682 = vpack.c.b16 %v618, %v614
    %v683 = vpack.c.b16 %v619, %v615
    %v684 = vpack.c.b16 %v620, %v616
    %749 = vmatprep.subr.bf16.mxu0 %v622
    %750 = vmatpush1.bf16.msra.mxu0 %v621
    %751 = vmatprep.subr.bf16.mxu0 %v626
    %752 = vmatpush1.bf16.msra.mxu0 %v625
    %753 = vmatprep.subr.bf16.mxu0 %v630
    %754 = vmatpush1.bf16.msra.mxu0 %v629
    %755 = vmatprep.subr.bf16.mxu0 %v634
    %756 = vmatpush1.bf16.msra.mxu0 %v633
    %757 = vmatprep.subr.bf16.mxu0 %v638
    %758 = vmatpush1.bf16.msra.mxu0 %v637
    %759 = vmatprep.subr.bf16.mxu0 %v642
    %760 = vmatpush1.bf16.msra.mxu0 %v641
    %761 = vmatprep.subr.bf16.mxu0 %v646
    %762 = vmatpush1.bf16.msra.mxu0 %v645
    %763 = vmatprep.subr.bf16.mxu0 %v650
    %764 = vmatpush1.bf16.msra.mxu0 %v649
    %765 = vmatprep.subr.bf16.mxu0 %v654
    %766 = vmatpush1.bf16.msra.mxu0 %v653
    %767 = vmatprep.subr.bf16.mxu0 %v658
    %768 = vmatpush1.bf16.msra.mxu0 %v657
    %769 = vmatprep.subr.bf16.mxu0 %v662
    %770 = vmatpush1.bf16.msra.mxu0 %v661
    %771 = vmatprep.subr.bf16.mxu0 %v666
    %772 = vmatpush1.bf16.msra.mxu0 %v665
    %773 = vmatprep.subr.bf16.mxu0 %v670
    %774 = vmatpush1.bf16.msra.mxu0 %v669
    %775 = vmatprep.subr.bf16.mxu0 %v674
    %776 = vmatpush1.bf16.msra.mxu0 %v673
    %777 = vmatprep.subr.bf16.mxu0 %v678
    %778 = vmatpush1.bf16.msra.mxu0 %v677
    %779 = vmatprep.subr.bf16.mxu0 %v682
    %780 = vmatpush1.bf16.msra.mxu0 %v681
    %781 = vmatprep.mubr.bf16.mxu0 %v364
    %782 = vmatmul.mubr.bf16.gmra.mrb[0].mxu0 %v363
    %v783 = vpop.f32.mrb[0].mxu0
    %v784 = vadd.f32 0.0, %v783
    %v785 = vpop.f32.mrb[0].mxu0
    %v786 = vadd.f32 0.0, %v785
    %v787 = vpop.f32.mrb[0].mxu0
    %v788 = vpop.f32.mrb[0].mxu0
    %789 = vdwg.mxu0
    %790 = vmatprep.subr.bf16.mxu0 %v624
    %791 = vmatpush1.bf16.msra.mxu0 %v623
    %792 = vmatprep.subr.bf16.mxu0 %v628
    %793 = vmatpush1.bf16.msra.mxu0 %v627
    %794 = vmatprep.subr.bf16.mxu0 %v632
    %795 = vmatpush1.bf16.msra.mxu0 %v631
    %796 = vmatprep.subr.bf16.mxu0 %v636
    %797 = vmatpush1.bf16.msra.mxu0 %v635
    %798 = vmatprep.subr.bf16.mxu0 %v640
    %799 = vmatpush1.bf16.msra.mxu0 %v639
    %800 = vmatprep.subr.bf16.mxu0 %v644
    %801 = vmatpush1.bf16.msra.mxu0 %v643
    %802 = vmatprep.subr.bf16.mxu0 %v648
    %803 = vmatpush1.bf16.msra.mxu0 %v647
    %804 = vmatprep.subr.bf16.mxu0 %v652
    %805 = vmatpush1.bf16.msra.mxu0 %v651
    %806 = vmatprep.subr.bf16.mxu0 %v656
    %807 = vmatpush1.bf16.msra.mxu0 %v655
    %808 = vmatprep.subr.bf16.mxu0 %v660
    %809 = vmatpush1.bf16.msra.mxu0 %v659
    %810 = vmatprep.subr.bf16.mxu0 %v664
    %811 = vmatpush1.bf16.msra.mxu0 %v663
    %812 = vmatprep.subr.bf16.mxu0 %v668
    %813 = vmatpush1.bf16.msra.mxu0 %v667
    %814 = vmatprep.subr.bf16.mxu0 %v672
    %815 = vmatpush1.bf16.msra.mxu0 %v671
    %816 = vmatprep.subr.bf16.mxu0 %v676
    %817 = vmatpush1.bf16.msra.mxu0 %v675
    %818 = vmatprep.subr.bf16.mxu0 %v680
    %819 = vmatpush1.bf16.msra.mxu0 %v679
    %820 = vmatprep.subr.bf16.mxu0 %v684
    %821 = vmatpush1.bf16.msra.mxu0 %v683
    %822 = vmatprep.mubr.bf16.mxu0 %v364
    %823 = vmatmul.mubr.bf16.gmra.mrb[0].mxu0 %v363
    %v824 = vpop.f32.mrb[0].mxu0
    %v825 = vadd.f32 0.0, %v824
    %v826 = vpop.f32.mrb[0].mxu0
    %v827 = vadd.f32 0.0, %v826
    %v828 = vpop.f32.mrb[0].mxu0
    %v829 = vpop.f32.mrb[0].mxu0
    %830 = vdwg.mxu0
    %v831 = vld [vmem:[%s6 + $0x5] sm:$0xf]
    %v832 = vld [vmem:[%s6 + $0x9] sm:$0xf]
    %v833 = vrot.slane %v784, 4
    %v834 = vadd.f32 %v784, %v833
    %v835 = vrot.slane %v834, 2
    %v836 = vadd.f32 %v834, %v835
    %v837 = vrot.slane %v836, 1
    %v838 = vadd.f32 %v836, %v837
    %v839 = vrot.slane %v786, 4
    %v840 = vadd.f32 %v786, %v839
    %v841 = vrot.slane %v840, 2
    %v842 = vadd.f32 %v840, %v841
    %v843 = vrot.slane %v842, 1
    %v844 = vadd.f32 %v842, %v843
    %v845 = vrot.slane %v825, 4
    %v846 = vadd.f32 %v825, %v845
    %v847 = vrot.slane %v846, 2
    %v848 = vadd.f32 %v846, %v847
    %v849 = vrot.slane %v848, 1
    %v850 = vadd.f32 %v848, %v849
    %v851 = vrot.slane %v827, 4
    %v852 = vadd.f32 %v827, %v851
    %v853 = vrot.slane %v852, 2
    %v854 = vadd.f32 %v852, %v853
    %v855 = vrot.slane %v854, 1
    %v856 = vadd.f32 %v854, %v855
    %v857 = vmul.f32 %v838, 0.125
    %v858 = vmul.f32 %v844, 0.125
    %v859 = vmul.f32 %v850, 0.125
    %v860 = vmul.f32 %v856, 0.125
    %v861 = vmul.f32 %v784, %v784
    %v862 = vmul.f32 %v786, %v786
    %v863 = vmul.f32 %v825, %v825
    %v864 = vmul.f32 %v827, %v827
    %v865 = vrot.slane %v861, 4
    %v866 = vadd.f32 %v861, %v865
    %v867 = vrot.slane %v866, 2
    %v868 = vadd.f32 %v866, %v867
    %v869 = vrot.slane %v868, 1
    %v870 = vadd.f32 %v868, %v869
    %v871 = vrot.slane %v862, 4
    %v872 = vadd.f32 %v862, %v871
    %v873 = vrot.slane %v872, 2
    %v874 = vadd.f32 %v872, %v873
    %v875 = vrot.slane %v874, 1
    %v876 = vadd.f32 %v874, %v875
    %v877 = vrot.slane %v863, 4
    %v878 = vadd.f32 %v863, %v877
    %v879 = vrot.slane %v878, 2
    %v880 = vadd.f32 %v878, %v879
    %v881 = vrot.slane %v880, 1
    %v882 = vadd.f32 %v880, %v881
    %v883 = vrot.slane %v864, 4
    %v884 = vadd.f32 %v864, %v883
    %v885 = vrot.slane %v884, 2
    %v886 = vadd.f32 %v884, %v885
    %v887 = vrot.slane %v886, 1
    %v888 = vadd.f32 %v886, %v887
    %v889 = vmul.f32 %v870, 0.125
    %v890 = vmul.f32 %v876, 0.125
    %v891 = vmul.f32 %v882, 0.125
    %v892 = vmul.f32 %v888, 0.125
    %v893 = vmul.f32 %v857, %v857
    %v894 = vmul.f32 %v858, %v858
    %v895 = vmul.f32 %v859, %v859
    %v896 = vmul.f32 %v860, %v860
    %v897 = vsub.f32 %v889, %v893
    %v898 = vsub.f32 %v890, %v894
    %v899 = vsub.f32 %v891, %v895
    %v900 = vsub.f32 %v892, %v896
    %v901 = vmax.f32 %v897, 0.0
    %v902 = vmax.f32 %v898, 0.0
    %v903 = vmax.f32 %v899, 0.0
    %v904 = vmax.f32 %v900, 0.0
    %v905 = vadd.f32 %v901, 0.8
    %v906 = vadd.f32 %v902, 0.8
    %v907 = vadd.f32 %v903, 0.8
    %v908 = vadd.f32 %v904, 0.8
    %v909 = vrsqrt.pop %v905
    %v910 = vrsqrt.pop %v906
    %v911 = vrsqrt.pop %v907
    %v912 = vrsqrt.pop %v908
    %v917 = vcombine.low %v909, %v910
    %v918 = vcombine.low %v911, %v912
    %v920 = vunpack.c.l.s4 1966171168
    %v921 = vunpack.c.0.s8 %v920
    %v922 = vlaneseq
    %v923 = vshrl.u32 %v922, 7
    %v924 = vsub.s32 %v921, %v923
    %v925 = vrot.slane %v917, %v924
    %v927 = vunpack.c.l.s4 1966171168
    %v928 = vunpack.c.0.s8 %v927
    %v929 = vlaneseq
    %v930 = vshrl.u32 %v929, 7
    %v931 = vsub.s32 %v928, %v930
    %v932 = vrot.slane %v918, %v931
    %v933 = vcombine.low %v925, %v932
    %v935 = vunpack.c.l.s4 1966171168
    %v936 = vunpack.c.0.s8 %v935
    %v937 = vlaneseq
    %v938 = vshrl.u32 %v937, 7
    %v939 = vsub.s32 %v936, %v938
    %v940 = vrot.slane %v933, %v939
    %v942 = vmul.f32 %v831, %v940
    %v944 = vlaneseq
    %v945 = vshrl.u32 %v944, 7
    %v946 = vsub.s32 0, %v945
    %v947 = vrot.slane %v942, %v946
    %v948 = vlaneseq
    %v949 = vshrl.u32 %v948, 7
    %v950 = vsub.s32 1, %v949
    %v951 = vrot.slane %v942, %v950
    %v952 = vlaneseq
    %v953 = vshrl.u32 %v952, 7
    %v954 = vsub.s32 2, %v953
    %v955 = vrot.slane %v942, %v954
    %v956 = vlaneseq
    %v957 = vshrl.u32 %v956, 7
    %v958 = vsub.s32 3, %v957
    %v959 = vrot.slane %v942, %v958
    %v964 = vmul.f32 %v857, %v947
    %v965 = vmul.f32 %v858, %v951
    %v966 = vmul.f32 %v859, %v955
    %v967 = vmul.f32 %v860, %v959
    %v972 = vcombine.low %v964, %v965
    %v973 = vcombine.low %v966, %v967
    %v975 = vunpack.c.l.s4 1966171168
    %v976 = vunpack.c.0.s8 %v975
    %v977 = vlaneseq
    %v978 = vshrl.u32 %v977, 7
    %v979 = vsub.s32 %v976, %v978
    %v980 = vrot.slane %v972, %v979
    %v982 = vunpack.c.l.s4 1966171168
    %v983 = vunpack.c.0.s8 %v982
    %v984 = vlaneseq
    %v985 = vshrl.u32 %v984, 7
    %v986 = vsub.s32 %v983, %v985
    %v987 = vrot.slane %v973, %v986
    %v988 = vcombine.low %v980, %v987
    %v990 = vunpack.c.l.s4 1966171168
    %v991 = vunpack.c.0.s8 %v990
    %v992 = vlaneseq
    %v993 = vshrl.u32 %v992, 7
    %v994 = vsub.s32 %v991, %v993
    %v995 = vrot.slane %v988, %v994
    %v997 = vsub.f32 %v832, %v995
    %v998 = vmul.f32 %v784, %v947
    %v999 = vmul.f32 %v786, %v951
    %v1000 = vmul.f32 %v825, %v955
    %v1001 = vmul.f32 %v827, %v959
    %v1003 = vlaneseq
    %v1004 = vshrl.u32 %v1003, 7
    %v1005 = vsub.s32 0, %v1004
    %v1006 = vrot.slane %v997, %v1005
    %v1007 = vlaneseq
    %v1008 = vshrl.u32 %v1007, 7
    %v1009 = vsub.s32 1, %v1008
    %v1010 = vrot.slane %v997, %v1009
    %v1011 = vlaneseq
    %v1012 = vshrl.u32 %v1011, 7
    %v1013 = vsub.s32 2, %v1012
    %v1014 = vrot.slane %v997, %v1013
    %v1015 = vlaneseq
    %v1016 = vshrl.u32 %v1015, 7
    %v1017 = vsub.s32 3, %v1016
    %v1018 = vrot.slane %v997, %v1017
    %v1023 = vadd.f32 %v998, %v1006
    %v1024 = vadd.f32 %v999, %v1010
    %v1025 = vadd.f32 %v1000, %v1014
    %v1026 = vadd.f32 %v1001, %v1018
    %v1027 = vmul.f32 %v1023, 0.2
    %v1028 = vmul.f32 %v1024, 0.2
    %v1029 = vmul.f32 %v1025, 0.2
    %v1030 = vmul.f32 %v1026, 0.2
    %v1031 = vmax.f32 %v1023, %v1027
    %v1032 = vmax.f32 %v1024, %v1028
    %v1033 = vmax.f32 %v1025, %v1029
    %v1034 = vmax.f32 %v1026, %v1030
    %v1035 = vpack.c.bf16 %v1031, %v1031
    %v1036 = vpack.c.bf16 %v1032, %v1032
    %v1037 = vpack.c.bf16 %v1033, %v1033
    %v1038 = vpack.c.bf16 %v1034, %v1034
    %v1039 = vld [vmem:[#allocation2] sm:$0xff]
    %v1040 = vld [vmem:[#allocation2 + $0x8] sm:$0xff]
    %v1041 = vld [vmem:[#allocation2 + $0x10] sm:$0xff]
    %v1042 = vld [vmem:[#allocation2 + $0x18] sm:$0xff]
    %v1043 = vld [vmem:[#allocation2 + $0x20] sm:$0xff]
    %v1044 = vld [vmem:[#allocation2 + $0x28] sm:$0xff]
    %v1045 = vld [vmem:[#allocation2 + $0x30] sm:$0xff]
    %v1046 = vld [vmem:[#allocation2 + $0x38] sm:$0xff]
    %v1047 = vld [vmem:[#allocation2 + $0x40] sm:$0xff]
    %v1048 = vld [vmem:[#allocation2 + $0x48] sm:$0xff]
    %v1049 = vld [vmem:[#allocation2 + $0x50] sm:$0xff]
    %v1050 = vld [vmem:[#allocation2 + $0x58] sm:$0xff]
    %v1051 = vld [vmem:[#allocation2 + $0x60] sm:$0xff]
    %v1052 = vld [vmem:[#allocation2 + $0x68] sm:$0xff]
    %v1053 = vld [vmem:[#allocation2 + $0x70] sm:$0xff]
    %v1054 = vld [vmem:[#allocation2 + $0x78] sm:$0xff]
    %v1055 = vld [vmem:[#allocation2 + $0x80] sm:$0xff]
    %v1056 = vld [vmem:[#allocation2 + $0x88] sm:$0xff]
    %v1057 = vld [vmem:[#allocation2 + $0x90] sm:$0xff]
    %v1058 = vld [vmem:[#allocation2 + $0x98] sm:$0xff]
    %v1059 = vld [vmem:[#allocation2 + $0xa0] sm:$0xff]
    %v1060 = vld [vmem:[#allocation2 + $0xa8] sm:$0xff]
    %v1061 = vld [vmem:[#allocation2 + $0xb0] sm:$0xff]
    %v1062 = vld [vmem:[#allocation2 + $0xb8] sm:$0xff]
    %v1063 = vld [vmem:[#allocation2 + $0xc0] sm:$0xff]
    %v1064 = vld [vmem:[#allocation2 + $0xc8] sm:$0xff]
    %v1065 = vld [vmem:[#allocation2 + $0xd0] sm:$0xff]
    %v1066 = vld [vmem:[#allocation2 + $0xd8] sm:$0xff]
    %v1067 = vld [vmem:[#allocation2 + $0xe0] sm:$0xff]
    %v1068 = vld [vmem:[#allocation2 + $0xe8] sm:$0xff]
    %v1069 = vld [vmem:[#allocation2 + $0xf0] sm:$0xff]
    %v1070 = vld [vmem:[#allocation2 + $0xf8] sm:$0xff]
    %v1071 = vld [vmem:[#allocation2 + $0x100] sm:$0xff]
    %v1072 = vld [vmem:[#allocation2 + $0x108] sm:$0xff]
    %v1073 = vld [vmem:[#allocation2 + $0x110] sm:$0xff]
    %v1074 = vld [vmem:[#allocation2 + $0x118] sm:$0xff]
    %v1075 = vld [vmem:[#allocation2 + $0x120] sm:$0xff]
    %v1076 = vld [vmem:[#allocation2 + $0x128] sm:$0xff]
    %v1077 = vld [vmem:[#allocation2 + $0x130] sm:$0xff]
    %v1078 = vld [vmem:[#allocation2 + $0x138] sm:$0xff]
    %v1079 = vld [vmem:[#allocation2 + $0x140] sm:$0xff]
    %v1080 = vld [vmem:[#allocation2 + $0x148] sm:$0xff]
    %v1081 = vld [vmem:[#allocation2 + $0x150] sm:$0xff]
    %v1082 = vld [vmem:[#allocation2 + $0x158] sm:$0xff]
    %v1083 = vld [vmem:[#allocation2 + $0x160] sm:$0xff]
    %v1084 = vld [vmem:[#allocation2 + $0x168] sm:$0xff]
    %v1085 = vld [vmem:[#allocation2 + $0x170] sm:$0xff]
    %v1086 = vld [vmem:[#allocation2 + $0x178] sm:$0xff]
    %v1087 = vld [vmem:[#allocation2 + $0x180] sm:$0xff]
    %v1088 = vld [vmem:[#allocation2 + $0x188] sm:$0xff]
    %v1089 = vld [vmem:[#allocation2 + $0x190] sm:$0xff]
    %v1090 = vld [vmem:[#allocation2 + $0x198] sm:$0xff]
    %v1091 = vld [vmem:[#allocation2 + $0x1a0] sm:$0xff]
    %v1092 = vld [vmem:[#allocation2 + $0x1a8] sm:$0xff]
    %v1093 = vld [vmem:[#allocation2 + $0x1b0] sm:$0xff]
    %v1094 = vld [vmem:[#allocation2 + $0x1b8] sm:$0xff]
    %v1095 = vld [vmem:[#allocation2 + $0x1c0] sm:$0xff]
    %v1096 = vld [vmem:[#allocation2 + $0x1c8] sm:$0xff]
    %v1097 = vld [vmem:[#allocation2 + $0x1d0] sm:$0xff]
    %v1098 = vld [vmem:[#allocation2 + $0x1d8] sm:$0xff]
    %v1099 = vld [vmem:[#allocation2 + $0x1e0] sm:$0xff]
    %v1100 = vld [vmem:[#allocation2 + $0x1e8] sm:$0xff]
    %v1101 = vld [vmem:[#allocation2 + $0x1f0] sm:$0xff]
    %v1102 = vld [vmem:[#allocation2 + $0x1f8] sm:$0xff]
    %v1103 = vld [vmem:[#allocation2 + $0x200] sm:$0xff]
    %v1104 = vld [vmem:[#allocation2 + $0x208] sm:$0xff]
    %v1105 = vld [vmem:[#allocation2 + $0x210] sm:$0xff]
    %v1106 = vld [vmem:[#allocation2 + $0x218] sm:$0xff]
    %v1107 = vld [vmem:[#allocation2 + $0x220] sm:$0xff]
    %v1108 = vld [vmem:[#allocation2 + $0x228] sm:$0xff]
    %v1109 = vld [vmem:[#allocation2 + $0x230] sm:$0xff]
    %v1110 = vld [vmem:[#allocation2 + $0x238] sm:$0xff]
    %v1111 = vld [vmem:[#allocation2 + $0x240] sm:$0xff]
    %v1112 = vld [vmem:[#allocation2 + $0x248] sm:$0xff]
    %v1113 = vld [vmem:[#allocation2 + $0x250] sm:$0xff]
    %v1114 = vld [vmem:[#allocation2 + $0x258] sm:$0xff]
    %v1115 = vld [vmem:[#allocation2 + $0x260] sm:$0xff]
    %v1116 = vld [vmem:[#allocation2 + $0x268] sm:$0xff]
    %v1117 = vld [vmem:[#allocation2 + $0x270] sm:$0xff]
    %v1118 = vld [vmem:[#allocation2 + $0x278] sm:$0xff]
    %v1119 = vld [vmem:[#allocation2 + $0x280] sm:$0xff]
    %v1120 = vld [vmem:[#allocation2 + $0x288] sm:$0xff]
    %v1121 = vld [vmem:[#allocation2 + $0x290] sm:$0xff]
    %v1122 = vld [vmem:[#allocation2 + $0x298] sm:$0xff]
    %v1123 = vld [vmem:[#allocation2 + $0x2a0] sm:$0xff]
    %v1124 = vld [vmem:[#allocation2 + $0x2a8] sm:$0xff]
    %v1125 = vld [vmem:[#allocation2 + $0x2b0] sm:$0xff]
    %v1126 = vld [vmem:[#allocation2 + $0x2b8] sm:$0xff]
    %v1127 = vld [vmem:[#allocation2 + $0x2c0] sm:$0xff]
    %v1128 = vld [vmem:[#allocation2 + $0x2c8] sm:$0xff]
    %v1129 = vld [vmem:[#allocation2 + $0x2d0] sm:$0xff]
    %v1130 = vld [vmem:[#allocation2 + $0x2d8] sm:$0xff]
    %v1131 = vld [vmem:[#allocation2 + $0x2e0] sm:$0xff]
    %v1132 = vld [vmem:[#allocation2 + $0x2e8] sm:$0xff]
    %v1133 = vld [vmem:[#allocation2 + $0x2f0] sm:$0xff]
    %v1134 = vld [vmem:[#allocation2 + $0x2f8] sm:$0xff]
    %v1135 = vld [vmem:[#allocation2 + $0x300] sm:$0xff]
    %v1136 = vld [vmem:[#allocation2 + $0x308] sm:$0xff]
    %v1137 = vld [vmem:[#allocation2 + $0x310] sm:$0xff]
    %v1138 = vld [vmem:[#allocation2 + $0x318] sm:$0xff]
    %v1139 = vld [vmem:[#allocation2 + $0x320] sm:$0xff]
    %v1140 = vld [vmem:[#allocation2 + $0x328] sm:$0xff]
    %v1141 = vld [vmem:[#allocation2 + $0x330] sm:$0xff]
    %v1142 = vld [vmem:[#allocation2 + $0x338] sm:$0xff]
    %v1143 = vld [vmem:[#allocation2 + $0x340] sm:$0xff]
    %v1144 = vld [vmem:[#allocation2 + $0x348] sm:$0xff]
    %v1145 = vld [vmem:[#allocation2 + $0x350] sm:$0xff]
    %v1146 = vld [vmem:[#allocation2 + $0x358] sm:$0xff]
    %v1147 = vld [vmem:[#allocation2 + $0x360] sm:$0xff]
    %v1148 = vld [vmem:[#allocation2 + $0x368] sm:$0xff]
    %v1149 = vld [vmem:[#allocation2 + $0x370] sm:$0xff]
    %v1150 = vld [vmem:[#allocation2 + $0x378] sm:$0xff]
    %v1151 = vld [vmem:[#allocation2 + $0x380] sm:$0xff]
    %v1152 = vld [vmem:[#allocation2 + $0x388] sm:$0xff]
    %v1153 = vld [vmem:[#allocation2 + $0x390] sm:$0xff]
    %v1154 = vld [vmem:[#allocation2 + $0x398] sm:$0xff]
    %v1155 = vld [vmem:[#allocation2 + $0x3a0] sm:$0xff]
    %v1156 = vld [vmem:[#allocation2 + $0x3a8] sm:$0xff]
    %v1157 = vld [vmem:[#allocation2 + $0x3b0] sm:$0xff]
    %v1158 = vld [vmem:[#allocation2 + $0x3b8] sm:$0xff]
    %v1159 = vld [vmem:[#allocation2 + $0x3c0] sm:$0xff]
    %v1160 = vld [vmem:[#allocation2 + $0x3c8] sm:$0xff]
    %v1161 = vld [vmem:[#allocation2 + $0x3d0] sm:$0xff]
    %v1162 = vld [vmem:[#allocation2 + $0x3d8] sm:$0xff]
    %v1163 = vld [vmem:[#allocation2 + $0x3e0] sm:$0xff]
    %v1164 = vld [vmem:[#allocation2 + $0x3e8] sm:$0xff]
    %v1165 = vld [vmem:[#allocation2 + $0x3f0] sm:$0xff]
    %v1166 = vld [vmem:[#allocation2 + $0x3f8] sm:$0xff]
    %v1167 = vld [vmem:[#allocation2 + $0x400] sm:$0xff]
    %v1168 = vld [vmem:[#allocation2 + $0x408] sm:$0xff]
    %v1169 = vld [vmem:[#allocation2 + $0x410] sm:$0xff]
    %v1170 = vld [vmem:[#allocation2 + $0x418] sm:$0xff]
    %v1171 = vld [vmem:[#allocation2 + $0x420] sm:$0xff]
    %v1172 = vld [vmem:[#allocation2 + $0x428] sm:$0xff]
    %v1173 = vld [vmem:[#allocation2 + $0x430] sm:$0xff]
    %v1174 = vld [vmem:[#allocation2 + $0x438] sm:$0xff]
    %v1175 = vld [vmem:[#allocation2 + $0x440] sm:$0xff]
    %v1176 = vld [vmem:[#allocation2 + $0x448] sm:$0xff]
    %v1177 = vld [vmem:[#allocation2 + $0x450] sm:$0xff]
    %v1178 = vld [vmem:[#allocation2 + $0x458] sm:$0xff]
    %v1179 = vld [vmem:[#allocation2 + $0x460] sm:$0xff]
    %v1180 = vld [vmem:[#allocation2 + $0x468] sm:$0xff]
    %v1181 = vld [vmem:[#allocation2 + $0x470] sm:$0xff]
    %v1182 = vld [vmem:[#allocation2 + $0x478] sm:$0xff]
    %v1183 = vld [vmem:[#allocation2 + $0x480] sm:$0xff]
    %v1184 = vld [vmem:[#allocation2 + $0x488] sm:$0xff]
    %v1185 = vld [vmem:[#allocation2 + $0x490] sm:$0xff]
    %v1186 = vld [vmem:[#allocation2 + $0x498] sm:$0xff]
    %v1187 = vld [vmem:[#allocation2 + $0x4a0] sm:$0xff]
    %v1188 = vld [vmem:[#allocation2 + $0x4a8] sm:$0xff]
    %v1189 = vld [vmem:[#allocation2 + $0x4b0] sm:$0xff]
    %v1190 = vld [vmem:[#allocation2 + $0x4b8] sm:$0xff]
    %v1191 = vld [vmem:[#allocation2 + $0x4c0] sm:$0xff]
    %v1192 = vld [vmem:[#allocation2 + $0x4c8] sm:$0xff]
    %v1193 = vld [vmem:[#allocation2 + $0x4d0] sm:$0xff]
    %v1194 = vld [vmem:[#allocation2 + $0x4d8] sm:$0xff]
    %v1195 = vld [vmem:[#allocation2 + $0x4e0] sm:$0xff]
    %v1196 = vld [vmem:[#allocation2 + $0x4e8] sm:$0xff]
    %v1197 = vld [vmem:[#allocation2 + $0x4f0] sm:$0xff]
    %v1198 = vld [vmem:[#allocation2 + $0x4f8] sm:$0xff]
    %v1199 = vld [vmem:[#allocation2 + $0x500] sm:$0xff]
    %v1200 = vld [vmem:[#allocation2 + $0x508] sm:$0xff]
    %v1201 = vld [vmem:[#allocation2 + $0x510] sm:$0xff]
    %v1202 = vld [vmem:[#allocation2 + $0x518] sm:$0xff]
    %v1203 = vld [vmem:[#allocation2 + $0x520] sm:$0xff]
    %v1204 = vld [vmem:[#allocation2 + $0x528] sm:$0xff]
    %v1205 = vld [vmem:[#allocation2 + $0x530] sm:$0xff]
    %v1206 = vld [vmem:[#allocation2 + $0x538] sm:$0xff]
    %v1207 = vld [vmem:[#allocation2 + $0x540] sm:$0xff]
    %v1208 = vld [vmem:[#allocation2 + $0x548] sm:$0xff]
    %v1209 = vld [vmem:[#allocation2 + $0x550] sm:$0xff]
    %v1210 = vld [vmem:[#allocation2 + $0x558] sm:$0xff]
    %v1211 = vld [vmem:[#allocation2 + $0x560] sm:$0xff]
    %v1212 = vld [vmem:[#allocation2 + $0x568] sm:$0xff]
    %v1213 = vld [vmem:[#allocation2 + $0x570] sm:$0xff]
    %v1214 = vld [vmem:[#allocation2 + $0x578] sm:$0xff]
    %v1215 = vld [vmem:[#allocation2 + $0x580] sm:$0xff]
    %v1216 = vld [vmem:[#allocation2 + $0x588] sm:$0xff]
    %v1217 = vld [vmem:[#allocation2 + $0x590] sm:$0xff]
    %v1218 = vld [vmem:[#allocation2 + $0x598] sm:$0xff]
    %v1219 = vld [vmem:[#allocation2 + $0x5a0] sm:$0xff]
    %v1220 = vld [vmem:[#allocation2 + $0x5a8] sm:$0xff]
    %v1221 = vld [vmem:[#allocation2 + $0x5b0] sm:$0xff]
    %v1222 = vld [vmem:[#allocation2 + $0x5b8] sm:$0xff]
    %v1223 = vld [vmem:[#allocation2 + $0x5c0] sm:$0xff]
    %v1224 = vld [vmem:[#allocation2 + $0x5c8] sm:$0xff]
    %v1225 = vld [vmem:[#allocation2 + $0x5d0] sm:$0xff]
    %v1226 = vld [vmem:[#allocation2 + $0x5d8] sm:$0xff]
    %v1227 = vld [vmem:[#allocation2 + $0x5e0] sm:$0xff]
    %v1228 = vld [vmem:[#allocation2 + $0x5e8] sm:$0xff]
    %v1229 = vld [vmem:[#allocation2 + $0x5f0] sm:$0xff]
    %v1230 = vld [vmem:[#allocation2 + $0x5f8] sm:$0xff]
    %v1231 = vld [vmem:[#allocation2 + $0x600] sm:$0xff]
    %v1232 = vld [vmem:[#allocation2 + $0x608] sm:$0xff]
    %v1233 = vld [vmem:[#allocation2 + $0x610] sm:$0xff]
    %v1234 = vld [vmem:[#allocation2 + $0x618] sm:$0xff]
    %v1235 = vld [vmem:[#allocation2 + $0x620] sm:$0xff]
    %v1236 = vld [vmem:[#allocation2 + $0x628] sm:$0xff]
    %v1237 = vld [vmem:[#allocation2 + $0x630] sm:$0xff]
    %v1238 = vld [vmem:[#allocation2 + $0x638] sm:$0xff]
    %v1239 = vld [vmem:[#allocation2 + $0x640] sm:$0xff]
    %v1240 = vld [vmem:[#allocation2 + $0x648] sm:$0xff]
    %v1241 = vld [vmem:[#allocation2 + $0x650] sm:$0xff]
    %v1242 = vld [vmem:[#allocation2 + $0x658] sm:$0xff]
    %v1243 = vld [vmem:[#allocation2 + $0x660] sm:$0xff]
    %v1244 = vld [vmem:[#allocation2 + $0x668] sm:$0xff]
    %v1245 = vld [vmem:[#allocation2 + $0x670] sm:$0xff]
    %v1246 = vld [vmem:[#allocation2 + $0x678] sm:$0xff]
    %v1247 = vld [vmem:[#allocation2 + $0x680] sm:$0xff]
    %v1248 = vld [vmem:[#allocation2 + $0x688] sm:$0xff]
    %v1249 = vld [vmem:[#allocation2 + $0x690] sm:$0xff]
    %v1250 = vld [vmem:[#allocation2 + $0x698] sm:$0xff]
    %v1251 = vld [vmem:[#allocation2 + $0x6a0] sm:$0xff]
    %v1252 = vld [vmem:[#allocation2 + $0x6a8] sm:$0xff]
    %v1253 = vld [vmem:[#allocation2 + $0x6b0] sm:$0xff]
    %v1254 = vld [vmem:[#allocation2 + $0x6b8] sm:$0xff]
    %v1255 = vld [vmem:[#allocation2 + $0x6c0] sm:$0xff]
    %v1256 = vld [vmem:[#allocation2 + $0x6c8] sm:$0xff]
    %v1257 = vld [vmem:[#allocation2 + $0x6d0] sm:$0xff]
    %v1258 = vld [vmem:[#allocation2 + $0x6d8] sm:$0xff]
    %v1259 = vld [vmem:[#allocation2 + $0x6e0] sm:$0xff]
    %v1260 = vld [vmem:[#allocation2 + $0x6e8] sm:$0xff]
    %v1261 = vld [vmem:[#allocation2 + $0x6f0] sm:$0xff]
    %v1262 = vld [vmem:[#allocation2 + $0x6f8] sm:$0xff]
    %v1263 = vld [vmem:[#allocation2 + $0x700] sm:$0xff]
    %v1264 = vld [vmem:[#allocation2 + $0x708] sm:$0xff]
    %v1265 = vld [vmem:[#allocation2 + $0x710] sm:$0xff]
    %v1266 = vld [vmem:[#allocation2 + $0x718] sm:$0xff]
    %v1267 = vld [vmem:[#allocation2 + $0x720] sm:$0xff]
    %v1268 = vld [vmem:[#allocation2 + $0x728] sm:$0xff]
    %v1269 = vld [vmem:[#allocation2 + $0x730] sm:$0xff]
    %v1270 = vld [vmem:[#allocation2 + $0x738] sm:$0xff]
    %v1271 = vld [vmem:[#allocation2 + $0x740] sm:$0xff]
    %v1272 = vld [vmem:[#allocation2 + $0x748] sm:$0xff]
    %v1273 = vld [vmem:[#allocation2 + $0x750] sm:$0xff]
    %v1274 = vld [vmem:[#allocation2 + $0x758] sm:$0xff]
    %v1275 = vld [vmem:[#allocation2 + $0x760] sm:$0xff]
    %v1276 = vld [vmem:[#allocation2 + $0x768] sm:$0xff]
    %v1277 = vld [vmem:[#allocation2 + $0x770] sm:$0xff]
    %v1278 = vld [vmem:[#allocation2 + $0x778] sm:$0xff]
    %v1279 = vld [vmem:[#allocation2 + $0x780] sm:$0xff]
    %v1280 = vld [vmem:[#allocation2 + $0x788] sm:$0xff]
    %v1281 = vld [vmem:[#allocation2 + $0x790] sm:$0xff]
    %v1282 = vld [vmem:[#allocation2 + $0x798] sm:$0xff]
    %v1283 = vld [vmem:[#allocation2 + $0x7a0] sm:$0xff]
    %v1284 = vld [vmem:[#allocation2 + $0x7a8] sm:$0xff]
    %v1285 = vld [vmem:[#allocation2 + $0x7b0] sm:$0xff]
    %v1286 = vld [vmem:[#allocation2 + $0x7b8] sm:$0xff]
    %v1287 = vld [vmem:[#allocation2 + $0x7c0] sm:$0xff]
    %v1288 = vld [vmem:[#allocation2 + $0x7c8] sm:$0xff]
    %v1289 = vld [vmem:[#allocation2 + $0x7d0] sm:$0xff]
    %v1290 = vld [vmem:[#allocation2 + $0x7d8] sm:$0xff]
    %v1291 = vld [vmem:[#allocation2 + $0x7e0] sm:$0xff]
    %v1292 = vld [vmem:[#allocation2 + $0x7e8] sm:$0xff]
    %v1293 = vld [vmem:[#allocation2 + $0x7f0] sm:$0xff]
    %v1294 = vld [vmem:[#allocation2 + $0x7f8] sm:$0xff]
    %v1551 = vunpack.c.l.b16 %v1039
    %v1552 = vunpack.c.h.b16 %v1039
    %v1553 = vunpack.c.l.b16 %v1040
    %v1554 = vunpack.c.h.b16 %v1040
    %v1555 = vunpack.c.l.b16 %v1041
    %v1556 = vunpack.c.h.b16 %v1041
    %v1557 = vunpack.c.l.b16 %v1042
    %v1558 = vunpack.c.h.b16 %v1042
    %v1559 = vunpack.c.l.b16 %v1043
    %v1560 = vunpack.c.h.b16 %v1043
    %v1561 = vunpack.c.l.b16 %v1044
    %v1562 = vunpack.c.h.b16 %v1044
    %v1563 = vunpack.c.l.b16 %v1045
    %v1564 = vunpack.c.h.b16 %v1045
    %v1565 = vunpack.c.l.b16 %v1046
    %v1566 = vunpack.c.h.b16 %v1046
    %v1567 = vunpack.c.l.b16 %v1047
    %v1568 = vunpack.c.h.b16 %v1047
    %v1569 = vunpack.c.l.b16 %v1048
    %v1570 = vunpack.c.h.b16 %v1048
    %v1571 = vunpack.c.l.b16 %v1049
    %v1572 = vunpack.c.h.b16 %v1049
    %v1573 = vunpack.c.l.b16 %v1050
    %v1574 = vunpack.c.h.b16 %v1050
    %v1575 = vunpack.c.l.b16 %v1051
    %v1576 = vunpack.c.h.b16 %v1051
    %v1577 = vunpack.c.l.b16 %v1052
    %v1578 = vunpack.c.h.b16 %v1052
    %v1579 = vunpack.c.l.b16 %v1053
    %v1580 = vunpack.c.h.b16 %v1053
    %v1581 = vunpack.c.l.b16 %v1054
    %v1582 = vunpack.c.h.b16 %v1054
    %v1583 = vunpack.c.l.b16 %v1055
    %v1584 = vunpack.c.h.b16 %v1055
    %v1585 = vunpack.c.l.b16 %v1056
    %v1586 = vunpack.c.h.b16 %v1056
    %v1587 = vunpack.c.l.b16 %v1057
    %v1588 = vunpack.c.h.b16 %v1057
    %v1589 = vunpack.c.l.b16 %v1058
    %v1590 = vunpack.c.h.b16 %v1058
    %v1591 = vunpack.c.l.b16 %v1059
    %v1592 = vunpack.c.h.b16 %v1059
    %v1593 = vunpack.c.l.b16 %v1060
    %v1594 = vunpack.c.h.b16 %v1060
    %v1595 = vunpack.c.l.b16 %v1061
    %v1596 = vunpack.c.h.b16 %v1061
    %v1597 = vunpack.c.l.b16 %v1062
    %v1598 = vunpack.c.h.b16 %v1062
    %v1599 = vunpack.c.l.b16 %v1063
    %v1600 = vunpack.c.h.b16 %v1063
    %v1601 = vunpack.c.l.b16 %v1064
    %v1602 = vunpack.c.h.b16 %v1064
    %v1603 = vunpack.c.l.b16 %v1065
    %v1604 = vunpack.c.h.b16 %v1065
    %v1605 = vunpack.c.l.b16 %v1066
    %v1606 = vunpack.c.h.b16 %v1066
    %v1607 = vunpack.c.l.b16 %v1067
    %v1608 = vunpack.c.h.b16 %v1067
    %v1609 = vunpack.c.l.b16 %v1068
    %v1610 = vunpack.c.h.b16 %v1068
    %v1611 = vunpack.c.l.b16 %v1069
    %v1612 = vunpack.c.h.b16 %v1069
    %v1613 = vunpack.c.l.b16 %v1070
    %v1614 = vunpack.c.h.b16 %v1070
    %v1615 = vunpack.c.l.b16 %v1071
    %v1616 = vunpack.c.h.b16 %v1071
    %v1617 = vunpack.c.l.b16 %v1072
    %v1618 = vunpack.c.h.b16 %v1072
    %v1619 = vunpack.c.l.b16 %v1073
    %v1620 = vunpack.c.h.b16 %v1073
    %v1621 = vunpack.c.l.b16 %v1074
    %v1622 = vunpack.c.h.b16 %v1074
    %v1623 = vunpack.c.l.b16 %v1075
    %v1624 = vunpack.c.h.b16 %v1075
    %v1625 = vunpack.c.l.b16 %v1076
    %v1626 = vunpack.c.h.b16 %v1076
    %v1627 = vunpack.c.l.b16 %v1077
    %v1628 = vunpack.c.h.b16 %v1077
    %v1629 = vunpack.c.l.b16 %v1078
    %v1630 = vunpack.c.h.b16 %v1078
    %v1631 = vunpack.c.l.b16 %v1079
    %v1632 = vunpack.c.h.b16 %v1079
    %v1633 = vunpack.c.l.b16 %v1080
    %v1634 = vunpack.c.h.b16 %v1080
    %v1635 = vunpack.c.l.b16 %v1081
    %v1636 = vunpack.c.h.b16 %v1081
    %v1637 = vunpack.c.l.b16 %v1082
    %v1638 = vunpack.c.h.b16 %v1082
    %v1639 = vunpack.c.l.b16 %v1083
    %v1640 = vunpack.c.h.b16 %v1083
    %v1641 = vunpack.c.l.b16 %v1084
    %v1642 = vunpack.c.h.b16 %v1084
    %v1643 = vunpack.c.l.b16 %v1085
    %v1644 = vunpack.c.h.b16 %v1085
    %v1645 = vunpack.c.l.b16 %v1086
    %v1646 = vunpack.c.h.b16 %v1086
    %v1647 = vunpack.c.l.b16 %v1087
    %v1648 = vunpack.c.h.b16 %v1087
    %v1649 = vunpack.c.l.b16 %v1088
    %v1650 = vunpack.c.h.b16 %v1088
    %v1651 = vunpack.c.l.b16 %v1089
    %v1652 = vunpack.c.h.b16 %v1089
    %v1653 = vunpack.c.l.b16 %v1090
    %v1654 = vunpack.c.h.b16 %v1090
    %v1655 = vunpack.c.l.b16 %v1091
    %v1656 = vunpack.c.h.b16 %v1091
    %v1657 = vunpack.c.l.b16 %v1092
    %v1658 = vunpack.c.h.b16 %v1092
    %v1659 = vunpack.c.l.b16 %v1093
    %v1660 = vunpack.c.h.b16 %v1093
    %v1661 = vunpack.c.l.b16 %v1094
    %v1662 = vunpack.c.h.b16 %v1094
    %v1663 = vunpack.c.l.b16 %v1095
    %v1664 = vunpack.c.h.b16 %v1095
    %v1665 = vunpack.c.l.b16 %v1096
    %v1666 = vunpack.c.h.b16 %v1096
    %v1667 = vunpack.c.l.b16 %v1097
    %v1668 = vunpack.c.h.b16 %v1097
    %v1669 = vunpack.c.l.b16 %v1098
    %v1670 = vunpack.c.h.b16 %v1098
    %v1671 = vunpack.c.l.b16 %v1099
    %v1672 = vunpack.c.h.b16 %v1099
    %v1673 = vunpack.c.l.b16 %v1100
    %v1674 = vunpack.c.h.b16 %v1100
    %v1675 = vunpack.c.l.b16 %v1101
    %v1676 = vunpack.c.h.b16 %v1101
    %v1677 = vunpack.c.l.b16 %v1102
    %v1678 = vunpack.c.h.b16 %v1102
    %v1679 = vunpack.c.l.b16 %v1103
    %v1680 = vunpack.c.h.b16 %v1103
    %v1681 = vunpack.c.l.b16 %v1104
    %v1682 = vunpack.c.h.b16 %v1104
    %v1683 = vunpack.c.l.b16 %v1105
    %v1684 = vunpack.c.h.b16 %v1105
    %v1685 = vunpack.c.l.b16 %v1106
    %v1686 = vunpack.c.h.b16 %v1106
    %v1687 = vunpack.c.l.b16 %v1107
    %v1688 = vunpack.c.h.b16 %v1107
    %v1689 = vunpack.c.l.b16 %v1108
    %v1690 = vunpack.c.h.b16 %v1108
    %v1691 = vunpack.c.l.b16 %v1109
    %v1692 = vunpack.c.h.b16 %v1109
    %v1693 = vunpack.c.l.b16 %v1110
    %v1694 = vunpack.c.h.b16 %v1110
    %v1695 = vunpack.c.l.b16 %v1111
    %v1696 = vunpack.c.h.b16 %v1111
    %v1697 = vunpack.c.l.b16 %v1112
    %v1698 = vunpack.c.h.b16 %v1112
    %v1699 = vunpack.c.l.b16 %v1113
    %v1700 = vunpack.c.h.b16 %v1113
    %v1701 = vunpack.c.l.b16 %v1114
    %v1702 = vunpack.c.h.b16 %v1114
    %v1703 = vunpack.c.l.b16 %v1115
    %v1704 = vunpack.c.h.b16 %v1115
    %v1705 = vunpack.c.l.b16 %v1116
    %v1706 = vunpack.c.h.b16 %v1116
    %v1707 = vunpack.c.l.b16 %v1117
    %v1708 = vunpack.c.h.b16 %v1117
    %v1709 = vunpack.c.l.b16 %v1118
    %v1710 = vunpack.c.h.b16 %v1118
    %v1711 = vunpack.c.l.b16 %v1119
    %v1712 = vunpack.c.h.b16 %v1119
    %v1713 = vunpack.c.l.b16 %v1120
    %v1714 = vunpack.c.h.b16 %v1120
    %v1715 = vunpack.c.l.b16 %v1121
    %v1716 = vunpack.c.h.b16 %v1121
    %v1717 = vunpack.c.l.b16 %v1122
    %v1718 = vunpack.c.h.b16 %v1122
    %v1719 = vunpack.c.l.b16 %v1123
    %v1720 = vunpack.c.h.b16 %v1123
    %v1721 = vunpack.c.l.b16 %v1124
    %v1722 = vunpack.c.h.b16 %v1124
    %v1723 = vunpack.c.l.b16 %v1125
    %v1724 = vunpack.c.h.b16 %v1125
    %v1725 = vunpack.c.l.b16 %v1126
    %v1726 = vunpack.c.h.b16 %v1126
    %v1727 = vunpack.c.l.b16 %v1127
    %v1728 = vunpack.c.h.b16 %v1127
    %v1729 = vunpack.c.l.b16 %v1128
    %v1730 = vunpack.c.h.b16 %v1128
    %v1731 = vunpack.c.l.b16 %v1129
    %v1732 = vunpack.c.h.b16 %v1129
    %v1733 = vunpack.c.l.b16 %v1130
    %v1734 = vunpack.c.h.b16 %v1130
    %v1735 = vunpack.c.l.b16 %v1131
    %v1736 = vunpack.c.h.b16 %v1131
    %v1737 = vunpack.c.l.b16 %v1132
    %v1738 = vunpack.c.h.b16 %v1132
    %v1739 = vunpack.c.l.b16 %v1133
    %v1740 = vunpack.c.h.b16 %v1133
    %v1741 = vunpack.c.l.b16 %v1134
    %v1742 = vunpack.c.h.b16 %v1134
    %v1743 = vunpack.c.l.b16 %v1135
    %v1744 = vunpack.c.h.b16 %v1135
    %v1745 = vunpack.c.l.b16 %v1136
    %v1746 = vunpack.c.h.b16 %v1136
    %v1747 = vunpack.c.l.b16 %v1137
    %v1748 = vunpack.c.h.b16 %v1137
    %v1749 = vunpack.c.l.b16 %v1138
    %v1750 = vunpack.c.h.b16 %v1138
    %v1751 = vunpack.c.l.b16 %v1139
    %v1752 = vunpack.c.h.b16 %v1139
    %v1753 = vunpack.c.l.b16 %v1140
    %v1754 = vunpack.c.h.b16 %v1140
    %v1755 = vunpack.c.l.b16 %v1141
    %v1756 = vunpack.c.h.b16 %v1141
    %v1757 = vunpack.c.l.b16 %v1142
    %v1758 = vunpack.c.h.b16 %v1142
    %v1759 = vunpack.c.l.b16 %v1143
    %v1760 = vunpack.c.h.b16 %v1143
    %v1761 = vunpack.c.l.b16 %v1144
    %v1762 = vunpack.c.h.b16 %v1144
    %v1763 = vunpack.c.l.b16 %v1145
    %v1764 = vunpack.c.h.b16 %v1145
    %v1765 = vunpack.c.l.b16 %v1146
    %v1766 = vunpack.c.h.b16 %v1146
    %v1767 = vunpack.c.l.b16 %v1147
    %v1768 = vunpack.c.h.b16 %v1147
    %v1769 = vunpack.c.l.b16 %v1148
    %v1770 = vunpack.c.h.b16 %v1148
    %v1771 = vunpack.c.l.b16 %v1149
    %v1772 = vunpack.c.h.b16 %v1149
    %v1773 = vunpack.c.l.b16 %v1150
    %v1774 = vunpack.c.h.b16 %v1150
    %v1775 = vunpack.c.l.b16 %v1151
    %v1776 = vunpack.c.h.b16 %v1151
    %v1777 = vunpack.c.l.b16 %v1152
    %v1778 = vunpack.c.h.b16 %v1152
    %v1779 = vunpack.c.l.b16 %v1153
    %v1780 = vunpack.c.h.b16 %v1153
    %v1781 = vunpack.c.l.b16 %v1154
    %v1782 = vunpack.c.h.b16 %v1154
    %v1783 = vunpack.c.l.b16 %v1155
    %v1784 = vunpack.c.h.b16 %v1155
    %v1785 = vunpack.c.l.b16 %v1156
    %v1786 = vunpack.c.h.b16 %v1156
    %v1787 = vunpack.c.l.b16 %v1157
    %v1788 = vunpack.c.h.b16 %v1157
    %v1789 = vunpack.c.l.b16 %v1158
    %v1790 = vunpack.c.h.b16 %v1158
    %v1791 = vunpack.c.l.b16 %v1159
    %v1792 = vunpack.c.h.b16 %v1159
    %v1793 = vunpack.c.l.b16 %v1160
    %v1794 = vunpack.c.h.b16 %v1160
    %v1795 = vunpack.c.l.b16 %v1161
    %v1796 = vunpack.c.h.b16 %v1161
    %v1797 = vunpack.c.l.b16 %v1162
    %v1798 = vunpack.c.h.b16 %v1162
    %v1799 = vunpack.c.l.b16 %v1163
    %v1800 = vunpack.c.h.b16 %v1163
    %v1801 = vunpack.c.l.b16 %v1164
    %v1802 = vunpack.c.h.b16 %v1164
    %v1803 = vunpack.c.l.b16 %v1165
    %v1804 = vunpack.c.h.b16 %v1165
    %v1805 = vunpack.c.l.b16 %v1166
    %v1806 = vunpack.c.h.b16 %v1166
    %v1807 = vunpack.c.l.b16 %v1167
    %v1808 = vunpack.c.h.b16 %v1167
    %v1809 = vunpack.c.l.b16 %v1168
    %v1810 = vunpack.c.h.b16 %v1168
    %v1811 = vunpack.c.l.b16 %v1169
    %v1812 = vunpack.c.h.b16 %v1169
    %v1813 = vunpack.c.l.b16 %v1170
    %v1814 = vunpack.c.h.b16 %v1170
    %v1815 = vunpack.c.l.b16 %v1171
    %v1816 = vunpack.c.h.b16 %v1171
    %v1817 = vunpack.c.l.b16 %v1172
    %v1818 = vunpack.c.h.b16 %v1172
    %v1819 = vunpack.c.l.b16 %v1173
    %v1820 = vunpack.c.h.b16 %v1173
    %v1821 = vunpack.c.l.b16 %v1174
    %v1822 = vunpack.c.h.b16 %v1174
    %v1823 = vunpack.c.l.b16 %v1175
    %v1824 = vunpack.c.h.b16 %v1175
    %v1825 = vunpack.c.l.b16 %v1176
    %v1826 = vunpack.c.h.b16 %v1176
    %v1827 = vunpack.c.l.b16 %v1177
    %v1828 = vunpack.c.h.b16 %v1177
    %v1829 = vunpack.c.l.b16 %v1178
    %v1830 = vunpack.c.h.b16 %v1178
    %v1831 = vunpack.c.l.b16 %v1179
    %v1832 = vunpack.c.h.b16 %v1179
    %v1833 = vunpack.c.l.b16 %v1180
    %v1834 = vunpack.c.h.b16 %v1180
    %v1835 = vunpack.c.l.b16 %v1181
    %v1836 = vunpack.c.h.b16 %v1181
    %v1837 = vunpack.c.l.b16 %v1182
    %v1838 = vunpack.c.h.b16 %v1182
    %v1839 = vunpack.c.l.b16 %v1183
    %v1840 = vunpack.c.h.b16 %v1183
    %v1841 = vunpack.c.l.b16 %v1184
    %v1842 = vunpack.c.h.b16 %v1184
    %v1843 = vunpack.c.l.b16 %v1185
    %v1844 = vunpack.c.h.b16 %v1185
    %v1845 = vunpack.c.l.b16 %v1186
    %v1846 = vunpack.c.h.b16 %v1186
    %v1847 = vunpack.c.l.b16 %v1187
    %v1848 = vunpack.c.h.b16 %v1187
    %v1849 = vunpack.c.l.b16 %v1188
    %v1850 = vunpack.c.h.b16 %v1188
    %v1851 = vunpack.c.l.b16 %v1189
    %v1852 = vunpack.c.h.b16 %v1189
    %v1853 = vunpack.c.l.b16 %v1190
    %v1854 = vunpack.c.h.b16 %v1190
    %v1855 = vunpack.c.l.b16 %v1191
    %v1856 = vunpack.c.h.b16 %v1191
    %v1857 = vunpack.c.l.b16 %v1192
    %v1858 = vunpack.c.h.b16 %v1192
    %v1859 = vunpack.c.l.b16 %v1193
    %v1860 = vunpack.c.h.b16 %v1193
    %v1861 = vunpack.c.l.b16 %v1194
    %v1862 = vunpack.c.h.b16 %v1194
    %v1863 = vunpack.c.l.b16 %v1195
    %v1864 = vunpack.c.h.b16 %v1195
    %v1865 = vunpack.c.l.b16 %v1196
    %v1866 = vunpack.c.h.b16 %v1196
    %v1867 = vunpack.c.l.b16 %v1197
    %v1868 = vunpack.c.h.b16 %v1197
    %v1869 = vunpack.c.l.b16 %v1198
    %v1870 = vunpack.c.h.b16 %v1198
    %v1871 = vunpack.c.l.b16 %v1199
    %v1872 = vunpack.c.h.b16 %v1199
    %v1873 = vunpack.c.l.b16 %v1200
    %v1874 = vunpack.c.h.b16 %v1200
    %v1875 = vunpack.c.l.b16 %v1201
    %v1876 = vunpack.c.h.b16 %v1201
    %v1877 = vunpack.c.l.b16 %v1202
    %v1878 = vunpack.c.h.b16 %v1202
    %v1879 = vunpack.c.l.b16 %v1203
    %v1880 = vunpack.c.h.b16 %v1203
    %v1881 = vunpack.c.l.b16 %v1204
    %v1882 = vunpack.c.h.b16 %v1204
    %v1883 = vunpack.c.l.b16 %v1205
    %v1884 = vunpack.c.h.b16 %v1205
    %v1885 = vunpack.c.l.b16 %v1206
    %v1886 = vunpack.c.h.b16 %v1206
    %v1887 = vunpack.c.l.b16 %v1207
    %v1888 = vunpack.c.h.b16 %v1207
    %v1889 = vunpack.c.l.b16 %v1208
    %v1890 = vunpack.c.h.b16 %v1208
    %v1891 = vunpack.c.l.b16 %v1209
    %v1892 = vunpack.c.h.b16 %v1209
    %v1893 = vunpack.c.l.b16 %v1210
    %v1894 = vunpack.c.h.b16 %v1210
    %v1895 = vunpack.c.l.b16 %v1211
    %v1896 = vunpack.c.h.b16 %v1211
    %v1897 = vunpack.c.l.b16 %v1212
    %v1898 = vunpack.c.h.b16 %v1212
    %v1899 = vunpack.c.l.b16 %v1213
    %v1900 = vunpack.c.h.b16 %v1213
    %v1901 = vunpack.c.l.b16 %v1214
    %v1902 = vunpack.c.h.b16 %v1214
    %v1903 = vunpack.c.l.b16 %v1215
    %v1904 = vunpack.c.h.b16 %v1215
    %v1905 = vunpack.c.l.b16 %v1216
    %v1906 = vunpack.c.h.b16 %v1216
    %v1907 = vunpack.c.l.b16 %v1217
    %v1908 = vunpack.c.h.b16 %v1217
    %v1909 = vunpack.c.l.b16 %v1218
    %v1910 = vunpack.c.h.b16 %v1218
    %v1911 = vunpack.c.l.b16 %v1219
    %v1912 = vunpack.c.h.b16 %v1219
    %v1913 = vunpack.c.l.b16 %v1220
    %v1914 = vunpack.c.h.b16 %v1220
    %v1915 = vunpack.c.l.b16 %v1221
    %v1916 = vunpack.c.h.b16 %v1221
    %v1917 = vunpack.c.l.b16 %v1222
    %v1918 = vunpack.c.h.b16 %v1222
    %v1919 = vunpack.c.l.b16 %v1223
    %v1920 = vunpack.c.h.b16 %v1223
    %v1921 = vunpack.c.l.b16 %v1224
    %v1922 = vunpack.c.h.b16 %v1224
    %v1923 = vunpack.c.l.b16 %v1225
    %v1924 = vunpack.c.h.b16 %v1225
    %v1925 = vunpack.c.l.b16 %v1226
    %v1926 = vunpack.c.h.b16 %v1226
    %v1927 = vunpack.c.l.b16 %v1227
    %v1928 = vunpack.c.h.b16 %v1227
    %v1929 = vunpack.c.l.b16 %v1228
    %v1930 = vunpack.c.h.b16 %v1228
    %v1931 = vunpack.c.l.b16 %v1229
    %v1932 = vunpack.c.h.b16 %v1229
    %v1933 = vunpack.c.l.b16 %v1230
    %v1934 = vunpack.c.h.b16 %v1230
    %v1935 = vunpack.c.l.b16 %v1231
    %v1936 = vunpack.c.h.b16 %v1231
    %v1937 = vunpack.c.l.b16 %v1232
    %v1938 = vunpack.c.h.b16 %v1232
    %v1939 = vunpack.c.l.b16 %v1233
    %v1940 = vunpack.c.h.b16 %v1233
    %v1941 = vunpack.c.l.b16 %v1234
    %v1942 = vunpack.c.h.b16 %v1234
    %v1943 = vunpack.c.l.b16 %v1235
    %v1944 = vunpack.c.h.b16 %v1235
    %v1945 = vunpack.c.l.b16 %v1236
    %v1946 = vunpack.c.h.b16 %v1236
    %v1947 = vunpack.c.l.b16 %v1237
    %v1948 = vunpack.c.h.b16 %v1237
    %v1949 = vunpack.c.l.b16 %v1238
    %v1950 = vunpack.c.h.b16 %v1238
    %v1951 = vunpack.c.l.b16 %v1239
    %v1952 = vunpack.c.h.b16 %v1239
    %v1953 = vunpack.c.l.b16 %v1240
    %v1954 = vunpack.c.h.b16 %v1240
    %v1955 = vunpack.c.l.b16 %v1241
    %v1956 = vunpack.c.h.b16 %v1241
    %v1957 = vunpack.c.l.b16 %v1242
    %v1958 = vunpack.c.h.b16 %v1242
    %v1959 = vunpack.c.l.b16 %v1243
    %v1960 = vunpack.c.h.b16 %v1243
    %v1961 = vunpack.c.l.b16 %v1244
    %v1962 = vunpack.c.h.b16 %v1244
    %v1963 = vunpack.c.l.b16 %v1245
    %v1964 = vunpack.c.h.b16 %v1245
    %v1965 = vunpack.c.l.b16 %v1246
    %v1966 = vunpack.c.h.b16 %v1246
    %v1967 = vunpack.c.l.b16 %v1247
    %v1968 = vunpack.c.h.b16 %v1247
    %v1969 = vunpack.c.l.b16 %v1248
    %v1970 = vunpack.c.h.b16 %v1248
    %v1971 = vunpack.c.l.b16 %v1249
    %v1972 = vunpack.c.h.b16 %v1249
    %v1973 = vunpack.c.l.b16 %v1250
    %v1974 = vunpack.c.h.b16 %v1250
    %v1975 = vunpack.c.l.b16 %v1251
    %v1976 = vunpack.c.h.b16 %v1251
    %v1977 = vunpack.c.l.b16 %v1252
    %v1978 = vunpack.c.h.b16 %v1252
    %v1979 = vunpack.c.l.b16 %v1253
    %v1980 = vunpack.c.h.b16 %v1253
    %v1981 = vunpack.c.l.b16 %v1254
    %v1982 = vunpack.c.h.b16 %v1254
    %v1983 = vunpack.c.l.b16 %v1255
    %v1984 = vunpack.c.h.b16 %v1255
    %v1985 = vunpack.c.l.b16 %v1256
    %v1986 = vunpack.c.h.b16 %v1256
    %v1987 = vunpack.c.l.b16 %v1257
    %v1988 = vunpack.c.h.b16 %v1257
    %v1989 = vunpack.c.l.b16 %v1258
    %v1990 = vunpack.c.h.b16 %v1258
    %v1991 = vunpack.c.l.b16 %v1259
    %v1992 = vunpack.c.h.b16 %v1259
    %v1993 = vunpack.c.l.b16 %v1260
    %v1994 = vunpack.c.h.b16 %v1260
    %v1995 = vunpack.c.l.b16 %v1261
    %v1996 = vunpack.c.h.b16 %v1261
    %v1997 = vunpack.c.l.b16 %v1262
    %v1998 = vunpack.c.h.b16 %v1262
    %v1999 = vunpack.c.l.b16 %v1263
    %v2000 = vunpack.c.h.b16 %v1263
    %v2001 = vunpack.c.l.b16 %v1264
    %v2002 = vunpack.c.h.b16 %v1264
    %v2003 = vunpack.c.l.b16 %v1265
    %v2004 = vunpack.c.h.b16 %v1265
    %v2005 = vunpack.c.l.b16 %v1266
    %v2006 = vunpack.c.h.b16 %v1266
    %v2007 = vunpack.c.l.b16 %v1267
    %v2008 = vunpack.c.h.b16 %v1267
    %v2009 = vunpack.c.l.b16 %v1268
    %v2010 = vunpack.c.h.b16 %v1268
    %v2011 = vunpack.c.l.b16 %v1269
    %v2012 = vunpack.c.h.b16 %v1269
    %v2013 = vunpack.c.l.b16 %v1270
    %v2014 = vunpack.c.h.b16 %v1270
    %v2015 = vunpack.c.l.b16 %v1271
    %v2016 = vunpack.c.h.b16 %v1271
    %v2017 = vunpack.c.l.b16 %v1272
    %v2018 = vunpack.c.h.b16 %v1272
    %v2019 = vunpack.c.l.b16 %v1273
    %v2020 = vunpack.c.h.b16 %v1273
    %v2021 = vunpack.c.l.b16 %v1274
    %v2022 = vunpack.c.h.b16 %v1274
    %v2023 = vunpack.c.l.b16 %v1275
    %v2024 = vunpack.c.h.b16 %v1275
    %v2025 = vunpack.c.l.b16 %v1276
    %v2026 = vunpack.c.h.b16 %v1276
    %v2027 = vunpack.c.l.b16 %v1277
    %v2028 = vunpack.c.h.b16 %v1277
    %v2029 = vunpack.c.l.b16 %v1278
    %v2030 = vunpack.c.h.b16 %v1278
    %v2031 = vunpack.c.l.b16 %v1279
    %v2032 = vunpack.c.h.b16 %v1279
    %v2033 = vunpack.c.l.b16 %v1280
    %v2034 = vunpack.c.h.b16 %v1280
    %v2035 = vunpack.c.l.b16 %v1281
    %v2036 = vunpack.c.h.b16 %v1281
    %v2037 = vunpack.c.l.b16 %v1282
    %v2038 = vunpack.c.h.b16 %v1282
    %v2039 = vunpack.c.l.b16 %v1283
    %v2040 = vunpack.c.h.b16 %v1283
    %v2041 = vunpack.c.l.b16 %v1284
    %v2042 = vunpack.c.h.b16 %v1284
    %v2043 = vunpack.c.l.b16 %v1285
    %v2044 = vunpack.c.h.b16 %v1285
    %v2045 = vunpack.c.l.b16 %v1286
    %v2046 = vunpack.c.h.b16 %v1286
    %v2047 = vunpack.c.l.b16 %v1287
    %v2048 = vunpack.c.h.b16 %v1287
    %v2049 = vunpack.c.l.b16 %v1288
    %v2050 = vunpack.c.h.b16 %v1288
    %v2051 = vunpack.c.l.b16 %v1289
    %v2052 = vunpack.c.h.b16 %v1289
    %v2053 = vunpack.c.l.b16 %v1290
    %v2054 = vunpack.c.h.b16 %v1290
    %v2055 = vunpack.c.l.b16 %v1291
    %v2056 = vunpack.c.h.b16 %v1291
    %v2057 = vunpack.c.l.b16 %v1292
    %v2058 = vunpack.c.h.b16 %v1292
    %v2059 = vunpack.c.l.b16 %v1293
    %v2060 = vunpack.c.h.b16 %v1293
    %v2061 = vunpack.c.l.b16 %v1294
    %v2062 = vunpack.c.h.b16 %v1294
    %v2063 = vpack.c.b16 %v1559, %v1551
    %v2064 = vpack.c.b16 %v1560, %v1552
    %v2065 = vpack.c.b16 %v1561, %v1553
    %v2066 = vpack.c.b16 %v1562, %v1554
    %v2067 = vpack.c.b16 %v1563, %v1555
    %v2068 = vpack.c.b16 %v1564, %v1556
    %v2069 = vpack.c.b16 %v1565, %v1557
    %v2070 = vpack.c.b16 %v1566, %v1558
    %v2071 = vpack.c.b16 %v1575, %v1567
    %v2072 = vpack.c.b16 %v1576, %v1568
    %v2073 = vpack.c.b16 %v1577, %v1569
    %v2074 = vpack.c.b16 %v1578, %v1570
    %v2075 = vpack.c.b16 %v1579, %v1571
    %v2076 = vpack.c.b16 %v1580, %v1572
    %v2077 = vpack.c.b16 %v1581, %v1573
    %v2078 = vpack.c.b16 %v1582, %v1574
    %v2079 = vpack.c.b16 %v1591, %v1583
    %v2080 = vpack.c.b16 %v1592, %v1584
    %v2081 = vpack.c.b16 %v1593, %v1585
    %v2082 = vpack.c.b16 %v1594, %v1586
    %v2083 = vpack.c.b16 %v1595, %v1587
    %v2084 = vpack.c.b16 %v1596, %v1588
    %v2085 = vpack.c.b16 %v1597, %v1589
    %v2086 = vpack.c.b16 %v1598, %v1590
    %v2087 = vpack.c.b16 %v1607, %v1599
    %v2088 = vpack.c.b16 %v1608, %v1600
    %v2089 = vpack.c.b16 %v1609, %v1601
    %v2090 = vpack.c.b16 %v1610, %v1602
    %v2091 = vpack.c.b16 %v1611, %v1603
    %v2092 = vpack.c.b16 %v1612, %v1604
    %v2093 = vpack.c.b16 %v1613, %v1605
    %v2094 = vpack.c.b16 %v1614, %v1606
    %v2095 = vpack.c.b16 %v1623, %v1615
    %v2096 = vpack.c.b16 %v1624, %v1616
    %v2097 = vpack.c.b16 %v1625, %v1617
    %v2098 = vpack.c.b16 %v1626, %v1618
    %v2099 = vpack.c.b16 %v1627, %v1619
    %v2100 = vpack.c.b16 %v1628, %v1620
    %v2101 = vpack.c.b16 %v1629, %v1621
    %v2102 = vpack.c.b16 %v1630, %v1622
    %v2103 = vpack.c.b16 %v1639, %v1631
    %v2104 = vpack.c.b16 %v1640, %v1632
    %v2105 = vpack.c.b16 %v1641, %v1633
    %v2106 = vpack.c.b16 %v1642, %v1634
    %v2107 = vpack.c.b16 %v1643, %v1635
    %v2108 = vpack.c.b16 %v1644, %v1636
    %v2109 = vpack.c.b16 %v1645, %v1637
    %v2110 = vpack.c.b16 %v1646, %v1638
    %v2111 = vpack.c.b16 %v1655, %v1647
    %v2112 = vpack.c.b16 %v1656, %v1648
    %v2113 = vpack.c.b16 %v1657, %v1649
    %v2114 = vpack.c.b16 %v1658, %v1650
    %v2115 = vpack.c.b16 %v1659, %v1651
    %v2116 = vpack.c.b16 %v1660, %v1652
    %v2117 = vpack.c.b16 %v1661, %v1653
    %v2118 = vpack.c.b16 %v1662, %v1654
    %v2119 = vpack.c.b16 %v1671, %v1663
    %v2120 = vpack.c.b16 %v1672, %v1664
    %v2121 = vpack.c.b16 %v1673, %v1665
    %v2122 = vpack.c.b16 %v1674, %v1666
    %v2123 = vpack.c.b16 %v1675, %v1667
    %v2124 = vpack.c.b16 %v1676, %v1668
    %v2125 = vpack.c.b16 %v1677, %v1669
    %v2126 = vpack.c.b16 %v1678, %v1670
    %v2127 = vpack.c.b16 %v1687, %v1679
    %v2128 = vpack.c.b16 %v1688, %v1680
    %v2129 = vpack.c.b16 %v1689, %v1681
    %v2130 = vpack.c.b16 %v1690, %v1682
    %v2131 = vpack.c.b16 %v1691, %v1683
    %v2132 = vpack.c.b16 %v1692, %v1684
    %v2133 = vpack.c.b16 %v1693, %v1685
    %v2134 = vpack.c.b16 %v1694, %v1686
    %v2135 = vpack.c.b16 %v1703, %v1695
    %v2136 = vpack.c.b16 %v1704, %v1696
    %v2137 = vpack.c.b16 %v1705, %v1697
    %v2138 = vpack.c.b16 %v1706, %v1698
    %v2139 = vpack.c.b16 %v1707, %v1699
    %v2140 = vpack.c.b16 %v1708, %v1700
    %v2141 = vpack.c.b16 %v1709, %v1701
    %v2142 = vpack.c.b16 %v1710, %v1702
    %v2143 = vpack.c.b16 %v1719, %v1711
    %v2144 = vpack.c.b16 %v1720, %v1712
    %v2145 = vpack.c.b16 %v1721, %v1713
    %v2146 = vpack.c.b16 %v1722, %v1714
    %v2147 = vpack.c.b16 %v1723, %v1715
    %v2148 = vpack.c.b16 %v1724, %v1716
    %v2149 = vpack.c.b16 %v1725, %v1717
    %v2150 = vpack.c.b16 %v1726, %v1718
    %v2151 = vpack.c.b16 %v1735, %v1727
    %v2152 = vpack.c.b16 %v1736, %v1728
    %v2153 = vpack.c.b16 %v1737, %v1729
    %v2154 = vpack.c.b16 %v1738, %v1730
    %v2155 = vpack.c.b16 %v1739, %v1731
    %v2156 = vpack.c.b16 %v1740, %v1732
    %v2157 = vpack.c.b16 %v1741, %v1733
    %v2158 = vpack.c.b16 %v1742, %v1734
    %v2159 = vpack.c.b16 %v1751, %v1743
    %v2160 = vpack.c.b16 %v1752, %v1744
    %v2161 = vpack.c.b16 %v1753, %v1745
    %v2162 = vpack.c.b16 %v1754, %v1746
    %v2163 = vpack.c.b16 %v1755, %v1747
    %v2164 = vpack.c.b16 %v1756, %v1748
    %v2165 = vpack.c.b16 %v1757, %v1749
    %v2166 = vpack.c.b16 %v1758, %v1750
    %v2167 = vpack.c.b16 %v1767, %v1759
    %v2168 = vpack.c.b16 %v1768, %v1760
    %v2169 = vpack.c.b16 %v1769, %v1761
    %v2170 = vpack.c.b16 %v1770, %v1762
    %v2171 = vpack.c.b16 %v1771, %v1763
    %v2172 = vpack.c.b16 %v1772, %v1764
    %v2173 = vpack.c.b16 %v1773, %v1765
    %v2174 = vpack.c.b16 %v1774, %v1766
    %v2175 = vpack.c.b16 %v1783, %v1775
    %v2176 = vpack.c.b16 %v1784, %v1776
    %v2177 = vpack.c.b16 %v1785, %v1777
    %v2178 = vpack.c.b16 %v1786, %v1778
    %v2179 = vpack.c.b16 %v1787, %v1779
    %v2180 = vpack.c.b16 %v1788, %v1780
    %v2181 = vpack.c.b16 %v1789, %v1781
    %v2182 = vpack.c.b16 %v1790, %v1782
    %v2183 = vpack.c.b16 %v1799, %v1791
    %v2184 = vpack.c.b16 %v1800, %v1792
    %v2185 = vpack.c.b16 %v1801, %v1793
    %v2186 = vpack.c.b16 %v1802, %v1794
    %v2187 = vpack.c.b16 %v1803, %v1795
    %v2188 = vpack.c.b16 %v1804, %v1796
    %v2189 = vpack.c.b16 %v1805, %v1797
    %v2190 = vpack.c.b16 %v1806, %v1798
    %v2191 = vpack.c.b16 %v1815, %v1807
    %v2192 = vpack.c.b16 %v1816, %v1808
    %v2193 = vpack.c.b16 %v1817, %v1809
    %v2194 = vpack.c.b16 %v1818, %v1810
    %v2195 = vpack.c.b16 %v1819, %v1811
    %v2196 = vpack.c.b16 %v1820, %v1812
    %v2197 = vpack.c.b16 %v1821, %v1813
    %v2198 = vpack.c.b16 %v1822, %v1814
    %v2199 = vpack.c.b16 %v1831, %v1823
    %v2200 = vpack.c.b16 %v1832, %v1824
    %v2201 = vpack.c.b16 %v1833, %v1825
    %v2202 = vpack.c.b16 %v1834, %v1826
    %v2203 = vpack.c.b16 %v1835, %v1827
    %v2204 = vpack.c.b16 %v1836, %v1828
    %v2205 = vpack.c.b16 %v1837, %v1829
    %v2206 = vpack.c.b16 %v1838, %v1830
    %v2207 = vpack.c.b16 %v1847, %v1839
    %v2208 = vpack.c.b16 %v1848, %v1840
    %v2209 = vpack.c.b16 %v1849, %v1841
    %v2210 = vpack.c.b16 %v1850, %v1842
    %v2211 = vpack.c.b16 %v1851, %v1843
    %v2212 = vpack.c.b16 %v1852, %v1844
    %v2213 = vpack.c.b16 %v1853, %v1845
    %v2214 = vpack.c.b16 %v1854, %v1846
    %v2215 = vpack.c.b16 %v1863, %v1855
    %v2216 = vpack.c.b16 %v1864, %v1856
    %v2217 = vpack.c.b16 %v1865, %v1857
    %v2218 = vpack.c.b16 %v1866, %v1858
    %v2219 = vpack.c.b16 %v1867, %v1859
    %v2220 = vpack.c.b16 %v1868, %v1860
    %v2221 = vpack.c.b16 %v1869, %v1861
    %v2222 = vpack.c.b16 %v1870, %v1862
    %v2223 = vpack.c.b16 %v1879, %v1871
    %v2224 = vpack.c.b16 %v1880, %v1872
    %v2225 = vpack.c.b16 %v1881, %v1873
    %v2226 = vpack.c.b16 %v1882, %v1874
    %v2227 = vpack.c.b16 %v1883, %v1875
    %v2228 = vpack.c.b16 %v1884, %v1876
    %v2229 = vpack.c.b16 %v1885, %v1877
    %v2230 = vpack.c.b16 %v1886, %v1878
    %v2231 = vpack.c.b16 %v1895, %v1887
    %v2232 = vpack.c.b16 %v1896, %v1888
    %v2233 = vpack.c.b16 %v1897, %v1889
    %v2234 = vpack.c.b16 %v1898, %v1890
    %v2235 = vpack.c.b16 %v1899, %v1891
    %v2236 = vpack.c.b16 %v1900, %v1892
    %v2237 = vpack.c.b16 %v1901, %v1893
    %v2238 = vpack.c.b16 %v1902, %v1894
    %v2239 = vpack.c.b16 %v1911, %v1903
    %v2240 = vpack.c.b16 %v1912, %v1904
    %v2241 = vpack.c.b16 %v1913, %v1905
    %v2242 = vpack.c.b16 %v1914, %v1906
    %v2243 = vpack.c.b16 %v1915, %v1907
    %v2244 = vpack.c.b16 %v1916, %v1908
    %v2245 = vpack.c.b16 %v1917, %v1909
    %v2246 = vpack.c.b16 %v1918, %v1910
    %v2247 = vpack.c.b16 %v1927, %v1919
    %v2248 = vpack.c.b16 %v1928, %v1920
    %v2249 = vpack.c.b16 %v1929, %v1921
    %v2250 = vpack.c.b16 %v1930, %v1922
    %v2251 = vpack.c.b16 %v1931, %v1923
    %v2252 = vpack.c.b16 %v1932, %v1924
    %v2253 = vpack.c.b16 %v1933, %v1925
    %v2254 = vpack.c.b16 %v1934, %v1926
    %v2255 = vpack.c.b16 %v1943, %v1935
    %v2256 = vpack.c.b16 %v1944, %v1936
    %v2257 = vpack.c.b16 %v1945, %v1937
    %v2258 = vpack.c.b16 %v1946, %v1938
    %v2259 = vpack.c.b16 %v1947, %v1939
    %v2260 = vpack.c.b16 %v1948, %v1940
    %v2261 = vpack.c.b16 %v1949, %v1941
    %v2262 = vpack.c.b16 %v1950, %v1942
    %v2263 = vpack.c.b16 %v1959, %v1951
    %v2264 = vpack.c.b16 %v1960, %v1952
    %v2265 = vpack.c.b16 %v1961, %v1953
    %v2266 = vpack.c.b16 %v1962, %v1954
    %v2267 = vpack.c.b16 %v1963, %v1955
    %v2268 = vpack.c.b16 %v1964, %v1956
    %v2269 = vpack.c.b16 %v1965, %v1957
    %v2270 = vpack.c.b16 %v1966, %v1958
    %v2271 = vpack.c.b16 %v1975, %v1967
    %v2272 = vpack.c.b16 %v1976, %v1968
    %v2273 = vpack.c.b16 %v1977, %v1969
    %v2274 = vpack.c.b16 %v1978, %v1970
    %v2275 = vpack.c.b16 %v1979, %v1971
    %v2276 = vpack.c.b16 %v1980, %v1972
    %v2277 = vpack.c.b16 %v1981, %v1973
    %v2278 = vpack.c.b16 %v1982, %v1974
    %v2279 = vpack.c.b16 %v1991, %v1983
    %v2280 = vpack.c.b16 %v1992, %v1984
    %v2281 = vpack.c.b16 %v1993, %v1985
    %v2282 = vpack.c.b16 %v1994, %v1986
    %v2283 = vpack.c.b16 %v1995, %v1987
    %v2284 = vpack.c.b16 %v1996, %v1988
    %v2285 = vpack.c.b16 %v1997, %v1989
    %v2286 = vpack.c.b16 %v1998, %v1990
    %v2287 = vpack.c.b16 %v2007, %v1999
    %v2288 = vpack.c.b16 %v2008, %v2000
    %v2289 = vpack.c.b16 %v2009, %v2001
    %v2290 = vpack.c.b16 %v2010, %v2002
    %v2291 = vpack.c.b16 %v2011, %v2003
    %v2292 = vpack.c.b16 %v2012, %v2004
    %v2293 = vpack.c.b16 %v2013, %v2005
    %v2294 = vpack.c.b16 %v2014, %v2006
    %v2295 = vpack.c.b16 %v2023, %v2015
    %v2296 = vpack.c.b16 %v2024, %v2016
    %v2297 = vpack.c.b16 %v2025, %v2017
    %v2298 = vpack.c.b16 %v2026, %v2018
    %v2299 = vpack.c.b16 %v2027, %v2019
    %v2300 = vpack.c.b16 %v2028, %v2020
    %v2301 = vpack.c.b16 %v2029, %v2021
    %v2302 = vpack.c.b16 %v2030, %v2022
    %v2303 = vpack.c.b16 %v2039, %v2031
    %v2304 = vpack.c.b16 %v2040, %v2032
    %v2305 = vpack.c.b16 %v2041, %v2033
    %v2306 = vpack.c.b16 %v2042, %v2034
    %v2307 = vpack.c.b16 %v2043, %v2035
    %v2308 = vpack.c.b16 %v2044, %v2036
    %v2309 = vpack.c.b16 %v2045, %v2037
    %v2310 = vpack.c.b16 %v2046, %v2038
    %v2311 = vpack.c.b16 %v2055, %v2047
    %v2312 = vpack.c.b16 %v2056, %v2048
    %v2313 = vpack.c.b16 %v2057, %v2049
    %v2314 = vpack.c.b16 %v2058, %v2050
    %v2315 = vpack.c.b16 %v2059, %v2051
    %v2316 = vpack.c.b16 %v2060, %v2052
    %v2317 = vpack.c.b16 %v2061, %v2053
    %v2318 = vpack.c.b16 %v2062, %v2054
    %2575 = vmatprep.subr.bf16.mxu0 %v2064
    %2576 = vmatpush1.bf16.msra.mxu0 %v2063
    %2577 = vmatprep.subr.bf16.mxu0 %v2072
    %2578 = vmatpush1.bf16.msra.mxu0 %v2071
    %2579 = vmatprep.subr.bf16.mxu0 %v2080
    %2580 = vmatpush1.bf16.msra.mxu0 %v2079
    %2581 = vmatprep.subr.bf16.mxu0 %v2088
    %2582 = vmatpush1.bf16.msra.mxu0 %v2087
    %2583 = vmatprep.subr.bf16.mxu0 %v2096
    %2584 = vmatpush1.bf16.msra.mxu0 %v2095
    %2585 = vmatprep.subr.bf16.mxu0 %v2104
    %2586 = vmatpush1.bf16.msra.mxu0 %v2103
    %2587 = vmatprep.subr.bf16.mxu0 %v2112
    %2588 = vmatpush1.bf16.msra.mxu0 %v2111
    %2589 = vmatprep.subr.bf16.mxu0 %v2120
    %2590 = vmatpush1.bf16.msra.mxu0 %v2119
    %2591 = vmatprep.subr.bf16.mxu0 %v2128
    %2592 = vmatpush1.bf16.msra.mxu0 %v2127
    %2593 = vmatprep.subr.bf16.mxu0 %v2136
    %2594 = vmatpush1.bf16.msra.mxu0 %v2135
    %2595 = vmatprep.subr.bf16.mxu0 %v2144
    %2596 = vmatpush1.bf16.msra.mxu0 %v2143
    %2597 = vmatprep.subr.bf16.mxu0 %v2152
    %2598 = vmatpush1.bf16.msra.mxu0 %v2151
    %2599 = vmatprep.subr.bf16.mxu0 %v2160
    %2600 = vmatpush1.bf16.msra.mxu0 %v2159
    %2601 = vmatprep.subr.bf16.mxu0 %v2168
    %2602 = vmatpush1.bf16.msra.mxu0 %v2167
    %2603 = vmatprep.subr.bf16.mxu0 %v2176
    %2604 = vmatpush1.bf16.msra.mxu0 %v2175
    %2605 = vmatprep.subr.bf16.mxu0 %v2184
    %2606 = vmatpush1.bf16.msra.mxu0 %v2183
    %2607 = vmatprep.mubr.bf16.mxu0 %v1036
    %2608 = vmatmul.mubr.bf16.gmra.mrb[0].mxu0 %v1035
    %v2609 = vpop.f32.mrb[0].mxu0
    %v2610 = vadd.f32 0.0, %v2609
    %v2611 = vpop.f32.mrb[0].mxu0
    %v2612 = vadd.f32 0.0, %v2611
    %v2613 = vpop.f32.mrb[0].mxu0
    %v2614 = vpop.f32.mrb[0].mxu0
    %2615 = vdwg.mxu0
    %2616 = vmatprep.subr.bf16.mxu0 %v2192
    %2617 = vmatpush1.bf16.msra.mxu0 %v2191
    %2618 = vmatprep.subr.bf16.mxu0 %v2200
    %2619 = vmatpush1.bf16.msra.mxu0 %v2199
    %2620 = vmatprep.subr.bf16.mxu0 %v2208
    %2621 = vmatpush1.bf16.msra.mxu0 %v2207
    %2622 = vmatprep.subr.bf16.mxu0 %v2216
    %2623 = vmatpush1.bf16.msra.mxu0 %v2215
    %2624 = vmatprep.subr.bf16.mxu0 %v2224
    %2625 = vmatpush1.bf16.msra.mxu0 %v2223
    %2626 = vmatprep.subr.bf16.mxu0 %v2232
    %2627 = vmatpush1.bf16.msra.mxu0 %v2231
    %2628 = vmatprep.subr.bf16.mxu0 %v2240
    %2629 = vmatpush1.bf16.msra.mxu0 %v2239
    %2630 = vmatprep.subr.bf16.mxu0 %v2248
    %2631 = vmatpush1.bf16.msra.mxu0 %v2247
    %2632 = vmatprep.subr.bf16.mxu0 %v2256
    %2633 = vmatpush1.bf16.msra.mxu0 %v2255
    %2634 = vmatprep.subr.bf16.mxu0 %v2264
    %2635 = vmatpush1.bf16.msra.mxu0 %v2263
    %2636 = vmatprep.subr.bf16.mxu0 %v2272
    %2637 = vmatpush1.bf16.msra.mxu0 %v2271
    %2638 = vmatprep.subr.bf16.mxu0 %v2280
    %2639 = vmatpush1.bf16.msra.mxu0 %v2279
    %2640 = vmatprep.subr.bf16.mxu0 %v2288
    %2641 = vmatpush1.bf16.msra.mxu0 %v2287
    %2642 = vmatprep.subr.bf16.mxu0 %v2296
    %2643 = vmatpush1.bf16.msra.mxu0 %v2295
    %2644 = vmatprep.subr.bf16.mxu0 %v2304
    %2645 = vmatpush1.bf16.msra.mxu0 %v2303
    %2646 = vmatprep.subr.bf16.mxu0 %v2312
    %2647 = vmatpush1.bf16.msra.mxu0 %v2311
    %2648 = vmatprep.mubr.bf16.mxu0 %v1038
    %2649 = vmatmul.mubr.bf16.gmra.mrb[0].mxu0 %v1037
    %v2650 = vpop.f32.mrb[0].mxu0
    %v2651 = vadd.f32 %v2610, %v2650
    %v2652 = vpop.f32.mrb[0].mxu0
    %v2653 = vadd.f32 %v2612, %v2652
    %v2654 = vpop.f32.mrb[0].mxu0
    %v2655 = vpop.f32.mrb[0].mxu0
    %2656 = vdwg.mxu0
    %2657 = vmatprep.subr.bf16.mxu0 %v2066
    %2658 = vmatpush1.bf16.msra.mxu0 %v2065
    %2659 = vmatprep.subr.bf16.mxu0 %v2074
    %2660 = vmatpush1.bf16.msra.mxu0 %v2073
    %2661 = vmatprep.subr.bf16.mxu0 %v2082
    %2662 = vmatpush1.bf16.msra.mxu0 %v2081
    %2663 = vmatprep.subr.bf16.mxu0 %v2090
    %2664 = vmatpush1.bf16.msra.mxu0 %v2089
    %2665 = vmatprep.subr.bf16.mxu0 %v2098
    %2666 = vmatpush1.bf16.msra.mxu0 %v2097
    %2667 = vmatprep.subr.bf16.mxu0 %v2106
    %2668 = vmatpush1.bf16.msra.mxu0 %v2105
    %2669 = vmatprep.subr.bf16.mxu0 %v2114
    %2670 = vmatpush1.bf16.msra.mxu0 %v2113
    %2671 = vmatprep.subr.bf16.mxu0 %v2122
    %2672 = vmatpush1.bf16.msra.mxu0 %v2121
    %2673 = vmatprep.subr.bf16.mxu0 %v2130
    %2674 = vmatpush1.bf16.msra.mxu0 %v2129
    %2675 = vmatprep.subr.bf16.mxu0 %v2138
    %2676 = vmatpush1.bf16.msra.mxu0 %v2137
    %2677 = vmatprep.subr.bf16.mxu0 %v2146
    %2678 = vmatpush1.bf16.msra.mxu0 %v2145
    %2679 = vmatprep.subr.bf16.mxu0 %v2154
    %2680 = vmatpush1.bf16.msra.mxu0 %v2153
    %2681 = vmatprep.subr.bf16.mxu0 %v2162
    %2682 = vmatpush1.bf16.msra.mxu0 %v2161
    %2683 = vmatprep.subr.bf16.mxu0 %v2170
    %2684 = vmatpush1.bf16.msra.mxu0 %v2169
    %2685 = vmatprep.subr.bf16.mxu0 %v2178
    %2686 = vmatpush1.bf16.msra.mxu0 %v2177
    %2687 = vmatprep.subr.bf16.mxu0 %v2186
    %2688 = vmatpush1.bf16.msra.mxu0 %v2185
    %2689 = vmatprep.mubr.bf16.mxu0 %v1036
    %2690 = vmatmul.mubr.bf16.gmra.mrb[0].mxu0 %v1035
    %v2691 = vpop.f32.mrb[0].mxu0
    %v2692 = vadd.f32 0.0, %v2691
    %v2693 = vpop.f32.mrb[0].mxu0
    %v2694 = vadd.f32 0.0, %v2693
    %v2695 = vpop.f32.mrb[0].mxu0
    %v2696 = vpop.f32.mrb[0].mxu0
    %2697 = vdwg.mxu0
    %2698 = vmatprep.subr.bf16.mxu0 %v2194
    %2699 = vmatpush1.bf16.msra.mxu0 %v2193
    %2700 = vmatprep.subr.bf16.mxu0 %v2202
    %2701 = vmatpush1.bf16.msra.mxu0 %v2201
    %2702 = vmatprep.subr.bf16.mxu0 %v2210
    %2703 = vmatpush1.bf16.msra.mxu0 %v2209
    %2704 = vmatprep.subr.bf16.mxu0 %v2218
    %2705 = vmatpush1.bf16.msra.mxu0 %v2217
    %2706 = vmatprep.subr.bf16.mxu0 %v2226
    %2707 = vmatpush1.bf16.msra.mxu0 %v2225
    %2708 = vmatprep.subr.bf16.mxu0 %v2234
    %2709 = vmatpush1.bf16.msra.mxu0 %v2233
    %2710 = vmatprep.subr.bf16.mxu0 %v2242
    %2711 = vmatpush1.bf16.msra.mxu0 %v2241
    %2712 = vmatprep.subr.bf16.mxu0 %v2250
    %2713 = vmatpush1.bf16.msra.mxu0 %v2249
    %2714 = vmatprep.subr.bf16.mxu0 %v2258
    %2715 = vmatpush1.bf16.msra.mxu0 %v2257
    %2716 = vmatprep.subr.bf16.mxu0 %v2266
    %2717 = vmatpush1.bf16.msra.mxu0 %v2265
    %2718 = vmatprep.subr.bf16.mxu0 %v2274
    %2719 = vmatpush1.bf16.msra.mxu0 %v2273
    %2720 = vmatprep.subr.bf16.mxu0 %v2282
    %2721 = vmatpush1.bf16.msra.mxu0 %v2281
    %2722 = vmatprep.subr.bf16.mxu0 %v2290
    %2723 = vmatpush1.bf16.msra.mxu0 %v2289
    %2724 = vmatprep.subr.bf16.mxu0 %v2298
    %2725 = vmatpush1.bf16.msra.mxu0 %v2297
    %2726 = vmatprep.subr.bf16.mxu0 %v2306
    %2727 = vmatpush1.bf16.msra.mxu0 %v2305
    %2728 = vmatprep.subr.bf16.mxu0 %v2314
    %2729 = vmatpush1.bf16.msra.mxu0 %v2313
    %2730 = vmatprep.mubr.bf16.mxu0 %v1038
    %2731 = vmatmul.mubr.bf16.gmra.mrb[0].mxu0 %v1037
    %v2732 = vpop.f32.mrb[0].mxu0
    %v2733 = vadd.f32 %v2692, %v2732
    %v2734 = vpop.f32.mrb[0].mxu0
    %v2735 = vadd.f32 %v2694, %v2734
    %v2736 = vpop.f32.mrb[0].mxu0
    %v2737 = vpop.f32.mrb[0].mxu0
    %2738 = vdwg.mxu0
    %2739 = vmatprep.subr.bf16.mxu0 %v2068
    %2740 = vmatpush1.bf16.msra.mxu0 %v2067
    %2741 = vmatprep.subr.bf16.mxu0 %v2076
    %2742 = vmatpush1.bf16.msra.mxu0 %v2075
    %2743 = vmatprep.subr.bf16.mxu0 %v2084
    %2744 = vmatpush1.bf16.msra.mxu0 %v2083
    %2745 = vmatprep.subr.bf16.mxu0 %v2092
    %2746 = vmatpush1.bf16.msra.mxu0 %v2091
    %2747 = vmatprep.subr.bf16.mxu0 %v2100
    %2748 = vmatpush1.bf16.msra.mxu0 %v2099
    %2749 = vmatprep.subr.bf16.mxu0 %v2108
    %2750 = vmatpush1.bf16.msra.mxu0 %v2107
    %2751 = vmatprep.subr.bf16.mxu0 %v2116
    %2752 = vmatpush1.bf16.msra.mxu0 %v2115
    %2753 = vmatprep.subr.bf16.mxu0 %v2124
    %2754 = vmatpush1.bf16.msra.mxu0 %v2123
    %2755 = vmatprep.subr.bf16.mxu0 %v2132
    %2756 = vmatpush1.bf16.msra.mxu0 %v2131
    %2757 = vmatprep.subr.bf16.mxu0 %v2140
    %2758 = vmatpush1.bf16.msra.mxu0 %v2139
    %2759 = vmatprep.subr.bf16.mxu0 %v2148
    %2760 = vmatpush1.bf16.msra.mxu0 %v2147
    %2761 = vmatprep.subr.bf16.mxu0 %v2156
    %2762 = vmatpush1.bf16.msra.mxu0 %v2155
    %2763 = vmatprep.subr.bf16.mxu0 %v2164
    %2764 = vmatpush1.bf16.msra.mxu0 %v2163
    %2765 = vmatprep.subr.bf16.mxu0 %v2172
    %2766 = vmatpush1.bf16.msra.mxu0 %v2171
    %2767 = vmatprep.subr.bf16.mxu0 %v2180
    %2768 = vmatpush1.bf16.msra.mxu0 %v2179
    %2769 = vmatprep.subr.bf16.mxu0 %v2188
    %2770 = vmatpush1.bf16.msra.mxu0 %v2187
    %2771 = vmatprep.mubr.bf16.mxu0 %v1036
    %2772 = vmatmul.mubr.bf16.gmra.mrb[0].mxu0 %v1035
    %v2773 = vpop.f32.mrb[0].mxu0
    %v2774 = vadd.f32 0.0, %v2773
    %v2775 = vpop.f32.mrb[0].mxu0
    %v2776 = vadd.f32 0.0, %v2775
    %v2777 = vpop.f32.mrb[0].mxu0
    %v2778 = vpop.f32.mrb[0].mxu0
    %2779 = vdwg.mxu0
    %2780 = vmatprep.subr.bf16.mxu0 %v2196
    %2781 = vmatpush1.bf16.msra.mxu0 %v2195
    %2782 = vmatprep.subr.bf16.mxu0 %v2204
    %2783 = vmatpush1.bf16.msra.mxu0 %v2203
    %2784 = vmatprep.subr.bf16.mxu0 %v2212
    %2785 = vmatpush1.bf16.msra.mxu0 %v2211
    %2786 = vmatprep.subr.bf16.mxu0 %v2220
    %2787 = vmatpush1.bf16.msra.mxu0 %v2219
    %2788 = vmatprep.subr.bf16.mxu0 %v2228
    %2789 = vmatpush1.bf16.msra.mxu0 %v2227
    %2790 = vmatprep.subr.bf16.mxu0 %v2236
    %2791 = vmatpush1.bf16.msra.mxu0 %v2235
    %2792 = vmatprep.subr.bf16.mxu0 %v2244
    %2793 = vmatpush1.bf16.msra.mxu0 %v2243
    %2794 = vmatprep.subr.bf16.mxu0 %v2252
    %2795 = vmatpush1.bf16.msra.mxu0 %v2251
    %2796 = vmatprep.subr.bf16.mxu0 %v2260
    %2797 = vmatpush1.bf16.msra.mxu0 %v2259
    %2798 = vmatprep.subr.bf16.mxu0 %v2268
    %2799 = vmatpush1.bf16.msra.mxu0 %v2267
    %2800 = vmatprep.subr.bf16.mxu0 %v2276
    %2801 = vmatpush1.bf16.msra.mxu0 %v2275
    %2802 = vmatprep.subr.bf16.mxu0 %v2284
    %2803 = vmatpush1.bf16.msra.mxu0 %v2283
    %2804 = vmatprep.subr.bf16.mxu0 %v2292
    %2805 = vmatpush1.bf16.msra.mxu0 %v2291
    %2806 = vmatprep.subr.bf16.mxu0 %v2300
    %2807 = vmatpush1.bf16.msra.mxu0 %v2299
    %2808 = vmatprep.subr.bf16.mxu0 %v2308
    %2809 = vmatpush1.bf16.msra.mxu0 %v2307
    %2810 = vmatprep.subr.bf16.mxu0 %v2316
    %2811 = vmatpush1.bf16.msra.mxu0 %v2315
    %2812 = vmatprep.mubr.bf16.mxu0 %v1038
    %2813 = vmatmul.mubr.bf16.gmra.mrb[0].mxu0 %v1037
    %v2814 = vpop.f32.mrb[0].mxu0
    %v2815 = vadd.f32 %v2774, %v2814
    %v2816 = vpop.f32.mrb[0].mxu0
    %v2817 = vadd.f32 %v2776, %v2816
    %v2818 = vpop.f32.mrb[0].mxu0
    %v2819 = vpop.f32.mrb[0].mxu0
    %2820 = vdwg.mxu0
    %2821 = vmatprep.subr.bf16.mxu0 %v2070
    %2822 = vmatpush1.bf16.msra.mxu0 %v2069
    %2823 = vmatprep.subr.bf16.mxu0 %v2078
    %2824 = vmatpush1.bf16.msra.mxu0 %v2077
    %2825 = vmatprep.subr.bf16.mxu0 %v2086
    %2826 = vmatpush1.bf16.msra.mxu0 %v2085
    %2827 = vmatprep.subr.bf16.mxu0 %v2094
    %2828 = vmatpush1.bf16.msra.mxu0 %v2093
    %2829 = vmatprep.subr.bf16.mxu0 %v2102
    %2830 = vmatpush1.bf16.msra.mxu0 %v2101
    %2831 = vmatprep.subr.bf16.mxu0 %v2110
    %2832 = vmatpush1.bf16.msra.mxu0 %v2109
    %2833 = vmatprep.subr.bf16.mxu0 %v2118
    %2834 = vmatpush1.bf16.msra.mxu0 %v2117
    %2835 = vmatprep.subr.bf16.mxu0 %v2126
    %2836 = vmatpush1.bf16.msra.mxu0 %v2125
    %2837 = vmatprep.subr.bf16.mxu0 %v2134
    %2838 = vmatpush1.bf16.msra.mxu0 %v2133
    %2839 = vmatprep.subr.bf16.mxu0 %v2142
    %2840 = vmatpush1.bf16.msra.mxu0 %v2141
    %2841 = vmatprep.subr.bf16.mxu0 %v2150
    %2842 = vmatpush1.bf16.msra.mxu0 %v2149
    %2843 = vmatprep.subr.bf16.mxu0 %v2158
    %2844 = vmatpush1.bf16.msra.mxu0 %v2157
    %2845 = vmatprep.subr.bf16.mxu0 %v2166
    %2846 = vmatpush1.bf16.msra.mxu0 %v2165
    %2847 = vmatprep.subr.bf16.mxu0 %v2174
    %2848 = vmatpush1.bf16.msra.mxu0 %v2173
    %2849 = vmatprep.subr.bf16.mxu0 %v2182
    %2850 = vmatpush1.bf16.msra.mxu0 %v2181
    %2851 = vmatprep.subr.bf16.mxu0 %v2190
    %2852 = vmatpush1.bf16.msra.mxu0 %v2189
    %2853 = vmatprep.mubr.bf16.mxu0 %v1036
    %2854 = vmatmul.mubr.bf16.gmra.mrb[0].mxu0 %v1035
    %v2855 = vpop.f32.mrb[0].mxu0
    %v2856 = vadd.f32 0.0, %v2855
    %v2857 = vpop.f32.mrb[0].mxu0
    %v2858 = vadd.f32 0.0, %v2857
    %v2859 = vpop.f32.mrb[0].mxu0
    %v2860 = vpop.f32.mrb[0].mxu0
    %2861 = vdwg.mxu0
    %2862 = vmatprep.subr.bf16.mxu0 %v2198
    %2863 = vmatpush1.bf16.msra.mxu0 %v2197
    %2864 = vmatprep.subr.bf16.mxu0 %v2206
    %2865 = vmatpush1.bf16.msra.mxu0 %v2205
    %2866 = vmatprep.subr.bf16.mxu0 %v2214
    %2867 = vmatpush1.bf16.msra.mxu0 %v2213
    %2868 = vmatprep.subr.bf16.mxu0 %v2222
    %2869 = vmatpush1.bf16.msra.mxu0 %v2221
    %2870 = vmatprep.subr.bf16.mxu0 %v2230
    %2871 = vmatpush1.bf16.msra.mxu0 %v2229
    %2872 = vmatprep.subr.bf16.mxu0 %v2238
    %2873 = vmatpush1.bf16.msra.mxu0 %v2237
    %2874 = vmatprep.subr.bf16.mxu0 %v2246
    %2875 = vmatpush1.bf16.msra.mxu0 %v2245
    %2876 = vmatprep.subr.bf16.mxu0 %v2254
    %2877 = vmatpush1.bf16.msra.mxu0 %v2253
    %2878 = vmatprep.subr.bf16.mxu0 %v2262
    %2879 = vmatpush1.bf16.msra.mxu0 %v2261
    %2880 = vmatprep.subr.bf16.mxu0 %v2270
    %2881 = vmatpush1.bf16.msra.mxu0 %v2269
    %2882 = vmatprep.subr.bf16.mxu0 %v2278
    %2883 = vmatpush1.bf16.msra.mxu0 %v2277
    %2884 = vmatprep.subr.bf16.mxu0 %v2286
    %2885 = vmatpush1.bf16.msra.mxu0 %v2285
    %2886 = vmatprep.subr.bf16.mxu0 %v2294
    %2887 = vmatpush1.bf16.msra.mxu0 %v2293
    %2888 = vmatprep.subr.bf16.mxu0 %v2302
    %2889 = vmatpush1.bf16.msra.mxu0 %v2301
    %2890 = vmatprep.subr.bf16.mxu0 %v2310
    %2891 = vmatpush1.bf16.msra.mxu0 %v2309
    %2892 = vmatprep.subr.bf16.mxu0 %v2318
    %2893 = vmatpush1.bf16.msra.mxu0 %v2317
    %2894 = vmatprep.mubr.bf16.mxu0 %v1038
    %2895 = vmatmul.mubr.bf16.gmra.mrb[0].mxu0 %v1037
    %v2896 = vpop.f32.mrb[0].mxu0
    %v2897 = vadd.f32 %v2856, %v2896
    %v2898 = vpop.f32.mrb[0].mxu0
    %v2899 = vadd.f32 %v2858, %v2898
    %v2900 = vpop.f32.mrb[0].mxu0
    %v2901 = vpop.f32.mrb[0].mxu0
    %2902 = vdwg.mxu0
    %v2903 = vld [vmem:[%s6 + $0xd] sm:$0xff]
    %v2904 = vld [vmem:[%s6 + $0x15] sm:$0xff]
    %v2905 = vrot.slane %v2651, 4
    %v2906 = vadd.f32 %v2651, %v2905
    %v2907 = vrot.slane %v2906, 2
    %v2908 = vadd.f32 %v2906, %v2907
    %v2909 = vrot.slane %v2908, 1
    %v2910 = vadd.f32 %v2908, %v2909
    %v2911 = vrot.slane %v2653, 4
    %v2912 = vadd.f32 %v2653, %v2911
    %v2913 = vrot.slane %v2912, 2
    %v2914 = vadd.f32 %v2912, %v2913
    %v2915 = vrot.slane %v2914, 1
    %v2916 = vadd.f32 %v2914, %v2915
    %v2917 = vrot.slane %v2733, 4
    %v2918 = vadd.f32 %v2733, %v2917
    %v2919 = vrot.slane %v2918, 2
    %v2920 = vadd.f32 %v2918, %v2919
    %v2921 = vrot.slane %v2920, 1
    %v2922 = vadd.f32 %v2920, %v2921
    %v2923 = vrot.slane %v2735, 4
    %v2924 = vadd.f32 %v2735, %v2923
    %v2925 = vrot.slane %v2924, 2
    %v2926 = vadd.f32 %v2924, %v2925
    %v2927 = vrot.slane %v2926, 1
    %v2928 = vadd.f32 %v2926, %v2927
    %v2929 = vrot.slane %v2815, 4
    %v2930 = vadd.f32 %v2815, %v2929
    %v2931 = vrot.slane %v2930, 2
    %v2932 = vadd.f32 %v2930, %v2931
    %v2933 = vrot.slane %v2932, 1
    %v2934 = vadd.f32 %v2932, %v2933
    %v2935 = vrot.slane %v2817, 4
    %v2936 = vadd.f32 %v2817, %v2935
    %v2937 = vrot.slane %v2936, 2
    %v2938 = vadd.f32 %v2936, %v2937
    %v2939 = vrot.slane %v2938, 1
    %v2940 = vadd.f32 %v2938, %v2939
    %v2941 = vrot.slane %v2897, 4
    %v2942 = vadd.f32 %v2897, %v2941
    %v2943 = vrot.slane %v2942, 2
    %v2944 = vadd.f32 %v2942, %v2943
    %v2945 = vrot.slane %v2944, 1
    %v2946 = vadd.f32 %v2944, %v2945
    %v2947 = vrot.slane %v2899, 4
    %v2948 = vadd.f32 %v2899, %v2947
    %v2949 = vrot.slane %v2948, 2
    %v2950 = vadd.f32 %v2948, %v2949
    %v2951 = vrot.slane %v2950, 1
    %v2952 = vadd.f32 %v2950, %v2951
    %v2953 = vmul.f32 %v2910, 0.125
    %v2954 = vmul.f32 %v2916, 0.125
    %v2955 = vmul.f32 %v2922, 0.125
    %v2956 = vmul.f32 %v2928, 0.125
    %v2957 = vmul.f32 %v2934, 0.125
    %v2958 = vmul.f32 %v2940, 0.125
    %v2959 = vmul.f32 %v2946, 0.125
    %v2960 = vmul.f32 %v2952, 0.125
    %v2961 = vmul.f32 %v2651, %v2651
    %v2962 = vmul.f32 %v2653, %v2653
    %v2963 = vmul.f32 %v2733, %v2733
    %v2964 = vmul.f32 %v2735, %v2735
    %v2965 = vmul.f32 %v2815, %v2815
    %v2966 = vmul.f32 %v2817, %v2817
    %v2967 = vmul.f32 %v2897, %v2897
    %v2968 = vmul.f32 %v2899, %v2899
    %v2969 = vrot.slane %v2961, 4
    %v2970 = vadd.f32 %v2961, %v2969
    %v2971 = vrot.slane %v2970, 2
    %v2972 = vadd.f32 %v2970, %v2971
    %v2973 = vrot.slane %v2972, 1
    %v2974 = vadd.f32 %v2972, %v2973
    %v2975 = vrot.slane %v2962, 4
    %v2976 = vadd.f32 %v2962, %v2975
    %v2977 = vrot.slane %v2976, 2
    %v2978 = vadd.f32 %v2976, %v2977
    %v2979 = vrot.slane %v2978, 1
    %v2980 = vadd.f32 %v2978, %v2979
    %v2981 = vrot.slane %v2963, 4
    %v2982 = vadd.f32 %v2963, %v2981
    %v2983 = vrot.slane %v2982, 2
    %v2984 = vadd.f32 %v2982, %v2983
    %v2985 = vrot.slane %v2984, 1
    %v2986 = vadd.f32 %v2984, %v2985
    %v2987 = vrot.slane %v2964, 4
    %v2988 = vadd.f32 %v2964, %v2987
    %v2989 = vrot.slane %v2988, 2
    %v2990 = vadd.f32 %v2988, %v2989
    %v2991 = vrot.slane %v2990, 1
    %v2992 = vadd.f32 %v2990, %v2991
    %v2993 = vrot.slane %v2965, 4
    %v2994 = vadd.f32 %v2965, %v2993
    %v2995 = vrot.slane %v2994, 2
    %v2996 = vadd.f32 %v2994, %v2995
    %v2997 = vrot.slane %v2996, 1
    %v2998 = vadd.f32 %v2996, %v2997
    %v2999 = vrot.slane %v2966, 4
    %v3000 = vadd.f32 %v2966, %v2999
    %v3001 = vrot.slane %v3000, 2
    %v3002 = vadd.f32 %v3000, %v3001
    %v3003 = vrot.slane %v3002, 1
    %v3004 = vadd.f32 %v3002, %v3003
    %v3005 = vrot.slane %v2967, 4
    %v3006 = vadd.f32 %v2967, %v3005
    %v3007 = vrot.slane %v3006, 2
    %v3008 = vadd.f32 %v3006, %v3007
    %v3009 = vrot.slane %v3008, 1
    %v3010 = vadd.f32 %v3008, %v3009
    %v3011 = vrot.slane %v2968, 4
    %v3012 = vadd.f32 %v2968, %v3011
    %v3013 = vrot.slane %v3012, 2
    %v3014 = vadd.f32 %v3012, %v3013
    %v3015 = vrot.slane %v3014, 1
    %v3016 = vadd.f32 %v3014, %v3015
    %v3017 = vmul.f32 %v2974, 0.125
    %v3018 = vmul.f32 %v2980, 0.125
    %v3019 = vmul.f32 %v2986, 0.125
    %v3020 = vmul.f32 %v2992, 0.125
    %v3021 = vmul.f32 %v2998, 0.125
    %v3022 = vmul.f32 %v3004, 0.125
    %v3023 = vmul.f32 %v3010, 0.125
    %v3024 = vmul.f32 %v3016, 0.125
    %v3025 = vmul.f32 %v2953, %v2953
    %v3026 = vmul.f32 %v2954, %v2954
    %v3027 = vmul.f32 %v2955, %v2955
    %v3028 = vmul.f32 %v2956, %v2956
    %v3029 = vmul.f32 %v2957, %v2957
    %v3030 = vmul.f32 %v2958, %v2958
    %v3031 = vmul.f32 %v2959, %v2959
    %v3032 = vmul.f32 %v2960, %v2960
    %v3033 = vsub.f32 %v3017, %v3025
    %v3034 = vsub.f32 %v3018, %v3026
    %v3035 = vsub.f32 %v3019, %v3027
    %v3036 = vsub.f32 %v3020, %v3028
    %v3037 = vsub.f32 %v3021, %v3029
    %v3038 = vsub.f32 %v3022, %v3030
    %v3039 = vsub.f32 %v3023, %v3031
    %v3040 = vsub.f32 %v3024, %v3032
    %v3041 = vmax.f32 %v3033, 0.0
    %v3042 = vmax.f32 %v3034, 0.0
    %v3043 = vmax.f32 %v3035, 0.0
    %v3044 = vmax.f32 %v3036, 0.0
    %v3045 = vmax.f32 %v3037, 0.0
    %v3046 = vmax.f32 %v3038, 0.0
    %v3047 = vmax.f32 %v3039, 0.0
    %v3048 = vmax.f32 %v3040, 0.0
    %v3049 = vadd.f32 %v3041, 0.8
    %v3050 = vadd.f32 %v3042, 0.8
    %v3051 = vadd.f32 %v3043, 0.8
    %v3052 = vadd.f32 %v3044, 0.8
    %v3053 = vadd.f32 %v3045, 0.8
    %v3054 = vadd.f32 %v3046, 0.8
    %v3055 = vadd.f32 %v3047, 0.8
    %v3056 = vadd.f32 %v3048, 0.8
    %v3057 = vrsqrt.pop %v3049
    %v3058 = vrsqrt.pop %v3050
    %v3059 = vrsqrt.pop %v3051
    %v3060 = vrsqrt.pop %v3052
    %v3061 = vrsqrt.pop %v3053
    %v3062 = vrsqrt.pop %v3054
    %v3063 = vrsqrt.pop %v3055
    %v3064 = vrsqrt.pop %v3056
    %v3073 = vcombine.low %v3057, %v3058
    %v3074 = vcombine.low %v3059, %v3060
    %v3075 = vcombine.low %v3061, %v3062
    %v3076 = vcombine.low %v3063, %v3064
    %v3078 = vunpack.c.l.s4 1966171168
    %v3079 = vunpack.c.0.s8 %v3078
    %v3080 = vlaneseq
    %v3081 = vshrl.u32 %v3080, 7
    %v3082 = vsub.s32 %v3079, %v3081
    %v3083 = vrot.slane %v3073, %v3082
    %v3085 = vunpack.c.l.s4 1966171168
    %v3086 = vunpack.c.0.s8 %v3085
    %v3087 = vlaneseq
    %v3088 = vshrl.u32 %v3087, 7
    %v3089 = vsub.s32 %v3086, %v3088
    %v3090 = vrot.slane %v3074, %v3089
    %v3092 = vunpack.c.l.s4 1966171168
    %v3093 = vunpack.c.0.s8 %v3092
    %v3094 = vlaneseq
    %v3095 = vshrl.u32 %v3094, 7
    %v3096 = vsub.s32 %v3093, %v3095
    %v3097 = vrot.slane %v3075, %v3096
    %v3099 = vunpack.c.l.s4 1966171168
    %v3100 = vunpack.c.0.s8 %v3099
    %v3101 = vlaneseq
    %v3102 = vshrl.u32 %v3101, 7
    %v3103 = vsub.s32 %v3100, %v3102
    %v3104 = vrot.slane %v3076, %v3103
    %v3105 = vcombine.low %v3083, %v3090
    %v3106 = vcombine.low %v3097, %v3104
    %v3108 = vunpack.c.l.s4 1966171168
    %v3109 = vunpack.c.0.s8 %v3108
    %v3110 = vlaneseq
    %v3111 = vshrl.u32 %v3110, 7
    %v3112 = vsub.s32 %v3109, %v3111
    %v3113 = vrot.slane %v3105, %v3112
    %v3115 = vunpack.c.l.s4 1966171168
    %v3116 = vunpack.c.0.s8 %v3115
    %v3117 = vlaneseq
    %v3118 = vshrl.u32 %v3117, 7
    %v3119 = vsub.s32 %v3116, %v3118
    %v3120 = vrot.slane %v3106, %v3119
    %v3121 = vcombine.low %v3113, %v3120
    %v3123 = vmul.f32 %v2903, %v3121
    %v3125 = vlaneseq
    %v3126 = vshrl.u32 %v3125, 7
    %v3127 = vsub.s32 0, %v3126
    %v3128 = vrot.slane %v3123, %v3127
    %v3129 = vlaneseq
    %v3130 = vshrl.u32 %v3129, 7
    %v3131 = vsub.s32 1, %v3130
    %v3132 = vrot.slane %v3123, %v3131
    %v3133 = vlaneseq
    %v3134 = vshrl.u32 %v3133, 7
    %v3135 = vsub.s32 2, %v3134
    %v3136 = vrot.slane %v3123, %v3135
    %v3137 = vlaneseq
    %v3138 = vshrl.u32 %v3137, 7
    %v3139 = vsub.s32 3, %v3138
    %v3140 = vrot.slane %v3123, %v3139
    %v3141 = vlaneseq
    %v3142 = vshrl.u32 %v3141, 7
    %v3143 = vsub.s32 4, %v3142
    %v3144 = vrot.slane %v3123, %v3143
    %v3145 = vlaneseq
    %v3146 = vshrl.u32 %v3145, 7
    %v3147 = vsub.s32 5, %v3146
    %v3148 = vrot.slane %v3123, %v3147
    %v3149 = vlaneseq
    %v3150 = vshrl.u32 %v3149, 7
    %v3151 = vsub.s32 6, %v3150
    %v3152 = vrot.slane %v3123, %v3151
    %v3153 = vlaneseq
    %v3154 = vshrl.u32 %v3153, 7
    %v3155 = vsub.s32 7, %v3154
    %v3156 = vrot.slane %v3123, %v3155
    %v3165 = vmul.f32 %v2953, %v3128
    %v3166 = vmul.f32 %v2954, %v3132
    %v3167 = vmul.f32 %v2955, %v3136
    %v3168 = vmul.f32 %v2956, %v3140
    %v3169 = vmul.f32 %v2957, %v3144
    %v3170 = vmul.f32 %v2958, %v3148
    %v3171 = vmul.f32 %v2959, %v3152
    %v3172 = vmul.f32 %v2960, %v3156
    %v3181 = vcombine.low %v3165, %v3166
    %v3182 = vcombine.low %v3167, %v3168
    %v3183 = vcombine.low %v3169, %v3170
    %v3184 = vcombine.low %v3171, %v3172
    %v3186 = vunpack.c.l.s4 1966171168
    %v3187 = vunpack.c.0.s8 %v3186
    %v3188 = vlaneseq
    %v3189 = vshrl.u32 %v3188, 7
    %v3190 = vsub.s32 %v3187, %v3189
    %v3191 = vrot.slane %v3181, %v3190
    %v3193 = vunpack.c.l.s4 1966171168
    %v3194 = vunpack.c.0.s8 %v3193
    %v3195 = vlaneseq
    %v3196 = vshrl.u32 %v3195, 7
    %v3197 = vsub.s32 %v3194, %v3196
    %v3198 = vrot.slane %v3182, %v3197
    %v3200 = vunpack.c.l.s4 1966171168
    %v3201 = vunpack.c.0.s8 %v3200
    %v3202 = vlaneseq
    %v3203 = vshrl.u32 %v3202, 7
    %v3204 = vsub.s32 %v3201, %v3203
    %v3205 = vrot.slane %v3183, %v3204
    %v3207 = vunpack.c.l.s4 1966171168
    %v3208 = vunpack.c.0.s8 %v3207
    %v3209 = vlaneseq
    %v3210 = vshrl.u32 %v3209, 7
    %v3211 = vsub.s32 %v3208, %v3210
    %v3212 = vrot.slane %v3184, %v3211
    %v3213 = vcombine.low %v3191, %v3198
    %v3214 = vcombine.low %v3205, %v3212
    %v3216 = vunpack.c.l.s4 1966171168
    %v3217 = vunpack.c.0.s8 %v3216
    %v3218 = vlaneseq
    %v3219 = vshrl.u32 %v3218, 7
    %v3220 = vsub.s32 %v3217, %v3219
    %v3221 = vrot.slane %v3213, %v3220
    %v3223 = vunpack.c.l.s4 1966171168
    %v3224 = vunpack.c.0.s8 %v3223
    %v3225 = vlaneseq
    %v3226 = vshrl.u32 %v3225, 7
    %v3227 = vsub.s32 %v3224, %v3226
    %v3228 = vrot.slane %v3214, %v3227
    %v3229 = vcombine.low %v3221, %v3228
    %v3231 = vsub.f32 %v2904, %v3229
    %v3232 = vmul.f32 %v2651, %v3128
    %v3233 = vmul.f32 %v2653, %v3132
    %v3234 = vmul.f32 %v2733, %v3136
    %v3235 = vmul.f32 %v2735, %v3140
    %v3236 = vmul.f32 %v2815, %v3144
    %v3237 = vmul.f32 %v2817, %v3148
    %v3238 = vmul.f32 %v2897, %v3152
    %v3239 = vmul.f32 %v2899, %v3156
    %v3241 = vlaneseq
    %v3242 = vshrl.u32 %v3241, 7
    %v3243 = vsub.s32 0, %v3242
    %v3244 = vrot.slane %v3231, %v3243
    %v3245 = vlaneseq
    %v3246 = vshrl.u32 %v3245, 7
    %v3247 = vsub.s32 1, %v3246
    %v3248 = vrot.slane %v3231, %v3247
    %v3249 = vlaneseq
    %v3250 = vshrl.u32 %v3249, 7
    %v3251 = vsub.s32 2, %v3250
    %v3252 = vrot.slane %v3231, %v3251
    %v3253 = vlaneseq
    %v3254 = vshrl.u32 %v3253, 7
    %v3255 = vsub.s32 3, %v3254
    %v3256 = vrot.slane %v3231, %v3255
    %v3257 = vlaneseq
    %v3258 = vshrl.u32 %v3257, 7
    %v3259 = vsub.s32 4, %v3258
    %v3260 = vrot.slane %v3231, %v3259
    %v3261 = vlaneseq
    %v3262 = vshrl.u32 %v3261, 7
    %v3263 = vsub.s32 5, %v3262
    %v3264 = vrot.slane %v3231, %v3263
    %v3265 = vlaneseq
    %v3266 = vshrl.u32 %v3265, 7
    %v3267 = vsub.s32 6, %v3266
    %v3268 = vrot.slane %v3231, %v3267
    %v3269 = vlaneseq
    %v3270 = vshrl.u32 %v3269, 7
    %v3271 = vsub.s32 7, %v3270
    %v3272 = vrot.slane %v3231, %v3271
    %v3281 = vadd.f32 %v3232, %v3244
    %v3282 = vadd.f32 %v3233, %v3248
    %v3283 = vadd.f32 %v3234, %v3252
    %v3284 = vadd.f32 %v3235, %v3256
    %v3285 = vadd.f32 %v3236, %v3260
    %v3286 = vadd.f32 %v3237, %v3264
    %v3287 = vadd.f32 %v3238, %v3268
    %v3288 = vadd.f32 %v3239, %v3272
    %v3289 = vmul.f32 %v3281, 0.2
    %v3290 = vmul.f32 %v3282, 0.2
    %v3291 = vmul.f32 %v3283, 0.2
    %v3292 = vmul.f32 %v3284, 0.2
    %v3293 = vmul.f32 %v3285, 0.2
    %v3294 = vmul.f32 %v3286, 0.2
    %v3295 = vmul.f32 %v3287, 0.2
    %v3296 = vmul.f32 %v3288, 0.2
    %v3297 = vmax.f32 %v3281, %v3289
    %v3298 = vmax.f32 %v3282, %v3290
    %v3299 = vmax.f32 %v3283, %v3291
    %v3300 = vmax.f32 %v3284, %v3292
    %v3301 = vmax.f32 %v3285, %v3293
    %v3302 = vmax.f32 %v3286, %v3294
    %v3303 = vmax.f32 %v3287, %v3295
    %v3304 = vmax.f32 %v3288, %v3296
    %v3305 = vpack.c.bf16 %v3297, %v3297
    %v3306 = vpack.c.bf16 %v3298, %v3298
    %v3307 = vpack.c.bf16 %v3299, %v3299
    %v3308 = vpack.c.bf16 %v3300, %v3300
    %v3309 = vpack.c.bf16 %v3301, %v3301
    %v3310 = vpack.c.bf16 %v3302, %v3302
    %v3311 = vpack.c.bf16 %v3303, %v3303
    %v3312 = vpack.c.bf16 %v3304, %v3304
    %v3313 = vld [vmem:[%s5] sm:$0xf]
    %v3314 = vld [vmem:[%s5 + $0x4] sm:$0xf]
    %v3315 = vld [vmem:[%s5 + $0x8] sm:$0xf]
    %v3316 = vld [vmem:[%s5 + $0xc] sm:$0xf]
    %v3317 = vld [vmem:[%s5 + $0x10] sm:$0xf]
    %v3318 = vld [vmem:[%s5 + $0x14] sm:$0xf]
    %v3319 = vld [vmem:[%s5 + $0x18] sm:$0xf]
    %v3320 = vld [vmem:[%s5 + $0x1c] sm:$0xf]
    %v3321 = vld [vmem:[%s5 + $0x20] sm:$0xf]
    %v3322 = vld [vmem:[%s5 + $0x24] sm:$0xf]
    %v3323 = vld [vmem:[%s5 + $0x28] sm:$0xf]
    %v3324 = vld [vmem:[%s5 + $0x2c] sm:$0xf]
    %v3325 = vld [vmem:[%s5 + $0x30] sm:$0xf]
    %v3326 = vld [vmem:[%s5 + $0x34] sm:$0xf]
    %v3327 = vld [vmem:[%s5 + $0x38] sm:$0xf]
    %v3328 = vld [vmem:[%s5 + $0x3c] sm:$0xf]
    %v3329 = vld [vmem:[%s5 + $0x40] sm:$0xf]
    %v3330 = vld [vmem:[%s5 + $0x44] sm:$0xf]
    %v3331 = vld [vmem:[%s5 + $0x48] sm:$0xf]
    %v3332 = vld [vmem:[%s5 + $0x4c] sm:$0xf]
    %v3333 = vld [vmem:[%s5 + $0x50] sm:$0xf]
    %v3334 = vld [vmem:[%s5 + $0x54] sm:$0xf]
    %v3335 = vld [vmem:[%s5 + $0x58] sm:$0xf]
    %v3336 = vld [vmem:[%s5 + $0x5c] sm:$0xf]
    %v3337 = vld [vmem:[%s5 + $0x60] sm:$0xf]
    %v3338 = vld [vmem:[%s5 + $0x64] sm:$0xf]
    %v3339 = vld [vmem:[%s5 + $0x68] sm:$0xf]
    %v3340 = vld [vmem:[%s5 + $0x6c] sm:$0xf]
    %v3341 = vld [vmem:[%s5 + $0x70] sm:$0xf]
    %v3342 = vld [vmem:[%s5 + $0x74] sm:$0xf]
    %v3343 = vld [vmem:[%s5 + $0x78] sm:$0xf]
    %v3344 = vld [vmem:[%s5 + $0x7c] sm:$0xf]
    %v3345 = vld [vmem:[%s5 + $0x80] sm:$0xf]
    %v3346 = vld [vmem:[%s5 + $0x84] sm:$0xf]
    %v3347 = vld [vmem:[%s5 + $0x88] sm:$0xf]
    %v3348 = vld [vmem:[%s5 + $0x8c] sm:$0xf]
    %v3349 = vld [vmem:[%s5 + $0x90] sm:$0xf]
    %v3350 = vld [vmem:[%s5 + $0x94] sm:$0xf]
    %v3351 = vld [vmem:[%s5 + $0x98] sm:$0xf]
    %v3352 = vld [vmem:[%s5 + $0x9c] sm:$0xf]
    %v3353 = vld [vmem:[%s5 + $0xa0] sm:$0xf]
    %v3354 = vld [vmem:[%s5 + $0xa4] sm:$0xf]
    %v3355 = vld [vmem:[%s5 + $0xa8] sm:$0xf]
    %v3356 = vld [vmem:[%s5 + $0xac] sm:$0xf]
    %v3357 = vld [vmem:[%s5 + $0xb0] sm:$0xf]
    %v3358 = vld [vmem:[%s5 + $0xb4] sm:$0xf]
    %v3359 = vld [vmem:[%s5 + $0xb8] sm:$0xf]
    %v3360 = vld [vmem:[%s5 + $0xbc] sm:$0xf]
    %v3361 = vld [vmem:[%s5 + $0xc0] sm:$0xf]
    %v3362 = vld [vmem:[%s5 + $0xc4] sm:$0xf]
    %v3363 = vld [vmem:[%s5 + $0xc8] sm:$0xf]
    %v3364 = vld [vmem:[%s5 + $0xcc] sm:$0xf]
    %v3365 = vld [vmem:[%s5 + $0xd0] sm:$0xf]
    %v3366 = vld [vmem:[%s5 + $0xd4] sm:$0xf]
    %v3367 = vld [vmem:[%s5 + $0xd8] sm:$0xf]
    %v3368 = vld [vmem:[%s5 + $0xdc] sm:$0xf]
    %v3369 = vld [vmem:[%s5 + $0xe0] sm:$0xf]
    %v3370 = vld [vmem:[%s5 + $0xe4] sm:$0xf]
    %v3371 = vld [vmem:[%s5 + $0xe8] sm:$0xf]
    %v3372 = vld [vmem:[%s5 + $0xec] sm:$0xf]
    %v3373 = vld [vmem:[%s5 + $0xf0] sm:$0xf]
    %v3374 = vld [vmem:[%s5 + $0xf4] sm:$0xf]
    %v3375 = vld [vmem:[%s5 + $0xf8] sm:$0xf]
    %v3376 = vld [vmem:[%s5 + $0xfc] sm:$0xf]
    %v3377 = vld [vmem:[%s5 + $0x100] sm:$0xf]
    %v3378 = vld [vmem:[%s5 + $0x104] sm:$0xf]
    %v3379 = vld [vmem:[%s5 + $0x108] sm:$0xf]
    %v3380 = vld [vmem:[%s5 + $0x10c] sm:$0xf]
    %v3381 = vld [vmem:[%s5 + $0x110] sm:$0xf]
    %v3382 = vld [vmem:[%s5 + $0x114] sm:$0xf]
    %v3383 = vld [vmem:[%s5 + $0x118] sm:$0xf]
    %v3384 = vld [vmem:[%s5 + $0x11c] sm:$0xf]
    %v3385 = vld [vmem:[%s5 + $0x120] sm:$0xf]
    %v3386 = vld [vmem:[%s5 + $0x124] sm:$0xf]
    %v3387 = vld [vmem:[%s5 + $0x128] sm:$0xf]
    %v3388 = vld [vmem:[%s5 + $0x12c] sm:$0xf]
    %v3389 = vld [vmem:[%s5 + $0x130] sm:$0xf]
    %v3390 = vld [vmem:[%s5 + $0x134] sm:$0xf]
    %v3391 = vld [vmem:[%s5 + $0x138] sm:$0xf]
    %v3392 = vld [vmem:[%s5 + $0x13c] sm:$0xf]
    %v3393 = vld [vmem:[%s5 + $0x140] sm:$0xf]
    %v3394 = vld [vmem:[%s5 + $0x144] sm:$0xf]
    %v3395 = vld [vmem:[%s5 + $0x148] sm:$0xf]
    %v3396 = vld [vmem:[%s5 + $0x14c] sm:$0xf]
    %v3397 = vld [vmem:[%s5 + $0x150] sm:$0xf]
    %v3398 = vld [vmem:[%s5 + $0x154] sm:$0xf]
    %v3399 = vld [vmem:[%s5 + $0x158] sm:$0xf]
    %v3400 = vld [vmem:[%s5 + $0x15c] sm:$0xf]
    %v3401 = vld [vmem:[%s5 + $0x160] sm:$0xf]
    %v3402 = vld [vmem:[%s5 + $0x164] sm:$0xf]
    %v3403 = vld [vmem:[%s5 + $0x168] sm:$0xf]
    %v3404 = vld [vmem:[%s5 + $0x16c] sm:$0xf]
    %v3405 = vld [vmem:[%s5 + $0x170] sm:$0xf]
    %v3406 = vld [vmem:[%s5 + $0x174] sm:$0xf]
    %v3407 = vld [vmem:[%s5 + $0x178] sm:$0xf]
    %v3408 = vld [vmem:[%s5 + $0x17c] sm:$0xf]
    %v3409 = vld [vmem:[%s5 + $0x180] sm:$0xf]
    %v3410 = vld [vmem:[%s5 + $0x184] sm:$0xf]
    %v3411 = vld [vmem:[%s5 + $0x188] sm:$0xf]
    %v3412 = vld [vmem:[%s5 + $0x18c] sm:$0xf]
    %v3413 = vld [vmem:[%s5 + $0x190] sm:$0xf]
    %v3414 = vld [vmem:[%s5 + $0x194] sm:$0xf]
    %v3415 = vld [vmem:[%s5 + $0x198] sm:$0xf]
    %v3416 = vld [vmem:[%s5 + $0x19c] sm:$0xf]
    %v3417 = vld [vmem:[%s5 + $0x1a0] sm:$0xf]
    %v3418 = vld [vmem:[%s5 + $0x1a4] sm:$0xf]
    %v3419 = vld [vmem:[%s5 + $0x1a8] sm:$0xf]
    %v3420 = vld [vmem:[%s5 + $0x1ac] sm:$0xf]
    %v3421 = vld [vmem:[%s5 + $0x1b0] sm:$0xf]
    %v3422 = vld [vmem:[%s5 + $0x1b4] sm:$0xf]
    %v3423 = vld [vmem:[%s5 + $0x1b8] sm:$0xf]
    %v3424 = vld [vmem:[%s5 + $0x1bc] sm:$0xf]
    %v3425 = vld [vmem:[%s5 + $0x1c0] sm:$0xf]
    %v3426 = vld [vmem:[%s5 + $0x1c4] sm:$0xf]
    %v3427 = vld [vmem:[%s5 + $0x1c8] sm:$0xf]
    %v3428 = vld [vmem:[%s5 + $0x1cc] sm:$0xf]
    %v3429 = vld [vmem:[%s5 + $0x1d0] sm:$0xf]
    %v3430 = vld [vmem:[%s5 + $0x1d4] sm:$0xf]
    %v3431 = vld [vmem:[%s5 + $0x1d8] sm:$0xf]
    %v3432 = vld [vmem:[%s5 + $0x1dc] sm:$0xf]
    %v3433 = vld [vmem:[%s5 + $0x1e0] sm:$0xf]
    %v3434 = vld [vmem:[%s5 + $0x1e4] sm:$0xf]
    %v3435 = vld [vmem:[%s5 + $0x1e8] sm:$0xf]
    %v3436 = vld [vmem:[%s5 + $0x1ec] sm:$0xf]
    %v3437 = vld [vmem:[%s5 + $0x1f0] sm:$0xf]
    %v3438 = vld [vmem:[%s5 + $0x1f4] sm:$0xf]
    %v3439 = vld [vmem:[%s5 + $0x1f8] sm:$0xf]
    %v3440 = vld [vmem:[%s5 + $0x1fc] sm:$0xf]
    %v3441 = vld [vmem:[%s6 + $0x1d] sm:$0x1]
    %v3443 = vlaneseq
    %v3444 = vshrl.u32 %v3443, 7
    %v3445 = vsub.s32 0, %v3444
    %v3446 = vrot.slane %v3441, %v3445
    %v3576 = vunpack.c.l.b16 %v3313
    %v3577 = vunpack.c.l.b16 %v3314
    %v3578 = vunpack.c.l.b16 %v3315
    %v3579 = vunpack.c.l.b16 %v3316
    %v3580 = vunpack.c.l.b16 %v3317
    %v3581 = vunpack.c.l.b16 %v3318
    %v3582 = vunpack.c.l.b16 %v3319
    %v3583 = vunpack.c.l.b16 %v3320
    %v3584 = vunpack.c.l.b16 %v3321
    %v3585 = vunpack.c.l.b16 %v3322
    %v3586 = vunpack.c.l.b16 %v3323
    %v3587 = vunpack.c.l.b16 %v3324
    %v3588 = vunpack.c.l.b16 %v3325
    %v3589 = vunpack.c.l.b16 %v3326
    %v3590 = vunpack.c.l.b16 %v3327
    %v3591 = vunpack.c.l.b16 %v3328
    %v3592 = vunpack.c.l.b16 %v3329
    %v3593 = vunpack.c.l.b16 %v3330
    %v3594 = vunpack.c.l.b16 %v3331
    %v3595 = vunpack.c.l.b16 %v3332
    %v3596 = vunpack.c.l.b16 %v3333
    %v3597 = vunpack.c.l.b16 %v3334
    %v3598 = vunpack.c.l.b16 %v3335
    %v3599 = vunpack.c.l.b16 %v3336
    %v3600 = vunpack.c.l.b16 %v3337
    %v3601 = vunpack.c.l.b16 %v3338
    %v3602 = vunpack.c.l.b16 %v3339
    %v3603 = vunpack.c.l.b16 %v3340
    %v3604 = vunpack.c.l.b16 %v3341
    %v3605 = vunpack.c.l.b16 %v3342
    %v3606 = vunpack.c.l.b16 %v3343
    %v3607 = vunpack.c.l.b16 %v3344
    %v3608 = vunpack.c.l.b16 %v3345
    %v3609 = vunpack.c.l.b16 %v3346
    %v3610 = vunpack.c.l.b16 %v3347
    %v3611 = vunpack.c.l.b16 %v3348
    %v3612 = vunpack.c.l.b16 %v3349
    %v3613 = vunpack.c.l.b16 %v3350
    %v3614 = vunpack.c.l.b16 %v3351
    %v3615 = vunpack.c.l.b16 %v3352
    %v3616 = vunpack.c.l.b16 %v3353
    %v3617 = vunpack.c.l.b16 %v3354
    %v3618 = vunpack.c.l.b16 %v3355
    %v3619 = vunpack.c.l.b16 %v3356
    %v3620 = vunpack.c.l.b16 %v3357
    %v3621 = vunpack.c.l.b16 %v3358
    %v3622 = vunpack.c.l.b16 %v3359
    %v3623 = vunpack.c.l.b16 %v3360
    %v3624 = vunpack.c.l.b16 %v3361
    %v3625 = vunpack.c.l.b16 %v3362
    %v3626 = vunpack.c.l.b16 %v3363
    %v3627 = vunpack.c.l.b16 %v3364
    %v3628 = vunpack.c.l.b16 %v3365
    %v3629 = vunpack.c.l.b16 %v3366
    %v3630 = vunpack.c.l.b16 %v3367
    %v3631 = vunpack.c.l.b16 %v3368
    %v3632 = vunpack.c.l.b16 %v3369
    %v3633 = vunpack.c.l.b16 %v3370
    %v3634 = vunpack.c.l.b16 %v3371
    %v3635 = vunpack.c.l.b16 %v3372
    %v3636 = vunpack.c.l.b16 %v3373
    %v3637 = vunpack.c.l.b16 %v3374
    %v3638 = vunpack.c.l.b16 %v3375
    %v3639 = vunpack.c.l.b16 %v3376
    %v3640 = vunpack.c.l.b16 %v3377
    %v3641 = vunpack.c.l.b16 %v3378
    %v3642 = vunpack.c.l.b16 %v3379
    %v3643 = vunpack.c.l.b16 %v3380
    %v3644 = vunpack.c.l.b16 %v3381
    %v3645 = vunpack.c.l.b16 %v3382
    %v3646 = vunpack.c.l.b16 %v3383
    %v3647 = vunpack.c.l.b16 %v3384
    %v3648 = vunpack.c.l.b16 %v3385
    %v3649 = vunpack.c.l.b16 %v3386
    %v3650 = vunpack.c.l.b16 %v3387
    %v3651 = vunpack.c.l.b16 %v3388
    %v3652 = vunpack.c.l.b16 %v3389
    %v3653 = vunpack.c.l.b16 %v3390
    %v3654 = vunpack.c.l.b16 %v3391
    %v3655 = vunpack.c.l.b16 %v3392
    %v3656 = vunpack.c.l.b16 %v3393
    %v3657 = vunpack.c.l.b16 %v3394
    %v3658 = vunpack.c.l.b16 %v3395
    %v3659 = vunpack.c.l.b16 %v3396
    %v3660 = vunpack.c.l.b16 %v3397
    %v3661 = vunpack.c.l.b16 %v3398
    %v3662 = vunpack.c.l.b16 %v3399
    %v3663 = vunpack.c.l.b16 %v3400
    %v3664 = vunpack.c.l.b16 %v3401
    %v3665 = vunpack.c.l.b16 %v3402
    %v3666 = vunpack.c.l.b16 %v3403
    %v3667 = vunpack.c.l.b16 %v3404
    %v3668 = vunpack.c.l.b16 %v3405
    %v3669 = vunpack.c.l.b16 %v3406
    %v3670 = vunpack.c.l.b16 %v3407
    %v3671 = vunpack.c.l.b16 %v3408
    %v3672 = vunpack.c.l.b16 %v3409
    %v3673 = vunpack.c.l.b16 %v3410
    %v3674 = vunpack.c.l.b16 %v3411
    %v3675 = vunpack.c.l.b16 %v3412
    %v3676 = vunpack.c.l.b16 %v3413
    %v3677 = vunpack.c.l.b16 %v3414
    %v3678 = vunpack.c.l.b16 %v3415
    %v3679 = vunpack.c.l.b16 %v3416
    %v3680 = vunpack.c.l.b16 %v3417
    %v3681 = vunpack.c.l.b16 %v3418
    %v3682 = vunpack.c.l.b16 %v3419
    %v3683 = vunpack.c.l.b16 %v3420
    %v3684 = vunpack.c.l.b16 %v3421
    %v3685 = vunpack.c.l.b16 %v3422
    %v3686 = vunpack.c.l.b16 %v3423
    %v3687 = vunpack.c.l.b16 %v3424
    %v3688 = vunpack.c.l.b16 %v3425
    %v3689 = vunpack.c.l.b16 %v3426
    %v3690 = vunpack.c.l.b16 %v3427
    %v3691 = vunpack.c.l.b16 %v3428
    %v3692 = vunpack.c.l.b16 %v3429
    %v3693 = vunpack.c.l.b16 %v3430
    %v3694 = vunpack.c.l.b16 %v3431
    %v3695 = vunpack.c.l.b16 %v3432
    %v3696 = vunpack.c.l.b16 %v3433
    %v3697 = vunpack.c.l.b16 %v3434
    %v3698 = vunpack.c.l.b16 %v3435
    %v3699 = vunpack.c.l.b16 %v3436
    %v3700 = vunpack.c.l.b16 %v3437
    %v3701 = vunpack.c.l.b16 %v3438
    %v3702 = vunpack.c.l.b16 %v3439
    %v3703 = vunpack.c.l.b16 %v3440
    %v3704 = vpack.c.b16 %v3577, %v3576
    %v3705 = vpack.c.b16 %v3579, %v3578
    %v3706 = vpack.c.b16 %v3581, %v3580
    %v3707 = vpack.c.b16 %v3583, %v3582
    %v3708 = vpack.c.b16 %v3585, %v3584
    %v3709 = vpack.c.b16 %v3587, %v3586
    %v3710 = vpack.c.b16 %v3589, %v3588
    %v3711 = vpack.c.b16 %v3591, %v3590
    %v3712 = vpack.c.b16 %v3593, %v3592
    %v3713 = vpack.c.b16 %v3595, %v3594
    %v3714 = vpack.c.b16 %v3597, %v3596
    %v3715 = vpack.c.b16 %v3599, %v3598
    %v3716 = vpack.c.b16 %v3601, %v3600
    %v3717 = vpack.c.b16 %v3603, %v3602
    %v3718 = vpack.c.b16 %v3605, %v3604
    %v3719 = vpack.c.b16 %v3607, %v3606
    %v3720 = vpack.c.b16 %v3609, %v3608
    %v3721 = vpack.c.b16 %v3611, %v3610
    %v3722 = vpack.c.b16 %v3613, %v3612
    %v3723 = vpack.c.b16 %v3615, %v3614
    %v3724 = vpack.c.b16 %v3617, %v3616
    %v3725 = vpack.c.b16 %v3619, %v3618
    %v3726 = vpack.c.b16 %v3621, %v3620
    %v3727 = vpack.c.b16 %v3623, %v3622
    %v3728 = vpack.c.b16 %v3625, %v3624
    %v3729 = vpack.c.b16 %v3627, %v3626
    %v3730 = vpack.c.b16 %v3629, %v3628
    %v3731 = vpack.c.b16 %v3631, %v3630
    %v3732 = vpack.c.b16 %v3633, %v3632
    %v3733 = vpack.c.b16 %v3635, %v3634
    %v3734 = vpack.c.b16 %v3637, %v3636
    %v3735 = vpack.c.b16 %v3639, %v3638
    %v3736 = vpack.c.b16 %v3641, %v3640
    %v3737 = vpack.c.b16 %v3643, %v3642
    %v3738 = vpack.c.b16 %v3645, %v3644
    %v3739 = vpack.c.b16 %v3647, %v3646
    %v3740 = vpack.c.b16 %v3649, %v3648
    %v3741 = vpack.c.b16 %v3651, %v3650
    %v3742 = vpack.c.b16 %v3653, %v3652
    %v3743 = vpack.c.b16 %v3655, %v3654
    %v3744 = vpack.c.b16 %v3657, %v3656
    %v3745 = vpack.c.b16 %v3659, %v3658
    %v3746 = vpack.c.b16 %v3661, %v3660
    %v3747 = vpack.c.b16 %v3663, %v3662
    %v3748 = vpack.c.b16 %v3665, %v3664
    %v3749 = vpack.c.b16 %v3667, %v3666
    %v3750 = vpack.c.b16 %v3669, %v3668
    %v3751 = vpack.c.b16 %v3671, %v3670
    %v3752 = vpack.c.b16 %v3673, %v3672
    %v3753 = vpack.c.b16 %v3675, %v3674
    %v3754 = vpack.c.b16 %v3677, %v3676
    %v3755 = vpack.c.b16 %v3679, %v3678
    %v3756 = vpack.c.b16 %v3681, %v3680
    %v3757 = vpack.c.b16 %v3683, %v3682
    %v3758 = vpack.c.b16 %v3685, %v3684
    %v3759 = vpack.c.b16 %v3687, %v3686
    %v3760 = vpack.c.b16 %v3689, %v3688
    %v3761 = vpack.c.b16 %v3691, %v3690
    %v3762 = vpack.c.b16 %v3693, %v3692
    %v3763 = vpack.c.b16 %v3695, %v3694
    %v3764 = vpack.c.b16 %v3697, %v3696
    %v3765 = vpack.c.b16 %v3699, %v3698
    %v3766 = vpack.c.b16 %v3701, %v3700
    %v3767 = vpack.c.b16 %v3703, %v3702
    %3832 = vmatprep.subr.bf16.mxu0 0
    %3833 = vmatpush1.bf16.msra.mxu0 %v3704
    %3834 = vmatprep.subr.bf16.mxu0 0
    %3835 = vmatpush1.bf16.msra.mxu0 %v3705
    %3836 = vmatprep.subr.bf16.mxu0 0
    %3837 = vmatpush1.bf16.msra.mxu0 %v3706
    %3838 = vmatprep.subr.bf16.mxu0 0
    %3839 = vmatpush1.bf16.msra.mxu0 %v3707
    %3840 = vmatprep.subr.bf16.mxu0 0
    %3841 = vmatpush1.bf16.msra.mxu0 %v3708
    %3842 = vmatprep.subr.bf16.mxu0 0
    %3843 = vmatpush1.bf16.msra.mxu0 %v3709
    %3844 = vmatprep.subr.bf16.mxu0 0
    %3845 = vmatpush1.bf16.msra.mxu0 %v3710
    %3846 = vmatprep.subr.bf16.mxu0 0
    %3847 = vmatpush1.bf16.msra.mxu0 %v3711
    %3848 = vmatprep.subr.bf16.mxu0 0
    %3849 = vmatpush1.bf16.msra.mxu0 %v3712
    %3850 = vmatprep.subr.bf16.mxu0 0
    %3851 = vmatpush1.bf16.msra.mxu0 %v3713
    %3852 = vmatprep.subr.bf16.mxu0 0
    %3853 = vmatpush1.bf16.msra.mxu0 %v3714
    %3854 = vmatprep.subr.bf16.mxu0 0
    %3855 = vmatpush1.bf16.msra.mxu0 %v3715
    %3856 = vmatprep.subr.bf16.mxu0 0
    %3857 = vmatpush1.bf16.msra.mxu0 %v3716
    %3858 = vmatprep.subr.bf16.mxu0 0
    %3859 = vmatpush1.bf16.msra.mxu0 %v3717
    %3860 = vmatprep.subr.bf16.mxu0 0
    %3861 = vmatpush1.bf16.msra.mxu0 %v3718
    %3862 = vmatprep.subr.bf16.mxu0 0
    %3863 = vmatpush1.bf16.msra.mxu0 %v3719
    %3864 = vmatprep.mubr.bf16.mxu0 %v3306
    %3865 = vmatmul.mubr.bf16.gmra.mrb[0].mxu0 %v3305
    %v3866 = vpop.f32.mrb[0].mxu0
    %v3867 = vadd.f32 %v3446, %v3866
    %v3868 = vpop.f32.mrb[0].mxu0
    %v3869 = vpop.f32.mrb[0].mxu0
    %v3870 = vpop.f32.mrb[0].mxu0
    %3871 = vdwg.mxu0
    %3872 = vmatprep.subr.bf16.mxu0 0
    %3873 = vmatpush1.bf16.msra.mxu0 %v3720
    %3874 = vmatprep.subr.bf16.mxu0 0
    %3875 = vmatpush1.bf16.msra.mxu0 %v3721
    %3876 = vmatprep.subr.bf16.mxu0 0
    %3877 = vmatpush1.bf16.msra.mxu0 %v3722
    %3878 = vmatprep.subr.bf16.mxu0 0
    %3879 = vmatpush1.bf16.msra.mxu0 %v3723
    %3880 = vmatprep.subr.bf16.mxu0 0
    %3881 = vmatpush1.bf16.msra.mxu0 %v3724
    %3882 = vmatprep.subr.bf16.mxu0 0
    %3883 = vmatpush1.bf16.msra.mxu0 %v3725
    %3884 = vmatprep.subr.bf16.mxu0 0
    %3885 = vmatpush1.bf16.msra.mxu0 %v3726
    %3886 = vmatprep.subr.bf16.mxu0 0
    %3887 = vmatpush1.bf16.msra.mxu0 %v3727
    %3888 = vmatprep.subr.bf16.mxu0 0
    %3889 = vmatpush1.bf16.msra.mxu0 %v3728
    %3890 = vmatprep.subr.bf16.mxu0 0
    %3891 = vmatpush1.bf16.msra.mxu0 %v3729
    %3892 = vmatprep.subr.bf16.mxu0 0
    %3893 = vmatpush1.bf16.msra.mxu0 %v3730
    %3894 = vmatprep.subr.bf16.mxu0 0
    %3895 = vmatpush1.bf16.msra.mxu0 %v3731
    %3896 = vmatprep.subr.bf16.mxu0 0
    %3897 = vmatpush1.bf16.msra.mxu0 %v3732
    %3898 = vmatprep.subr.bf16.mxu0 0
    %3899 = vmatpush1.bf16.msra.mxu0 %v3733
    %3900 = vmatprep.subr.bf16.mxu0 0
    %3901 = vmatpush1.bf16.msra.mxu0 %v3734
    %3902 = vmatprep.subr.bf16.mxu0 0
    %3903 = vmatpush1.bf16.msra.mxu0 %v3735
    %3904 = vmatprep.mubr.bf16.mxu0 %v3308
    %3905 = vmatmul.mubr.bf16.gmra.mrb[0].mxu0 %v3307
    %v3906 = vpop.f32.mrb[0].mxu0
    %v3907 = vadd.f32 %v3867, %v3906
    %v3908 = vpop.f32.mrb[0].mxu0
    %v3909 = vpop.f32.mrb[0].mxu0
    %v3910 = vpop.f32.mrb[0].mxu0
    %3911 = vdwg.mxu0
    %3912 = vmatprep.subr.bf16.mxu0 0
    %3913 = vmatpush1.bf16.msra.mxu0 %v3736
    %3914 = vmatprep.subr.bf16.mxu0 0
    %3915 = vmatpush1.bf16.msra.mxu0 %v3737
    %3916 = vmatprep.subr.bf16.mxu0 0
    %3917 = vmatpush1.bf16.msra.mxu0 %v3738
    %3918 = vmatprep.subr.bf16.mxu0 0
    %3919 = vmatpush1.bf16.msra.mxu0 %v3739
    %3920 = vmatprep.subr.bf16.mxu0 0
    %3921 = vmatpush1.bf16.msra.mxu0 %v3740
    %3922 = vmatprep.subr.bf16.mxu0 0
    %3923 = vmatpush1.bf16.msra.mxu0 %v3741
    %3924 = vmatprep.subr.bf16.mxu0 0
    %3925 = vmatpush1.bf16.msra.mxu0 %v3742
    %3926 = vmatprep.subr.bf16.mxu0 0
    %3927 = vmatpush1.bf16.msra.mxu0 %v3743
    %3928 = vmatprep.subr.bf16.mxu0 0
    %3929 = vmatpush1.bf16.msra.mxu0 %v3744
    %3930 = vmatprep.subr.bf16.mxu0 0
    %3931 = vmatpush1.bf16.msra.mxu0 %v3745
    %3932 = vmatprep.subr.bf16.mxu0 0
    %3933 = vmatpush1.bf16.msra.mxu0 %v3746
    %3934 = vmatprep.subr.bf16.mxu0 0
    %3935 = vmatpush1.bf16.msra.mxu0 %v3747
    %3936 = vmatprep.subr.bf16.mxu0 0
    %3937 = vmatpush1.bf16.msra.mxu0 %v3748
    %3938 = vmatprep.subr.bf16.mxu0 0
    %3939 = vmatpush1.bf16.msra.mxu0 %v3749
    %3940 = vmatprep.subr.bf16.mxu0 0
    %3941 = vmatpush1.bf16.msra.mxu0 %v3750
    %3942 = vmatprep.subr.bf16.mxu0 0
    %3943 = vmatpush1.bf16.msra.mxu0 %v3751
    %3944 = vmatprep.mubr.bf16.mxu0 %v3310
    %3945 = vmatmul.mubr.bf16.gmra.mrb[0].mxu0 %v3309
    %v3946 = vpop.f32.mrb[0].mxu0
    %v3947 = vadd.f32 %v3907, %v3946
    %v3948 = vpop.f32.mrb[0].mxu0
    %v3949 = vpop.f32.mrb[0].mxu0
    %v3950 = vpop.f32.mrb[0].mxu0
    %3951 = vdwg.mxu0
    %3952 = vmatprep.subr.bf16.mxu0 0
    %3953 = vmatpush1.bf16.msra.mxu0 %v3752
    %3954 = vmatprep.subr.bf16.mxu0 0
    %3955 = vmatpush1.bf16.msra.mxu0 %v3753
    %3956 = vmatprep.subr.bf16.mxu0 0
    %3957 = vmatpush1.bf16.msra.mxu0 %v3754
    %3958 = vmatprep.subr.bf16.mxu0 0
    %3959 = vmatpush1.bf16.msra.mxu0 %v3755
    %3960 = vmatprep.subr.bf16.mxu0 0
    %3961 = vmatpush1.bf16.msra.mxu0 %v3756
    %3962 = vmatprep.subr.bf16.mxu0 0
    %3963 = vmatpush1.bf16.msra.mxu0 %v3757
    %3964 = vmatprep.subr.bf16.mxu0 0
    %3965 = vmatpush1.bf16.msra.mxu0 %v3758
    %3966 = vmatprep.subr.bf16.mxu0 0
    %3967 = vmatpush1.bf16.msra.mxu0 %v3759
    %3968 = vmatprep.subr.bf16.mxu0 0
    %3969 = vmatpush1.bf16.msra.mxu0 %v3760
    %3970 = vmatprep.subr.bf16.mxu0 0
    %3971 = vmatpush1.bf16.msra.mxu0 %v3761
    %3972 = vmatprep.subr.bf16.mxu0 0
    %3973 = vmatpush1.bf16.msra.mxu0 %v3762
    %3974 = vmatprep.subr.bf16.mxu0 0
    %3975 = vmatpush1.bf16.msra.mxu0 %v3763
    %3976 = vmatprep.subr.bf16.mxu0 0
    %3977 = vmatpush1.bf16.msra.mxu0 %v3764
    %3978 = vmatprep.subr.bf16.mxu0 0
    %3979 = vmatpush1.bf16.msra.mxu0 %v3765
    %3980 = vmatprep.subr.bf16.mxu0 0
    %3981 = vmatpush1.bf16.msra.mxu0 %v3766
    %3982 = vmatprep.subr.bf16.mxu0 0
    %3983 = vmatpush1.bf16.msra.mxu0 %v3767
    %3984 = vmatprep.mubr.bf16.mxu0 %v3312
    %3985 = vmatmul.mubr.bf16.gmra.mrb[0].mxu0 %v3311
    %v3986 = vpop.f32.mrb[0].mxu0
    %v3987 = vadd.f32 %v3947, %v3986
    %v3988 = vpop.f32.mrb[0].mxu0
    %v3989 = vpop.f32.mrb[0].mxu0
    %v3990 = vpop.f32.mrb[0].mxu0
    %3991 = vdwg.mxu0
    %v3992 = vtanh.pop %v3987
    %vm3993 = vcmask 523264
    %3994 = vst.msk [vmem:[#allocation5] sm:$0xff] %vm3993, %v3992
    // Predicated region
    $region34: #{tpu_custom_call.1} parent=1 // pred_check
      _
    $region35: #{tpu_custom_call.1} parent=1 // pred_check_branch
      %3996 = sbr.rel (0) target = $region37
    $region36: #{tpu_custom_call.1} parent=1 // pred_region
      %s3998 = ssub.s32 128, 128
      %3999 = vsyncadd [#allocation4], %s3998
      %s4001 = sshll.u32 [#allocation5], 4
      %s4002 = int_to_ptr.vmem [resolvable:$true] %s4001
      %4004 = dma.vmem_to_hbm [thread:$0]  %s4002, 128, %s7, [#allocation4]
    $region37: #{tpu_custom_call.1} parent=1 // pred_fallthru
      _
    // Predicated region
    $region38: #{tpu_custom_call.1} parent=1 // pred_check
      _
    $region39: #{tpu_custom_call.1} parent=1 // pred_check_branch
      %4006 = sbr.rel (0) target = $region41
    $region40: #{tpu_custom_call.1} parent=1 // pred_region
      %4007 = dma.done [#allocation4], 128
    $region41: #{tpu_custom_call.1} parent=1 // pred_fallthru
      _
    %4008 = vsyncpa [#allocation3], 1
    %4009 = vsyncpa [#allocation4], 1

</llo_original>
